<compile_context>
chip_gen: v7x
topology: tpu7x:2x2x1
jax: 0.10.0
libtpu: 0.0.40
codegen_flags: <defaults>
</compile_context>

<pallas_src>
import numpy as np
import jax
import jax.numpy as jnp
from jax import lax
from jax.experimental import pallas as pl
from jax.experimental.pallas import tpu as pltpu

H = W = 8
HW = H * W                      # 64 board squares
IN_C = 19                       # input planes
NF = 32                         # num_filters
NRES = 20                       # num_res_blocks
POLICY_OUT = 8 * 8 * 73         # 4672
BN_EPS = 1e-5


# ------------------------------ Pallas kernel -------------------------------

def play_net_kernel(x_ref, mask_ref, w0_ref, b0_ref,
                    wr1_ref, br1_ref, wr2_ref, br2_ref,
                    wpc_ref, bpc_ref, wpf_ref, bpf_ref,
                    wvc_ref, bvc_ref, wvf1_ref, bvf1_ref, wvf2_ref, bvf2_ref,
                    policy_ref, value_ref):

    def im2col(h):
        # h: (32, 64) f32 -> (288, 64) bf16 of shifted+masked copies, rows
        # ordered tap-major (k = ky*3 + kx), channel-minor.  The centre tap
        # needs no boundary mask; the 8 shifted taps are masked (f32 VPU, safe
        # on v5e) and cast to bf16 per-tap so the concat moves bf16 vregs.
        parts = []
        t = 0
        for dy in (-1, 0, 1):
            for dx in (-1, 0, 1):
                s = dy * W + dx
                if s == 0:
                    parts.append(h.astype(jnp.bfloat16))
                else:
                    r = pltpu.roll(h, shift=(-s) % HW, axis=1)
                    parts.append((r * mask_ref[t]).astype(jnp.bfloat16))
                    t += 1
        return jnp.concatenate(parts, axis=0)                   # (288, 64) bf16

    def conv3_bn(h, w_bf16, shift):
        # BN scale pre-folded into w (host side); one K=288 MXU matmul per conv.
        y = jnp.dot(w_bf16, im2col(h), preferred_element_type=jnp.float32)
        return y + shift                                        # (32, 64) f32

    # stem: conv3x3(19->32, zero-padded to 32 in) + BN + ReLU
    h = jnp.maximum(conv3_bn(x_ref[...], w0_ref[...], b0_ref[...]), 0.0)

    # 20 residual blocks, manually unrolled 2x for LLO scheduling visibility.
    def one_block(i, h):
        y = jnp.maximum(conv3_bn(h, wr1_ref[i], br1_ref[i]), 0.0)
        y = conv3_bn(y, wr2_ref[i], br2_ref[i])
        return jnp.maximum(y + h, 0.0)

    def res_body(j, h):
        return one_block(2 * j + 1, one_block(2 * j, h))

    h = lax.fori_loop(0, NRES // 2, res_body, h)

    # value head: 1x1 conv(32->1)+BN+ReLU, Linear(64->32)+ReLU, Linear(32->1)+Tanh
    v = jnp.dot(wvc_ref[...], h, preferred_element_type=jnp.float32) + bvc_ref[...]
    v = jnp.maximum(v, 0.0)                                                  # (1, 64)
    v = jnp.dot(v, wvf1_ref[...], preferred_element_type=jnp.float32) + bvf1_ref[...]
    v = jnp.maximum(v, 0.0)                                                  # (1, 32)
    v = jnp.dot(v, wvf2_ref[...], preferred_element_type=jnp.float32) + bvf2_ref[...]
    value_ref[...] = jnp.tanh(v)                                             # (1, 1)

    # policy head: 1x1 conv(32->2)+BN+ReLU, Flatten (c-major), Linear(128->4672)
    p = jnp.dot(wpc_ref[...], h, preferred_element_type=jnp.float32) + bpc_ref[...]
    p = jnp.maximum(p, 0.0)                                                  # (2, 64)
    # PyTorch flatten order of (1,2,8,8) is idx = c*64 + hw: split the FC weight
    # rows by channel.  (A single K=128 dot would need a (2,64)->(1,128) lane
    # concat, which Mosaic does not relayout cheaply/reliably -- kept as 2 dots.)
    p0 = p[0:1, :].astype(jnp.bfloat16)
    p1 = p[1:2, :].astype(jnp.bfloat16)
    pol = (jnp.dot(p0, wpf_ref[pl.ds(0, HW), :], preferred_element_type=jnp.float32)
           + jnp.dot(p1, wpf_ref[pl.ds(HW, HW), :], preferred_element_type=jnp.float32)
           + bpf_ref[...])
    policy_ref[...] = pol                                                    # (1, 4672)


# ------------------------- parameter construction ---------------------------

def init_params(key):
    keys = iter(jax.random.split(key, 256))
    nxt = lambda: next(keys)

    def conv_w(cout, cin, k):
        return 0.05 * jax.random.normal(nxt(), (cout, cin, k, k), dtype=jnp.float32)

    def bn(c):  # eval-mode BatchNorm folded into (scale, shift)
        gamma = 1.0 + 0.1 * jax.random.normal(nxt(), (c,), dtype=jnp.float32)
        beta = 0.1 * jax.random.normal(nxt(), (c,), dtype=jnp.float32)
        mean = 0.1 * jax.random.normal(nxt(), (c,), dtype=jnp.float32)
        var = 1.0 + 0.1 * jnp.abs(jax.random.normal(nxt(), (c,), dtype=jnp.float32))
        scale = gamma / jnp.sqrt(var + BN_EPS)
        shift = beta - mean * scale
        return scale, shift

    def lin(cout, cin):  # PyTorch Linear layout: weight (out, in), bias (out,)
        w = 0.05 * jax.random.normal(nxt(), (cout, cin), dtype=jnp.float32)
        b = 0.05 * jax.random.normal(nxt(), (cout,), dtype=jnp.float32)
        return w, b

    p = {"w0": conv_w(NF, IN_C, 3), "bn0": bn(NF), "res": []}
    for _ in range(NRES):
        p["res"].append({"w1": conv_w(NF, NF, 3), "bn1": bn(NF),
                         "w2": conv_w(NF, NF, 3), "bn2": bn(NF)})
    p["wp_conv"] = conv_w(2, NF, 1)
    p["bnp"] = bn(2)
    p["wp_fc"], p["bp_fc"] = lin(POLICY_OUT, 2 * HW)
    p["wv_conv"] = conv_w(1, NF, 1)
    p["bnv"] = bn(1)
    p["wv_fc1"], p["bv_fc1"] = lin(NF, HW)
    p["wv_fc2"], p["bv_fc2"] = lin(1, NF)
    return p


def _pack_conv3(w_oihw, scale):
    """OIHW (Cout,Cin,3,3) + per-Cout BN scale -> lane-dense (Cout, 9*Cin) bf16.

    Column order is k*Cin + ci with k = ky*3 + kx, matching the im2col row
    order used in the kernel.  BN scale is folded in (exact for eval-mode BN).
    """
    cout, cin = w_oihw.shape[0], w_oihw.shape[1]
    w = w_oihw * scale.reshape(cout, 1, 1, 1)
    return jnp.transpose(w, (0, 2, 3, 1)).reshape(cout, 9 * cin).astype(jnp.bfloat16)


def _build_mask():
    """(8, NF, 64) f32 validity masks for the 8 shifted taps (centre tap skipped).

    Tap t order matches the kernel's im2col loop (dy-major, dx-minor, (0,0)
    excluded).  Each mask zeroes lanes whose rolled neighbour is off-board.
    """
    yy, xx = np.divmod(np.arange(HW), W)
    taps = []
    for dy in (-1, 0, 1):
        for dx in (-1, 0, 1):
            if dy == 0 and dx == 0:
                continue
            valid = ((yy + dy >= 0) & (yy + dy < H) &
                     (xx + dx >= 0) & (xx + dx < W)).astype(np.float32)
            taps.append(np.tile(valid.reshape(1, HW), (NF, 1)))
    return jnp.asarray(np.stack(taps, axis=0))                  # (8, 32, 64)


def _to_kernel_inputs(x_nchw, p):
    # Activations: channel-major (C, 64); pad 19 -> 32 channels so the stem uses
    # the same (32, 288) im2col path as the residual convs.
    x = x_nchw.reshape(IN_C, HW).astype(jnp.float32)
    x = jnp.pad(x, ((0, NF - IN_C), (0, 0)))                    # (32, 64)

    s0, b0 = p["bn0"]
    w0 = jnp.pad(p["w0"], ((0, 0), (0, NF - IN_C), (0, 0), (0, 0)))

    wr1 = jnp.stack([_pack_conv3(b["w1"], b["bn1"][0]) for b in p["res"]])  # (20,32,288) bf16
    br1 = jnp.stack([b["bn1"][1].reshape(NF, 1) for b in p["res"]])         # (20,32,1)  f32
    wr2 = jnp.stack([_pack_conv3(b["w2"], b["bn2"][0]) for b in p["res"]])
    br2 = jnp.stack([b["bn2"][1].reshape(NF, 1) for b in p["res"]])

    spc, bpc = p["bnp"]
    wpc = p["wp_conv"].reshape(2, NF) * spc.reshape(2, 1)        # BN scale folded
    svc, bvc = p["bnv"]
    wvc = p["wv_conv"].reshape(1, NF) * svc.reshape(1, 1)

    return [
        x, _build_mask(),
        _pack_conv3(w0, s0), b0.reshape(NF, 1),
        wr1, br1, wr2, br2,
        wpc, bpc.reshape(2, 1),
        p["wp_fc"].T.astype(jnp.bfloat16), p["bp_fc"].reshape(1, POLICY_OUT),
        wvc, bvc.reshape(1, 1),
        p["wv_fc1"].T, p["bv_fc1"].reshape(1, NF),
        p["wv_fc2"].T, p["bv_fc2"].reshape(1, 1),
    ]


@jax.jit
def play_network_pallas(x_nchw, params):
    args = _to_kernel_inputs(x_nchw, params)
    vmem = pl.BlockSpec(memory_space=pltpu.MemorySpace.VMEM)
    policy_flat, value = pl.pallas_call(
        play_net_kernel,
        out_shape=(jax.ShapeDtypeStruct((1, POLICY_OUT), jnp.float32),
                   jax.ShapeDtypeStruct((1, 1), jnp.float32)),
        in_specs=[vmem] * len(args),
        out_specs=(vmem, vmem),
        compiler_params=pltpu.CompilerParams(vmem_limit_bytes=16 * 1024 * 1024),
    )(*args)
    return policy_flat.reshape(8, 8, 73), value


# ------------------------- pure-JAX reference (f32) -------------------------

def ref_forward(x, p):
    hp = lax.Precision.HIGHEST

    def conv(x, w):
        return lax.conv_general_dilated(
            x, w, (1, 1), "SAME",
            dimension_numbers=("NCHW", "OIHW", "NCHW"), precision=hp)

    def bn(x, sb):
        s, b = sb
        return x * s.reshape(1, -1, 1, 1) + b.reshape(1, -1, 1, 1)

    h = jax.nn.relu(bn(conv(x, p["w0"]), p["bn0"]))
    for blk in p["res"]:
        y = jax.nn.relu(bn(conv(h, blk["w1"]), blk["bn1"]))
        y = bn(conv(y, blk["w2"]), blk["bn2"])
        h = jax.nn.relu(y + h)
    v = jax.nn.relu(bn(conv(h, p["wv_conv"]), p["bnv"])).reshape(1, -1)
    v = jax.nn.relu(v @ p["wv_fc1"].T + p["bv_fc1"])
    v = jnp.tanh(v @ p["wv_fc2"].T + p["bv_fc2"])
    po = jax.nn.relu(bn(conv(h, p["wp_conv"]), p["bnp"])).reshape(1, -1)
    po = po @ p["wp_fc"].T + p["bp_fc"]
    return po.reshape(8, 8, 73), v


if __name__ == "__main__":
    key = jax.random.PRNGKey(0)
    kx, kp = jax.random.split(key)
    # Module implies N=1, 19 input planes, 8x8 board (Linear sizes + reshape(8,8,73)).
    x = jax.random.normal(kx, (1, IN_C, H, W), dtype=jnp.float32)
    params = init_params(kp)

    policy, value = play_network_pallas(x, params)
    policy = jax.block_until_ready(policy)
    value = jax.block_until_ready(value)

    ref_policy, ref_value = ref_forward(x, params)
    assert policy.shape == (8, 8, 73) and value.shape == (1, 1)
    perr = float(jnp.max(jnp.abs(policy - ref_policy)) /
                 (jnp.max(jnp.abs(ref_policy)) + 1e-6))
    verr = float(jnp.max(jnp.abs(value - ref_value)))
    # Kernel runs the 41-conv tower with bf16 MXU inputs (f32 accumulation) vs an
    # all-f32 reference; expected max relative error ~1e-2.  5e-2 still catches
    # any layout / tap-ordering / flatten bug (those produce O(1) errors).
    assert perr < 5e-2 and verr < 5e-2, (perr, verr)
    print("KERNEL_OK")
</pallas_src>

<mosaic_0001>
module attributes {stable_mosaic.version = 11 : i64} {
  func.func @play_net_kernel(%arg0: memref<32x64xf32, #tpu.memory_space<vmem>>, %arg1: memref<8x32x64xf32, #tpu.memory_space<vmem>>, %arg2: memref<32x288xbf16, #tpu.memory_space<vmem>>, %arg3: memref<32x1xf32, #tpu.memory_space<vmem>>, %arg4: memref<20x32x288xbf16, #tpu.memory_space<vmem>>, %arg5: memref<20x32x1xf32, #tpu.memory_space<vmem>>, %arg6: memref<20x32x288xbf16, #tpu.memory_space<vmem>>, %arg7: memref<20x32x1xf32, #tpu.memory_space<vmem>>, %arg8: memref<2x32xf32, #tpu.memory_space<vmem>>, %arg9: memref<2x1xf32, #tpu.memory_space<vmem>>, %arg10: memref<128x4672xbf16, #tpu.memory_space<vmem>>, %arg11: memref<1x4672xf32, #tpu.memory_space<vmem>>, %arg12: memref<1x32xf32, #tpu.memory_space<vmem>>, %arg13: memref<1x1xf32, #tpu.memory_space<vmem>>, %arg14: memref<64x32xf32, #tpu.memory_space<vmem>>, %arg15: memref<1x32xf32, #tpu.memory_space<vmem>>, %arg16: memref<32x1xf32, #tpu.memory_space<vmem>>, %arg17: memref<1x1xf32, #tpu.memory_space<vmem>>, %arg18: memref<1x4672xf32, #tpu.memory_space<vmem>>, %arg19: memref<1x1xf32, #tpu.memory_space<vmem>>) attributes {dimension_semantics = [], scalar_prefetch = 0 : i64, scratch_operands = 0 : i64, tpu.core_type = #tpu.core_type<tc>} {
    %c0 = arith.constant 0 : index
    %c0_0 = arith.constant 0 : index
    %0 = vector.load %arg0[%c0, %c0_0] : memref<32x64xf32, #tpu.memory_space<vmem>>, vector<32x64xf32>
    %c0_1 = arith.constant 0 : index
    %c0_2 = arith.constant 0 : index
    %1 = vector.load %arg2[%c0_1, %c0_2] : memref<32x288xbf16, #tpu.memory_space<vmem>>, vector<32x288xbf16>
    %c0_3 = arith.constant 0 : index
    %c0_4 = arith.constant 0 : index
    %2 = vector.load %arg3[%c0_3, %c0_4] : memref<32x1xf32, #tpu.memory_space<vmem>>, vector<32x1xf32>
    %c9_i32 = arith.constant 9 : i32
    %3 = tpu.dynamic_rotate %0 by %c9_i32 dim 1 : vector<32x64xf32>, i32 -> vector<32x64xf32>
    %c0_5 = arith.constant 0 : index
    %c0_6 = arith.constant 0 : index
    %c0_7 = arith.constant 0 : index
    %4 = vector.load %arg1[%c0_5, %c0_6, %c0_7] : memref<8x32x64xf32, #tpu.memory_space<vmem>>, vector<1x32x64xf32>
    %5 = vector.shape_cast %4 : vector<1x32x64xf32> to vector<32x64xf32>
    %6 = arith.mulf %3, %5 : vector<32x64xf32>
    %7 = arith.truncf %6 : vector<32x64xf32> to vector<32x64xbf16>
    %c8_i32 = arith.constant 8 : i32
    %8 = tpu.dynamic_rotate %0 by %c8_i32 dim 1 : vector<32x64xf32>, i32 -> vector<32x64xf32>
    %c1 = arith.constant 1 : index
    %c0_8 = arith.constant 0 : index
    %c0_9 = arith.constant 0 : index
    %9 = vector.load %arg1[%c1, %c0_8, %c0_9] : memref<8x32x64xf32, #tpu.memory_space<vmem>>, vector<1x32x64xf32>
    %10 = vector.shape_cast %9 : vector<1x32x64xf32> to vector<32x64xf32>
    %11 = arith.mulf %8, %10 : vector<32x64xf32>
    %12 = arith.truncf %11 : vector<32x64xf32> to vector<32x64xbf16>
    %c7_i32 = arith.constant 7 : i32
    %13 = tpu.dynamic_rotate %0 by %c7_i32 dim 1 : vector<32x64xf32>, i32 -> vector<32x64xf32>
    %c2 = arith.constant 2 : index
    %c0_10 = arith.constant 0 : index
    %c0_11 = arith.constant 0 : index
    %14 = vector.load %arg1[%c2, %c0_10, %c0_11] : memref<8x32x64xf32, #tpu.memory_space<vmem>>, vector<1x32x64xf32>
    %15 = vector.shape_cast %14 : vector<1x32x64xf32> to vector<32x64xf32>
    %16 = arith.mulf %13, %15 : vector<32x64xf32>
    %17 = arith.truncf %16 : vector<32x64xf32> to vector<32x64xbf16>
    %c1_i32 = arith.constant 1 : i32
    %18 = tpu.dynamic_rotate %0 by %c1_i32 dim 1 : vector<32x64xf32>, i32 -> vector<32x64xf32>
    %c3 = arith.constant 3 : index
    %c0_12 = arith.constant 0 : index
    %c0_13 = arith.constant 0 : index
    %19 = vector.load %arg1[%c3, %c0_12, %c0_13] : memref<8x32x64xf32, #tpu.memory_space<vmem>>, vector<1x32x64xf32>
    %20 = vector.shape_cast %19 : vector<1x32x64xf32> to vector<32x64xf32>
    %21 = arith.mulf %18, %20 : vector<32x64xf32>
    %22 = arith.truncf %21 : vector<32x64xf32> to vector<32x64xbf16>
    %23 = arith.truncf %0 : vector<32x64xf32> to vector<32x64xbf16>
    %c63_i32 = arith.constant 63 : i32
    %24 = tpu.dynamic_rotate %0 by %c63_i32 dim 1 : vector<32x64xf32>, i32 -> vector<32x64xf32>
    %c4 = arith.constant 4 : index
    %c0_14 = arith.constant 0 : index
    %c0_15 = arith.constant 0 : index
    %25 = vector.load %arg1[%c4, %c0_14, %c0_15] : memref<8x32x64xf32, #tpu.memory_space<vmem>>, vector<1x32x64xf32>
    %26 = vector.shape_cast %25 : vector<1x32x64xf32> to vector<32x64xf32>
    %27 = arith.mulf %24, %26 : vector<32x64xf32>
    %28 = arith.truncf %27 : vector<32x64xf32> to vector<32x64xbf16>
    %c57_i32 = arith.constant 57 : i32
    %29 = tpu.dynamic_rotate %0 by %c57_i32 dim 1 : vector<32x64xf32>, i32 -> vector<32x64xf32>
    %c5 = arith.constant 5 : index
    %c0_16 = arith.constant 0 : index
    %c0_17 = arith.constant 0 : index
    %30 = vector.load %arg1[%c5, %c0_16, %c0_17] : memref<8x32x64xf32, #tpu.memory_space<vmem>>, vector<1x32x64xf32>
    %31 = vector.shape_cast %30 : vector<1x32x64xf32> to vector<32x64xf32>
    %32 = arith.mulf %29, %31 : vector<32x64xf32>
    %33 = arith.truncf %32 : vector<32x64xf32> to vector<32x64xbf16>
    %c56_i32 = arith.constant 56 : i32
    %34 = tpu.dynamic_rotate %0 by %c56_i32 dim 1 : vector<32x64xf32>, i32 -> vector<32x64xf32>
    %c6 = arith.constant 6 : index
    %c0_18 = arith.constant 0 : index
    %c0_19 = arith.constant 0 : index
    %35 = vector.load %arg1[%c6, %c0_18, %c0_19] : memref<8x32x64xf32, #tpu.memory_space<vmem>>, vector<1x32x64xf32>
    %36 = vector.shape_cast %35 : vector<1x32x64xf32> to vector<32x64xf32>
    %37 = arith.mulf %34, %36 : vector<32x64xf32>
    %38 = arith.truncf %37 : vector<32x64xf32> to vector<32x64xbf16>
    %c55_i32 = arith.constant 55 : i32
    %39 = tpu.dynamic_rotate %0 by %c55_i32 dim 1 : vector<32x64xf32>, i32 -> vector<32x64xf32>
    %c7 = arith.constant 7 : index
    %c0_20 = arith.constant 0 : index
    %c0_21 = arith.constant 0 : index
    %40 = vector.load %arg1[%c7, %c0_20, %c0_21] : memref<8x32x64xf32, #tpu.memory_space<vmem>>, vector<1x32x64xf32>
    %41 = vector.shape_cast %40 : vector<1x32x64xf32> to vector<32x64xf32>
    %42 = arith.mulf %39, %41 : vector<32x64xf32>
    %43 = arith.truncf %42 : vector<32x64xf32> to vector<32x64xbf16>
    %44 = tpu.concatenate %7, %12, %17, %22, %23, %28, %33, %38, %43 in 0 : vector<32x64xbf16>, vector<32x64xbf16>, vector<32x64xbf16>, vector<32x64xbf16>, vector<32x64xbf16>, vector<32x64xbf16>, vector<32x64xbf16>, vector<32x64xbf16>, vector<32x64xbf16> -> vector<288x64xbf16>
    %cst = arith.constant dense<0.000000e+00> : vector<32x64xf32>
    %45 = tpu.matmul %1, %44, %cst {dimension_numbers = #tpu.dot_dimension_numbers<[1], [0], [0], [1], [0, 0, 1, 1], [], []>} : vector<32x288xbf16>, vector<288x64xbf16>, vector<32x64xf32> -> vector<32x64xf32>
    %46 = vector.broadcast %2 : vector<32x1xf32> to vector<32x64xf32>
    %47 = arith.addf %45, %46 : vector<32x64xf32>
    %cst_22 = arith.constant 0.000000e+00 : f32
    %48 = vector.broadcast %cst_22 : f32 to vector<32x64xf32>
    %49 = arith.maximumf %47, %48 : vector<32x64xf32>
    %c0_i32 = arith.constant 0 : i32
    %c10_i32 = arith.constant 10 : i32
    %50 = arith.addi %c0_i32, %c10_i32 : i32
    %c1_i32_23 = arith.constant 1 : i32
    %51 = scf.for %arg20 = %c0_i32 to %50 step %c1_i32_23 iter_args(%arg21 = %49) -> (vector<32x64xf32>)  : i32 {
      %c2_i32 = arith.constant 2 : i32
      %90 = arith.muli %c2_i32, %arg20 : i32
      %c1_i32_59 = arith.constant 1 : i32
      %91 = arith.addi %90, %c1_i32_59 : i32
      %c2_i32_60 = arith.constant 2 : i32
      %92 = arith.muli %c2_i32_60, %arg20 : i32
      %93 = arith.index_cast %92 : i32 to index
      %c0_61 = arith.constant 0 : index
      %c0_62 = arith.constant 0 : index
      %94 = vector.load %arg4[%93, %c0_61, %c0_62] : memref<20x32x288xbf16, #tpu.memory_space<vmem>>, vector<1x32x288xbf16>
      %95 = vector.shape_cast %94 : vector<1x32x288xbf16> to vector<32x288xbf16>
      %96 = arith.index_cast %92 : i32 to index
      %c0_63 = arith.constant 0 : index
      %c0_64 = arith.constant 0 : index
      %97 = vector.load %arg5[%96, %c0_63, %c0_64] : memref<20x32x1xf32, #tpu.memory_space<vmem>>, vector<1x32x1xf32>
      %98 = vector.shape_cast %97 : vector<1x32x1xf32> to vector<32x1xf32>
      %c9_i32_65 = arith.constant 9 : i32
      %99 = tpu.dynamic_rotate %arg21 by %c9_i32_65 dim 1 : vector<32x64xf32>, i32 -> vector<32x64xf32>
      %c0_66 = arith.constant 0 : index
      %c0_67 = arith.constant 0 : index
      %c0_68 = arith.constant 0 : index
      %100 = vector.load %arg1[%c0_66, %c0_67, %c0_68] : memref<8x32x64xf32, #tpu.memory_space<vmem>>, vector<1x32x64xf32>
      %101 = vector.shape_cast %100 : vector<1x32x64xf32> to vector<32x64xf32>
      %102 = arith.mulf %99, %101 : vector<32x64xf32>
      %103 = arith.truncf %102 : vector<32x64xf32> to vector<32x64xbf16>
      %c8_i32_69 = arith.constant 8 : i32
      %104 = tpu.dynamic_rotate %arg21 by %c8_i32_69 dim 1 : vector<32x64xf32>, i32 -> vector<32x64xf32>
      %c1_70 = arith.constant 1 : index
      %c0_71 = arith.constant 0 : index
      %c0_72 = arith.constant 0 : index
      %105 = vector.load %arg1[%c1_70, %c0_71, %c0_72] : memref<8x32x64xf32, #tpu.memory_space<vmem>>, vector<1x32x64xf32>
      %106 = vector.shape_cast %105 : vector<1x32x64xf32> to vector<32x64xf32>
      %107 = arith.mulf %104, %106 : vector<32x64xf32>
      %108 = arith.truncf %107 : vector<32x64xf32> to vector<32x64xbf16>
      %c7_i32_73 = arith.constant 7 : i32
      %109 = tpu.dynamic_rotate %arg21 by %c7_i32_73 dim 1 : vector<32x64xf32>, i32 -> vector<32x64xf32>
      %c2_74 = arith.constant 2 : index
      %c0_75 = arith.constant 0 : index
      %c0_76 = arith.constant 0 : index
      %110 = vector.load %arg1[%c2_74, %c0_75, %c0_76] : memref<8x32x64xf32, #tpu.memory_space<vmem>>, vector<1x32x64xf32>
      %111 = vector.shape_cast %110 : vector<1x32x64xf32> to vector<32x64xf32>
      %112 = arith.mulf %109, %111 : vector<32x64xf32>
      %113 = arith.truncf %112 : vector<32x64xf32> to vector<32x64xbf16>
      %c1_i32_77 = arith.constant 1 : i32
      %114 = tpu.dynamic_rotate %arg21 by %c1_i32_77 dim 1 : vector<32x64xf32>, i32 -> vector<32x64xf32>
      %c3_78 = arith.constant 3 : index
      %c0_79 = arith.constant 0 : index
      %c0_80 = arith.constant 0 : index
      %115 = vector.load %arg1[%c3_78, %c0_79, %c0_80] : memref<8x32x64xf32, #tpu.memory_space<vmem>>, vector<1x32x64xf32>
      %116 = vector.shape_cast %115 : vector<1x32x64xf32> to vector<32x64xf32>
      %117 = arith.mulf %114, %116 : vector<32x64xf32>
      %118 = arith.truncf %117 : vector<32x64xf32> to vector<32x64xbf16>
      %119 = arith.truncf %arg21 : vector<32x64xf32> to vector<32x64xbf16>
      %c63_i32_81 = arith.constant 63 : i32
      %120 = tpu.dynamic_rotate %arg21 by %c63_i32_81 dim 1 : vector<32x64xf32>, i32 -> vector<32x64xf32>
      %c4_82 = arith.constant 4 : index
      %c0_83 = arith.constant 0 : index
      %c0_84 = arith.constant 0 : index
      %121 = vector.load %arg1[%c4_82, %c0_83, %c0_84] : memref<8x32x64xf32, #tpu.memory_space<vmem>>, vector<1x32x64xf32>
      %122 = vector.shape_cast %121 : vector<1x32x64xf32> to vector<32x64xf32>
      %123 = arith.mulf %120, %122 : vector<32x64xf32>
      %124 = arith.truncf %123 : vector<32x64xf32> to vector<32x64xbf16>
      %c57_i32_85 = arith.constant 57 : i32
      %125 = tpu.dynamic_rotate %arg21 by %c57_i32_85 dim 1 : vector<32x64xf32>, i32 -> vector<32x64xf32>
      %c5_86 = arith.constant 5 : index
      %c0_87 = arith.constant 0 : index
      %c0_88 = arith.constant 0 : index
      %126 = vector.load %arg1[%c5_86, %c0_87, %c0_88] : memref<8x32x64xf32, #tpu.memory_space<vmem>>, vector<1x32x64xf32>
      %127 = vector.shape_cast %126 : vector<1x32x64xf32> to vector<32x64xf32>
      %128 = arith.mulf %125, %127 : vector<32x64xf32>
      %129 = arith.truncf %128 : vector<32x64xf32> to vector<32x64xbf16>
      %c56_i32_89 = arith.constant 56 : i32
      %130 = tpu.dynamic_rotate %arg21 by %c56_i32_89 dim 1 : vector<32x64xf32>, i32 -> vector<32x64xf32>
      %c6_90 = arith.constant 6 : index
      %c0_91 = arith.constant 0 : index
      %c0_92 = arith.constant 0 : index
      %131 = vector.load %arg1[%c6_90, %c0_91, %c0_92] : memref<8x32x64xf32, #tpu.memory_space<vmem>>, vector<1x32x64xf32>
      %132 = vector.shape_cast %131 : vector<1x32x64xf32> to vector<32x64xf32>
      %133 = arith.mulf %130, %132 : vector<32x64xf32>
      %134 = arith.truncf %133 : vector<32x64xf32> to vector<32x64xbf16>
      %c55_i32_93 = arith.constant 55 : i32
      %135 = tpu.dynamic_rotate %arg21 by %c55_i32_93 dim 1 : vector<32x64xf32>, i32 -> vector<32x64xf32>
      %c7_94 = arith.constant 7 : index
      %c0_95 = arith.constant 0 : index
      %c0_96 = arith.constant 0 : index
      %136 = vector.load %arg1[%c7_94, %c0_95, %c0_96] : memref<8x32x64xf32, #tpu.memory_space<vmem>>, vector<1x32x64xf32>
      %137 = vector.shape_cast %136 : vector<1x32x64xf32> to vector<32x64xf32>
      %138 = arith.mulf %135, %137 : vector<32x64xf32>
      %139 = arith.truncf %138 : vector<32x64xf32> to vector<32x64xbf16>
      %140 = tpu.concatenate %103, %108, %113, %118, %119, %124, %129, %134, %139 in 0 : vector<32x64xbf16>, vector<32x64xbf16>, vector<32x64xbf16>, vector<32x64xbf16>, vector<32x64xbf16>, vector<32x64xbf16>, vector<32x64xbf16>, vector<32x64xbf16>, vector<32x64xbf16> -> vector<288x64xbf16>
      %cst_97 = arith.constant dense<0.000000e+00> : vector<32x64xf32>
      %141 = tpu.matmul %95, %140, %cst_97 {dimension_numbers = #tpu.dot_dimension_numbers<[1], [0], [0], [1], [0, 0, 1, 1], [], []>} : vector<32x288xbf16>, vector<288x64xbf16>, vector<32x64xf32> -> vector<32x64xf32>
      %142 = vector.broadcast %98 : vector<32x1xf32> to vector<32x64xf32>
      %143 = arith.addf %141, %142 : vector<32x64xf32>
      %cst_98 = arith.constant 0.000000e+00 : f32
      %144 = vector.broadcast %cst_98 : f32 to vector<32x64xf32>
      %145 = arith.maximumf %143, %144 : vector<32x64xf32>
      %146 = arith.index_cast %92 : i32 to index
      %c0_99 = arith.constant 0 : index
      %c0_100 = arith.constant 0 : index
      %147 = vector.load %arg6[%146, %c0_99, %c0_100] : memref<20x32x288xbf16, #tpu.memory_space<vmem>>, vector<1x32x288xbf16>
      %148 = vector.shape_cast %147 : vector<1x32x288xbf16> to vector<32x288xbf16>
      %149 = arith.index_cast %92 : i32 to index
      %c0_101 = arith.constant 0 : index
      %c0_102 = arith.constant 0 : index
      %150 = vector.load %arg7[%149, %c0_101, %c0_102] : memref<20x32x1xf32, #tpu.memory_space<vmem>>, vector<1x32x1xf32>
      %151 = vector.shape_cast %150 : vector<1x32x1xf32> to vector<32x1xf32>
      %c9_i32_103 = arith.constant 9 : i32
      %152 = tpu.dynamic_rotate %145 by %c9_i32_103 dim 1 : vector<32x64xf32>, i32 -> vector<32x64xf32>
      %c0_104 = arith.constant 0 : index
      %c0_105 = arith.constant 0 : index
      %c0_106 = arith.constant 0 : index
      %153 = vector.load %arg1[%c0_104, %c0_105, %c0_106] : memref<8x32x64xf32, #tpu.memory_space<vmem>>, vector<1x32x64xf32>
      %154 = vector.shape_cast %153 : vector<1x32x64xf32> to vector<32x64xf32>
      %155 = arith.mulf %152, %154 : vector<32x64xf32>
      %156 = arith.truncf %155 : vector<32x64xf32> to vector<32x64xbf16>
      %c8_i32_107 = arith.constant 8 : i32
      %157 = tpu.dynamic_rotate %145 by %c8_i32_107 dim 1 : vector<32x64xf32>, i32 -> vector<32x64xf32>
      %c1_108 = arith.constant 1 : index
      %c0_109 = arith.constant 0 : index
      %c0_110 = arith.constant 0 : index
      %158 = vector.load %arg1[%c1_108, %c0_109, %c0_110] : memref<8x32x64xf32, #tpu.memory_space<vmem>>, vector<1x32x64xf32>
      %159 = vector.shape_cast %158 : vector<1x32x64xf32> to vector<32x64xf32>
      %160 = arith.mulf %157, %159 : vector<32x64xf32>
      %161 = arith.truncf %160 : vector<32x64xf32> to vector<32x64xbf16>
      %c7_i32_111 = arith.constant 7 : i32
      %162 = tpu.dynamic_rotate %145 by %c7_i32_111 dim 1 : vector<32x64xf32>, i32 -> vector<32x64xf32>
      %c2_112 = arith.constant 2 : index
      %c0_113 = arith.constant 0 : index
      %c0_114 = arith.constant 0 : index
      %163 = vector.load %arg1[%c2_112, %c0_113, %c0_114] : memref<8x32x64xf32, #tpu.memory_space<vmem>>, vector<1x32x64xf32>
      %164 = vector.shape_cast %163 : vector<1x32x64xf32> to vector<32x64xf32>
      %165 = arith.mulf %162, %164 : vector<32x64xf32>
      %166 = arith.truncf %165 : vector<32x64xf32> to vector<32x64xbf16>
      %c1_i32_115 = arith.constant 1 : i32
      %167 = tpu.dynamic_rotate %145 by %c1_i32_115 dim 1 : vector<32x64xf32>, i32 -> vector<32x64xf32>
      %c3_116 = arith.constant 3 : index
      %c0_117 = arith.constant 0 : index
      %c0_118 = arith.constant 0 : index
      %168 = vector.load %arg1[%c3_116, %c0_117, %c0_118] : memref<8x32x64xf32, #tpu.memory_space<vmem>>, vector<1x32x64xf32>
      %169 = vector.shape_cast %168 : vector<1x32x64xf32> to vector<32x64xf32>
      %170 = arith.mulf %167, %169 : vector<32x64xf32>
      %171 = arith.truncf %170 : vector<32x64xf32> to vector<32x64xbf16>
      %172 = arith.truncf %145 : vector<32x64xf32> to vector<32x64xbf16>
      %c63_i32_119 = arith.constant 63 : i32
      %173 = tpu.dynamic_rotate %145 by %c63_i32_119 dim 1 : vector<32x64xf32>, i32 -> vector<32x64xf32>
      %c4_120 = arith.constant 4 : index
      %c0_121 = arith.constant 0 : index
      %c0_122 = arith.constant 0 : index
      %174 = vector.load %arg1[%c4_120, %c0_121, %c0_122] : memref<8x32x64xf32, #tpu.memory_space<vmem>>, vector<1x32x64xf32>
      %175 = vector.shape_cast %174 : vector<1x32x64xf32> to vector<32x64xf32>
      %176 = arith.mulf %173, %175 : vector<32x64xf32>
      %177 = arith.truncf %176 : vector<32x64xf32> to vector<32x64xbf16>
      %c57_i32_123 = arith.constant 57 : i32
      %178 = tpu.dynamic_rotate %145 by %c57_i32_123 dim 1 : vector<32x64xf32>, i32 -> vector<32x64xf32>
      %c5_124 = arith.constant 5 : index
      %c0_125 = arith.constant 0 : index
      %c0_126 = arith.constant 0 : index
      %179 = vector.load %arg1[%c5_124, %c0_125, %c0_126] : memref<8x32x64xf32, #tpu.memory_space<vmem>>, vector<1x32x64xf32>
      %180 = vector.shape_cast %179 : vector<1x32x64xf32> to vector<32x64xf32>
      %181 = arith.mulf %178, %180 : vector<32x64xf32>
      %182 = arith.truncf %181 : vector<32x64xf32> to vector<32x64xbf16>
      %c56_i32_127 = arith.constant 56 : i32
      %183 = tpu.dynamic_rotate %145 by %c56_i32_127 dim 1 : vector<32x64xf32>, i32 -> vector<32x64xf32>
      %c6_128 = arith.constant 6 : index
      %c0_129 = arith.constant 0 : index
      %c0_130 = arith.constant 0 : index
      %184 = vector.load %arg1[%c6_128, %c0_129, %c0_130] : memref<8x32x64xf32, #tpu.memory_space<vmem>>, vector<1x32x64xf32>
      %185 = vector.shape_cast %184 : vector<1x32x64xf32> to vector<32x64xf32>
      %186 = arith.mulf %183, %185 : vector<32x64xf32>
      %187 = arith.truncf %186 : vector<32x64xf32> to vector<32x64xbf16>
      %c55_i32_131 = arith.constant 55 : i32
      %188 = tpu.dynamic_rotate %145 by %c55_i32_131 dim 1 : vector<32x64xf32>, i32 -> vector<32x64xf32>
      %c7_132 = arith.constant 7 : index
      %c0_133 = arith.constant 0 : index
      %c0_134 = arith.constant 0 : index
      %189 = vector.load %arg1[%c7_132, %c0_133, %c0_134] : memref<8x32x64xf32, #tpu.memory_space<vmem>>, vector<1x32x64xf32>
      %190 = vector.shape_cast %189 : vector<1x32x64xf32> to vector<32x64xf32>
      %191 = arith.mulf %188, %190 : vector<32x64xf32>
      %192 = arith.truncf %191 : vector<32x64xf32> to vector<32x64xbf16>
      %193 = tpu.concatenate %156, %161, %166, %171, %172, %177, %182, %187, %192 in 0 : vector<32x64xbf16>, vector<32x64xbf16>, vector<32x64xbf16>, vector<32x64xbf16>, vector<32x64xbf16>, vector<32x64xbf16>, vector<32x64xbf16>, vector<32x64xbf16>, vector<32x64xbf16> -> vector<288x64xbf16>
      %cst_135 = arith.constant dense<0.000000e+00> : vector<32x64xf32>
      %194 = tpu.matmul %148, %193, %cst_135 {dimension_numbers = #tpu.dot_dimension_numbers<[1], [0], [0], [1], [0, 0, 1, 1], [], []>} : vector<32x288xbf16>, vector<288x64xbf16>, vector<32x64xf32> -> vector<32x64xf32>
      %195 = vector.broadcast %151 : vector<32x1xf32> to vector<32x64xf32>
      %196 = arith.addf %194, %195 : vector<32x64xf32>
      %197 = arith.addf %196, %arg21 : vector<32x64xf32>
      %cst_136 = arith.constant 0.000000e+00 : f32
      %198 = vector.broadcast %cst_136 : f32 to vector<32x64xf32>
      %199 = arith.maximumf %197, %198 : vector<32x64xf32>
      %200 = arith.index_cast %91 : i32 to index
      %c0_137 = arith.constant 0 : index
      %c0_138 = arith.constant 0 : index
      %201 = vector.load %arg4[%200, %c0_137, %c0_138] : memref<20x32x288xbf16, #tpu.memory_space<vmem>>, vector<1x32x288xbf16>
      %202 = vector.shape_cast %201 : vector<1x32x288xbf16> to vector<32x288xbf16>
      %203 = arith.index_cast %91 : i32 to index
      %c0_139 = arith.constant 0 : index
      %c0_140 = arith.constant 0 : index
      %204 = vector.load %arg5[%203, %c0_139, %c0_140] : memref<20x32x1xf32, #tpu.memory_space<vmem>>, vector<1x32x1xf32>
      %205 = vector.shape_cast %204 : vector<1x32x1xf32> to vector<32x1xf32>
      %c9_i32_141 = arith.constant 9 : i32
      %206 = tpu.dynamic_rotate %199 by %c9_i32_141 dim 1 : vector<32x64xf32>, i32 -> vector<32x64xf32>
      %c0_142 = arith.constant 0 : index
      %c0_143 = arith.constant 0 : index
      %c0_144 = arith.constant 0 : index
      %207 = vector.load %arg1[%c0_142, %c0_143, %c0_144] : memref<8x32x64xf32, #tpu.memory_space<vmem>>, vector<1x32x64xf32>
      %208 = vector.shape_cast %207 : vector<1x32x64xf32> to vector<32x64xf32>
      %209 = arith.mulf %206, %208 : vector<32x64xf32>
      %210 = arith.truncf %209 : vector<32x64xf32> to vector<32x64xbf16>
      %c8_i32_145 = arith.constant 8 : i32
      %211 = tpu.dynamic_rotate %199 by %c8_i32_145 dim 1 : vector<32x64xf32>, i32 -> vector<32x64xf32>
      %c1_146 = arith.constant 1 : index
      %c0_147 = arith.constant 0 : index
      %c0_148 = arith.constant 0 : index
      %212 = vector.load %arg1[%c1_146, %c0_147, %c0_148] : memref<8x32x64xf32, #tpu.memory_space<vmem>>, vector<1x32x64xf32>
      %213 = vector.shape_cast %212 : vector<1x32x64xf32> to vector<32x64xf32>
      %214 = arith.mulf %211, %213 : vector<32x64xf32>
      %215 = arith.truncf %214 : vector<32x64xf32> to vector<32x64xbf16>
      %c7_i32_149 = arith.constant 7 : i32
      %216 = tpu.dynamic_rotate %199 by %c7_i32_149 dim 1 : vector<32x64xf32>, i32 -> vector<32x64xf32>
      %c2_150 = arith.constant 2 : index
      %c0_151 = arith.constant 0 : index
      %c0_152 = arith.constant 0 : index
      %217 = vector.load %arg1[%c2_150, %c0_151, %c0_152] : memref<8x32x64xf32, #tpu.memory_space<vmem>>, vector<1x32x64xf32>
      %218 = vector.shape_cast %217 : vector<1x32x64xf32> to vector<32x64xf32>
      %219 = arith.mulf %216, %218 : vector<32x64xf32>
      %220 = arith.truncf %219 : vector<32x64xf32> to vector<32x64xbf16>
      %c1_i32_153 = arith.constant 1 : i32
      %221 = tpu.dynamic_rotate %199 by %c1_i32_153 dim 1 : vector<32x64xf32>, i32 -> vector<32x64xf32>
      %c3_154 = arith.constant 3 : index
      %c0_155 = arith.constant 0 : index
      %c0_156 = arith.constant 0 : index
      %222 = vector.load %arg1[%c3_154, %c0_155, %c0_156] : memref<8x32x64xf32, #tpu.memory_space<vmem>>, vector<1x32x64xf32>
      %223 = vector.shape_cast %222 : vector<1x32x64xf32> to vector<32x64xf32>
      %224 = arith.mulf %221, %223 : vector<32x64xf32>
      %225 = arith.truncf %224 : vector<32x64xf32> to vector<32x64xbf16>
      %226 = arith.truncf %199 : vector<32x64xf32> to vector<32x64xbf16>
      %c63_i32_157 = arith.constant 63 : i32
      %227 = tpu.dynamic_rotate %199 by %c63_i32_157 dim 1 : vector<32x64xf32>, i32 -> vector<32x64xf32>
      %c4_158 = arith.constant 4 : index
      %c0_159 = arith.constant 0 : index
      %c0_160 = arith.constant 0 : index
      %228 = vector.load %arg1[%c4_158, %c0_159, %c0_160] : memref<8x32x64xf32, #tpu.memory_space<vmem>>, vector<1x32x64xf32>
      %229 = vector.shape_cast %228 : vector<1x32x64xf32> to vector<32x64xf32>
      %230 = arith.mulf %227, %229 : vector<32x64xf32>
      %231 = arith.truncf %230 : vector<32x64xf32> to vector<32x64xbf16>
      %c57_i32_161 = arith.constant 57 : i32
      %232 = tpu.dynamic_rotate %199 by %c57_i32_161 dim 1 : vector<32x64xf32>, i32 -> vector<32x64xf32>
      %c5_162 = arith.constant 5 : index
      %c0_163 = arith.constant 0 : index
      %c0_164 = arith.constant 0 : index
      %233 = vector.load %arg1[%c5_162, %c0_163, %c0_164] : memref<8x32x64xf32, #tpu.memory_space<vmem>>, vector<1x32x64xf32>
      %234 = vector.shape_cast %233 : vector<1x32x64xf32> to vector<32x64xf32>
      %235 = arith.mulf %232, %234 : vector<32x64xf32>
      %236 = arith.truncf %235 : vector<32x64xf32> to vector<32x64xbf16>
      %c56_i32_165 = arith.constant 56 : i32
      %237 = tpu.dynamic_rotate %199 by %c56_i32_165 dim 1 : vector<32x64xf32>, i32 -> vector<32x64xf32>
      %c6_166 = arith.constant 6 : index
      %c0_167 = arith.constant 0 : index
      %c0_168 = arith.constant 0 : index
      %238 = vector.load %arg1[%c6_166, %c0_167, %c0_168] : memref<8x32x64xf32, #tpu.memory_space<vmem>>, vector<1x32x64xf32>
      %239 = vector.shape_cast %238 : vector<1x32x64xf32> to vector<32x64xf32>
      %240 = arith.mulf %237, %239 : vector<32x64xf32>
      %241 = arith.truncf %240 : vector<32x64xf32> to vector<32x64xbf16>
      %c55_i32_169 = arith.constant 55 : i32
      %242 = tpu.dynamic_rotate %199 by %c55_i32_169 dim 1 : vector<32x64xf32>, i32 -> vector<32x64xf32>
      %c7_170 = arith.constant 7 : index
      %c0_171 = arith.constant 0 : index
      %c0_172 = arith.constant 0 : index
      %243 = vector.load %arg1[%c7_170, %c0_171, %c0_172] : memref<8x32x64xf32, #tpu.memory_space<vmem>>, vector<1x32x64xf32>
      %244 = vector.shape_cast %243 : vector<1x32x64xf32> to vector<32x64xf32>
      %245 = arith.mulf %242, %244 : vector<32x64xf32>
      %246 = arith.truncf %245 : vector<32x64xf32> to vector<32x64xbf16>
      %247 = tpu.concatenate %210, %215, %220, %225, %226, %231, %236, %241, %246 in 0 : vector<32x64xbf16>, vector<32x64xbf16>, vector<32x64xbf16>, vector<32x64xbf16>, vector<32x64xbf16>, vector<32x64xbf16>, vector<32x64xbf16>, vector<32x64xbf16>, vector<32x64xbf16> -> vector<288x64xbf16>
      %cst_173 = arith.constant dense<0.000000e+00> : vector<32x64xf32>
      %248 = tpu.matmul %202, %247, %cst_173 {dimension_numbers = #tpu.dot_dimension_numbers<[1], [0], [0], [1], [0, 0, 1, 1], [], []>} : vector<32x288xbf16>, vector<288x64xbf16>, vector<32x64xf32> -> vector<32x64xf32>
      %249 = vector.broadcast %205 : vector<32x1xf32> to vector<32x64xf32>
      %250 = arith.addf %248, %249 : vector<32x64xf32>
      %cst_174 = arith.constant 0.000000e+00 : f32
      %251 = vector.broadcast %cst_174 : f32 to vector<32x64xf32>
      %252 = arith.maximumf %250, %251 : vector<32x64xf32>
      %253 = arith.index_cast %91 : i32 to index
      %c0_175 = arith.constant 0 : index
      %c0_176 = arith.constant 0 : index
      %254 = vector.load %arg6[%253, %c0_175, %c0_176] : memref<20x32x288xbf16, #tpu.memory_space<vmem>>, vector<1x32x288xbf16>
      %255 = vector.shape_cast %254 : vector<1x32x288xbf16> to vector<32x288xbf16>
      %256 = arith.index_cast %91 : i32 to index
      %c0_177 = arith.constant 0 : index
      %c0_178 = arith.constant 0 : index
      %257 = vector.load %arg7[%256, %c0_177, %c0_178] : memref<20x32x1xf32, #tpu.memory_space<vmem>>, vector<1x32x1xf32>
      %258 = vector.shape_cast %257 : vector<1x32x1xf32> to vector<32x1xf32>
      %c9_i32_179 = arith.constant 9 : i32
      %259 = tpu.dynamic_rotate %252 by %c9_i32_179 dim 1 : vector<32x64xf32>, i32 -> vector<32x64xf32>
      %c0_180 = arith.constant 0 : index
      %c0_181 = arith.constant 0 : index
      %c0_182 = arith.constant 0 : index
      %260 = vector.load %arg1[%c0_180, %c0_181, %c0_182] : memref<8x32x64xf32, #tpu.memory_space<vmem>>, vector<1x32x64xf32>
      %261 = vector.shape_cast %260 : vector<1x32x64xf32> to vector<32x64xf32>
      %262 = arith.mulf %259, %261 : vector<32x64xf32>
      %263 = arith.truncf %262 : vector<32x64xf32> to vector<32x64xbf16>
      %c8_i32_183 = arith.constant 8 : i32
      %264 = tpu.dynamic_rotate %252 by %c8_i32_183 dim 1 : vector<32x64xf32>, i32 -> vector<32x64xf32>
      %c1_184 = arith.constant 1 : index
      %c0_185 = arith.constant 0 : index
      %c0_186 = arith.constant 0 : index
      %265 = vector.load %arg1[%c1_184, %c0_185, %c0_186] : memref<8x32x64xf32, #tpu.memory_space<vmem>>, vector<1x32x64xf32>
      %266 = vector.shape_cast %265 : vector<1x32x64xf32> to vector<32x64xf32>
      %267 = arith.mulf %264, %266 : vector<32x64xf32>
      %268 = arith.truncf %267 : vector<32x64xf32> to vector<32x64xbf16>
      %c7_i32_187 = arith.constant 7 : i32
      %269 = tpu.dynamic_rotate %252 by %c7_i32_187 dim 1 : vector<32x64xf32>, i32 -> vector<32x64xf32>
      %c2_188 = arith.constant 2 : index
      %c0_189 = arith.constant 0 : index
      %c0_190 = arith.constant 0 : index
      %270 = vector.load %arg1[%c2_188, %c0_189, %c0_190] : memref<8x32x64xf32, #tpu.memory_space<vmem>>, vector<1x32x64xf32>
      %271 = vector.shape_cast %270 : vector<1x32x64xf32> to vector<32x64xf32>
      %272 = arith.mulf %269, %271 : vector<32x64xf32>
      %273 = arith.truncf %272 : vector<32x64xf32> to vector<32x64xbf16>
      %c1_i32_191 = arith.constant 1 : i32
      %274 = tpu.dynamic_rotate %252 by %c1_i32_191 dim 1 : vector<32x64xf32>, i32 -> vector<32x64xf32>
      %c3_192 = arith.constant 3 : index
      %c0_193 = arith.constant 0 : index
      %c0_194 = arith.constant 0 : index
      %275 = vector.load %arg1[%c3_192, %c0_193, %c0_194] : memref<8x32x64xf32, #tpu.memory_space<vmem>>, vector<1x32x64xf32>
      %276 = vector.shape_cast %275 : vector<1x32x64xf32> to vector<32x64xf32>
      %277 = arith.mulf %274, %276 : vector<32x64xf32>
      %278 = arith.truncf %277 : vector<32x64xf32> to vector<32x64xbf16>
      %279 = arith.truncf %252 : vector<32x64xf32> to vector<32x64xbf16>
      %c63_i32_195 = arith.constant 63 : i32
      %280 = tpu.dynamic_rotate %252 by %c63_i32_195 dim 1 : vector<32x64xf32>, i32 -> vector<32x64xf32>
      %c4_196 = arith.constant 4 : index
      %c0_197 = arith.constant 0 : index
      %c0_198 = arith.constant 0 : index
      %281 = vector.load %arg1[%c4_196, %c0_197, %c0_198] : memref<8x32x64xf32, #tpu.memory_space<vmem>>, vector<1x32x64xf32>
      %282 = vector.shape_cast %281 : vector<1x32x64xf32> to vector<32x64xf32>
      %283 = arith.mulf %280, %282 : vector<32x64xf32>
      %284 = arith.truncf %283 : vector<32x64xf32> to vector<32x64xbf16>
      %c57_i32_199 = arith.constant 57 : i32
      %285 = tpu.dynamic_rotate %252 by %c57_i32_199 dim 1 : vector<32x64xf32>, i32 -> vector<32x64xf32>
      %c5_200 = arith.constant 5 : index
      %c0_201 = arith.constant 0 : index
      %c0_202 = arith.constant 0 : index
      %286 = vector.load %arg1[%c5_200, %c0_201, %c0_202] : memref<8x32x64xf32, #tpu.memory_space<vmem>>, vector<1x32x64xf32>
      %287 = vector.shape_cast %286 : vector<1x32x64xf32> to vector<32x64xf32>
      %288 = arith.mulf %285, %287 : vector<32x64xf32>
      %289 = arith.truncf %288 : vector<32x64xf32> to vector<32x64xbf16>
      %c56_i32_203 = arith.constant 56 : i32
      %290 = tpu.dynamic_rotate %252 by %c56_i32_203 dim 1 : vector<32x64xf32>, i32 -> vector<32x64xf32>
      %c6_204 = arith.constant 6 : index
      %c0_205 = arith.constant 0 : index
      %c0_206 = arith.constant 0 : index
      %291 = vector.load %arg1[%c6_204, %c0_205, %c0_206] : memref<8x32x64xf32, #tpu.memory_space<vmem>>, vector<1x32x64xf32>
      %292 = vector.shape_cast %291 : vector<1x32x64xf32> to vector<32x64xf32>
      %293 = arith.mulf %290, %292 : vector<32x64xf32>
      %294 = arith.truncf %293 : vector<32x64xf32> to vector<32x64xbf16>
      %c55_i32_207 = arith.constant 55 : i32
      %295 = tpu.dynamic_rotate %252 by %c55_i32_207 dim 1 : vector<32x64xf32>, i32 -> vector<32x64xf32>
      %c7_208 = arith.constant 7 : index
      %c0_209 = arith.constant 0 : index
      %c0_210 = arith.constant 0 : index
      %296 = vector.load %arg1[%c7_208, %c0_209, %c0_210] : memref<8x32x64xf32, #tpu.memory_space<vmem>>, vector<1x32x64xf32>
      %297 = vector.shape_cast %296 : vector<1x32x64xf32> to vector<32x64xf32>
      %298 = arith.mulf %295, %297 : vector<32x64xf32>
      %299 = arith.truncf %298 : vector<32x64xf32> to vector<32x64xbf16>
      %300 = tpu.concatenate %263, %268, %273, %278, %279, %284, %289, %294, %299 in 0 : vector<32x64xbf16>, vector<32x64xbf16>, vector<32x64xbf16>, vector<32x64xbf16>, vector<32x64xbf16>, vector<32x64xbf16>, vector<32x64xbf16>, vector<32x64xbf16>, vector<32x64xbf16> -> vector<288x64xbf16>
      %cst_211 = arith.constant dense<0.000000e+00> : vector<32x64xf32>
      %301 = tpu.matmul %255, %300, %cst_211 {dimension_numbers = #tpu.dot_dimension_numbers<[1], [0], [0], [1], [0, 0, 1, 1], [], []>} : vector<32x288xbf16>, vector<288x64xbf16>, vector<32x64xf32> -> vector<32x64xf32>
      %302 = vector.broadcast %258 : vector<32x1xf32> to vector<32x64xf32>
      %303 = arith.addf %301, %302 : vector<32x64xf32>
      %304 = arith.addf %303, %199 : vector<32x64xf32>
      %cst_212 = arith.constant 0.000000e+00 : f32
      %305 = vector.broadcast %cst_212 : f32 to vector<32x64xf32>
      %306 = arith.maximumf %304, %305 : vector<32x64xf32>
      scf.yield %306 : vector<32x64xf32>
    }
    %c10_i32_24 = arith.constant 10 : i32
    %c0_25 = arith.constant 0 : index
    %c0_26 = arith.constant 0 : index
    %52 = vector.load %arg12[%c0_25, %c0_26] : memref<1x32xf32, #tpu.memory_space<vmem>>, vector<1x32xf32>
    %cst_27 = arith.constant dense<0.000000e+00> : vector<1x64xf32>
    %53 = tpu.matmul %52, %51, %cst_27 {dimension_numbers = #tpu.dot_dimension_numbers<[1], [0], [0], [1], [0, 0, 1, 1], [], []>} : vector<1x32xf32>, vector<32x64xf32>, vector<1x64xf32> -> vector<1x64xf32>
    %c0_28 = arith.constant 0 : index
    %c0_29 = arith.constant 0 : index
    %54 = vector.load %arg13[%c0_28, %c0_29] : memref<1x1xf32, #tpu.memory_space<vmem>>, vector<1x1xf32>
    %55 = vector.broadcast %54 : vector<1x1xf32> to vector<1x64xf32>
    %56 = arith.addf %53, %55 : vector<1x64xf32>
    %cst_30 = arith.constant 0.000000e+00 : f32
    %57 = vector.broadcast %cst_30 : f32 to vector<1x64xf32>
    %58 = arith.maximumf %56, %57 : vector<1x64xf32>
    %c0_31 = arith.constant 0 : index
    %c0_32 = arith.constant 0 : index
    %59 = vector.load %arg14[%c0_31, %c0_32] : memref<64x32xf32, #tpu.memory_space<vmem>>, vector<64x32xf32>
    %cst_33 = arith.constant dense<0.000000e+00> : vector<1x32xf32>
    %60 = tpu.matmul %58, %59, %cst_33 {dimension_numbers = #tpu.dot_dimension_numbers<[1], [0], [0], [1], [0, 0, 1, 1], [], []>} : vector<1x64xf32>, vector<64x32xf32>, vector<1x32xf32> -> vector<1x32xf32>
    %c0_34 = arith.constant 0 : index
    %c0_35 = arith.constant 0 : index
    %61 = vector.load %arg15[%c0_34, %c0_35] : memref<1x32xf32, #tpu.memory_space<vmem>>, vector<1x32xf32>
    %62 = arith.addf %60, %61 : vector<1x32xf32>
    %cst_36 = arith.constant 0.000000e+00 : f32
    %63 = vector.broadcast %cst_36 : f32 to vector<1x32xf32>
    %64 = arith.maximumf %62, %63 : vector<1x32xf32>
    %c0_37 = arith.constant 0 : index
    %c0_38 = arith.constant 0 : index
    %65 = vector.load %arg16[%c0_37, %c0_38] : memref<32x1xf32, #tpu.memory_space<vmem>>, vector<32x1xf32>
    %cst_39 = arith.constant dense<0.000000e+00> : vector<1x1xf32>
    %66 = tpu.matmul %64, %65, %cst_39 {dimension_numbers = #tpu.dot_dimension_numbers<[1], [0], [0], [1], [0, 0, 1, 1], [], []>} : vector<1x32xf32>, vector<32x1xf32>, vector<1x1xf32> -> vector<1x1xf32>
    %c0_40 = arith.constant 0 : index
    %c0_41 = arith.constant 0 : index
    %67 = vector.load %arg17[%c0_40, %c0_41] : memref<1x1xf32, #tpu.memory_space<vmem>>, vector<1x1xf32>
    %68 = arith.addf %66, %67 : vector<1x1xf32>
    %69 = math.tanh %68 : vector<1x1xf32>
    %c0_42 = arith.constant 0 : index
    %c0_43 = arith.constant 0 : index
    %70 = vector.load %arg19[%c0_42, %c0_43] : memref<1x1xf32, #tpu.memory_space<vmem>>, vector<1x1xf32>
    tpu.vector_store %arg19[%c0_42, %c0_43], %69 {strides = array<i32>} : memref<1x1xf32, #tpu.memory_space<vmem>>, vector<1x1xf32>,
    %c0_44 = arith.constant 0 : index
    %c0_45 = arith.constant 0 : index
    %71 = vector.load %arg8[%c0_44, %c0_45] : memref<2x32xf32, #tpu.memory_space<vmem>>, vector<2x32xf32>
    %cst_46 = arith.constant dense<0.000000e+00> : vector<2x64xf32>
    %72 = tpu.matmul %71, %51, %cst_46 {dimension_numbers = #tpu.dot_dimension_numbers<[1], [0], [0], [1], [0, 0, 1, 1], [], []>} : vector<2x32xf32>, vector<32x64xf32>, vector<2x64xf32> -> vector<2x64xf32>
    %c0_47 = arith.constant 0 : index
    %c0_48 = arith.constant 0 : index
    %73 = vector.load %arg9[%c0_47, %c0_48] : memref<2x1xf32, #tpu.memory_space<vmem>>, vector<2x1xf32>
    %74 = vector.broadcast %73 : vector<2x1xf32> to vector<2x64xf32>
    %75 = arith.addf %72, %74 : vector<2x64xf32>
    %cst_49 = arith.constant 0.000000e+00 : f32
    %76 = vector.broadcast %cst_49 : f32 to vector<2x64xf32>
    %77 = arith.maximumf %75, %76 : vector<2x64xf32>
    %78 = vector.extract_strided_slice %77 {offsets = [0, 0], sizes = [1, 64], strides = [1, 1]} : vector<2x64xf32> to vector<1x64xf32>
    %79 = arith.truncf %78 : vector<1x64xf32> to vector<1x64xbf16>
    %80 = vector.extract_strided_slice %77 {offsets = [1, 0], sizes = [1, 64], strides = [1, 1]} : vector<2x64xf32> to vector<1x64xf32>
    %81 = arith.truncf %80 : vector<1x64xf32> to vector<1x64xbf16>
    %c0_50 = arith.constant 0 : index
    %c0_51 = arith.constant 0 : index
    %82 = vector.load %arg10[%c0_50, %c0_51] : memref<128x4672xbf16, #tpu.memory_space<vmem>>, vector<64x4672xbf16>
    %cst_52 = arith.constant dense<0.000000e+00> : vector<1x4672xf32>
    %83 = tpu.matmul %79, %82, %cst_52 {dimension_numbers = #tpu.dot_dimension_numbers<[1], [0], [0], [1], [0, 0, 1, 1], [], []>} : vector<1x64xbf16>, vector<64x4672xbf16>, vector<1x4672xf32> -> vector<1x4672xf32>
    %c64 = arith.constant 64 : index
    %c0_53 = arith.constant 0 : index
    %84 = vector.load %arg10[%c64, %c0_53] : memref<128x4672xbf16, #tpu.memory_space<vmem>>, vector<64x4672xbf16>
    %cst_54 = arith.constant dense<0.000000e+00> : vector<1x4672xf32>
    %85 = tpu.matmul %81, %84, %cst_54 {dimension_numbers = #tpu.dot_dimension_numbers<[1], [0], [0], [1], [0, 0, 1, 1], [], []>} : vector<1x64xbf16>, vector<64x4672xbf16>, vector<1x4672xf32> -> vector<1x4672xf32>
    %86 = arith.addf %83, %85 : vector<1x4672xf32>
    %c0_55 = arith.constant 0 : index
    %c0_56 = arith.constant 0 : index
    %87 = vector.load %arg11[%c0_55, %c0_56] : memref<1x4672xf32, #tpu.memory_space<vmem>>, vector<1x4672xf32>
    %88 = arith.addf %86, %87 : vector<1x4672xf32>
    %c0_57 = arith.constant 0 : index
    %c0_58 = arith.constant 0 : index
    %89 = vector.load %arg18[%c0_57, %c0_58] : memref<1x4672xf32, #tpu.memory_space<vmem>>, vector<1x4672xf32>
    tpu.vector_store %arg18[%c0_57, %c0_58], %88 {strides = array<i32>} : memref<1x4672xf32, #tpu.memory_space<vmem>>, vector<1x4672xf32>,
    return
  }
}

</mosaic_0001>

<llo_original>
// kernel: play_network_pallas.1
$region0: #{play_network_pallas.1}
  #allocation0 [shape = 'u32[]', space=smem, size = 0x4, offset = 0x4, fixed_abs, tag = 'smem constant byte address 0x4 - core index']
  #allocation1 [shape = 'u32[144,128]{1,0:T(1,128)}', space=vmem, size = 0x12000, scoped, tag = 'internal scratch']
  #allocation2 [shape = 'f32[1,1]{1,0:T(1,128)S(1)}', space=vmem, size = 0x200, scoped, tag = 'scoped memory for play_network_pallas.1']
  #allocation3 [shape = 'f32[1,1]{1,0:T(1,128)S(1)}', space=vmem, size = 0x200, scoped, tag = 'scoped memory for play_network_pallas.1']
  %s0 = inlined_call_operand.vmem [shape: f32[32,64], index: 0, kind: input, shape index: {}]
  %s1 = inlined_call_operand.vmem [shape: f32[8,32,64], index: 1, kind: input, shape index: {}]
  %s2 = inlined_call_operand.vmem [shape: bf16[32,288], index: 2, kind: input, shape index: {}]
  %s3 = inlined_call_operand.vmem [shape: f32[32,1], index: 3, kind: input, shape index: {}]
  %s4 = inlined_call_operand.vmem [shape: bf16[20,32,288], index: 4, kind: input, shape index: {}]
  %s5 = inlined_call_operand.vmem [shape: f32[20,32,1], index: 5, kind: input, shape index: {}]
  %s6 = inlined_call_operand.vmem [shape: bf16[20,32,288], index: 6, kind: input, shape index: {}]
  %s7 = inlined_call_operand.vmem [shape: f32[20,32,1], index: 7, kind: input, shape index: {}]
  %s8 = inlined_call_operand.vmem [shape: f32[2,32], index: 8, kind: input, shape index: {}]
  %s9 = inlined_call_operand.vmem [shape: f32[2,1], index: 9, kind: input, shape index: {}]
  %s10 = inlined_call_operand.vmem [shape: bf16[128,4672], index: 10, kind: input, shape index: {}]
  %s11 = inlined_call_operand.vmem [shape: f32[1,4672], index: 11, kind: input, shape index: {}]
  %s12 = inlined_call_operand.vmem [shape: f32[1,32], index: 12, kind: input, shape index: {}]
  %s13 = inlined_call_operand.<no memory space> [shape: f32[1,1], index: 13, kind: input, shape index: {}]
  %s14 = inlined_call_operand.vmem [shape: f32[64,32], index: 14, kind: input, shape index: {}]
  %s15 = inlined_call_operand.vmem [shape: f32[1,32], index: 15, kind: input, shape index: {}]
  %s16 = inlined_call_operand.vmem [shape: f32[32,1], index: 16, kind: input, shape index: {}]
  %s17 = inlined_call_operand.<no memory space> [shape: f32[1,1], index: 17, kind: input, shape index: {}]
  %s18 = inlined_call_operand.vmem [shape: f32[1,4672], index: 18, kind: output, shape index: {0}]
  %s19 = inlined_call_operand.hbm [shape: f32[1,1], index: 19, kind: output, shape index: {1}]
  %20 = xla_tuple %s18, %s19
  %s21 = sld [smem:[#allocation0]]
  $region97: #{play_network_pallas.1} parent=0
    _
  %s23 = ssub.s32 1, %s21
  %s24 = scalar_select 0, %s23, %s21
  %v25 = vstv %s13
  %26 = vst [vmem:[#allocation2] sm:$0x1] %v25
  %v27 = vstv %s17
  %28 = vst [vmem:[#allocation3] sm:$0x1] %v27
  $region1: #{play_network_pallas.1} parent=0
    #allocation4 [shape = 'u8[512]{0}', space=vmem, size = 0x400, scoped, tag = 'output window, operand 1, single buffered']
    #allocation5 [shape = 's32[1]{0}', space=sflag, size = 0x4, scoped, tag = 'scoped memory for play_network_pallas.1']
    %29 = vsyncpa [#allocation5], 0
    // Predicated region
    $region2: #{play_network_pallas.1} parent=1 // pred_check
      _
    $region3: #{play_network_pallas.1} parent=1 // pred_check_branch
      %31 = sbr.rel (0) target = $region5
    $region4: #{play_network_pallas.1} parent=1 // pred_region
      _
    $region5: #{play_network_pallas.1} parent=1 // pred_fallthru
      _
    // Predicated region
    $region6: #{play_network_pallas.1} parent=1 // pred_check
      _
    $region7: #{play_network_pallas.1} parent=1 // pred_check_branch
      %33 = sbr.rel (0) target = $region9
    $region8: #{play_network_pallas.1} parent=1 // pred_region
      _
    $region9: #{play_network_pallas.1} parent=1 // pred_fallthru
      _
    // Predicated region
    $region10: #{play_network_pallas.1} parent=1 // pred_check
      _
    $region11: #{play_network_pallas.1} parent=1 // pred_check_branch
      %35 = sbr.rel (0) target = $region13
    $region12: #{play_network_pallas.1} parent=1 // pred_region
      _
    $region13: #{play_network_pallas.1} parent=1 // pred_fallthru
      _
    // Predicated region
    $region14: #{play_network_pallas.1} parent=1 // pred_check
      _
    $region15: #{play_network_pallas.1} parent=1 // pred_check_branch
      %37 = sbr.rel (0) target = $region17
    $region16: #{play_network_pallas.1} parent=1 // pred_region
      _
    $region17: #{play_network_pallas.1} parent=1 // pred_fallthru
      _
    // Predicated region
    $region18: #{play_network_pallas.1} parent=1 // pred_check
      _
    $region19: #{play_network_pallas.1} parent=1 // pred_check_branch
      %39 = sbr.rel (0) target = $region21
    $region20: #{play_network_pallas.1} parent=1 // pred_region
      _
    $region21: #{play_network_pallas.1} parent=1 // pred_fallthru
      _
    // Predicated region
    $region22: #{play_network_pallas.1} parent=1 // pred_check
      _
    $region23: #{play_network_pallas.1} parent=1 // pred_check_branch
      %41 = sbr.rel (0) target = $region25
    $region24: #{play_network_pallas.1} parent=1 // pred_region
      _
    $region25: #{play_network_pallas.1} parent=1 // pred_fallthru
      _
    // Predicated region
    $region26: #{play_network_pallas.1} parent=1 // pred_check
      _
    $region27: #{play_network_pallas.1} parent=1 // pred_check_branch
      %43 = sbr.rel (0) target = $region29
    $region28: #{play_network_pallas.1} parent=1 // pred_region
      _
    $region29: #{play_network_pallas.1} parent=1 // pred_fallthru
      _
    // Predicated region
    $region30: #{play_network_pallas.1} parent=1 // pred_check
      _
    $region31: #{play_network_pallas.1} parent=1 // pred_check_branch
      %45 = sbr.rel (0) target = $region33
    $region32: #{play_network_pallas.1} parent=1 // pred_region
      _
    $region33: #{play_network_pallas.1} parent=1 // pred_fallthru
      _
    // Predicated region
    $region34: #{play_network_pallas.1} parent=1 // pred_check
      _
    $region35: #{play_network_pallas.1} parent=1 // pred_check_branch
      %47 = sbr.rel (0) target = $region37
    $region36: #{play_network_pallas.1} parent=1 // pred_region
      _
    $region37: #{play_network_pallas.1} parent=1 // pred_fallthru
      _
    // Predicated region
    $region38: #{play_network_pallas.1} parent=1 // pred_check
      _
    $region39: #{play_network_pallas.1} parent=1 // pred_check_branch
      %49 = sbr.rel (0) target = $region41
    $region40: #{play_network_pallas.1} parent=1 // pred_region
      _
    $region41: #{play_network_pallas.1} parent=1 // pred_fallthru
      _
    // Predicated region
    $region42: #{play_network_pallas.1} parent=1 // pred_check
      _
    $region43: #{play_network_pallas.1} parent=1 // pred_check_branch
      %51 = sbr.rel (0) target = $region45
    $region44: #{play_network_pallas.1} parent=1 // pred_region
      _
    $region45: #{play_network_pallas.1} parent=1 // pred_fallthru
      _
    // Predicated region
    $region46: #{play_network_pallas.1} parent=1 // pred_check
      _
    $region47: #{play_network_pallas.1} parent=1 // pred_check_branch
      %53 = sbr.rel (0) target = $region49
    $region48: #{play_network_pallas.1} parent=1 // pred_region
      _
    $region49: #{play_network_pallas.1} parent=1 // pred_fallthru
      _
    // Predicated region
    $region50: #{play_network_pallas.1} parent=1 // pred_check
      _
    $region51: #{play_network_pallas.1} parent=1 // pred_check_branch
      %55 = sbr.rel (0) target = $region53
    $region52: #{play_network_pallas.1} parent=1 // pred_region
      _
    $region53: #{play_network_pallas.1} parent=1 // pred_fallthru
      _
    // Predicated region
    $region54: #{play_network_pallas.1} parent=1 // pred_check
      _
    $region55: #{play_network_pallas.1} parent=1 // pred_check_branch
      %57 = sbr.rel (0) target = $region57
    $region56: #{play_network_pallas.1} parent=1 // pred_region
      _
    $region57: #{play_network_pallas.1} parent=1 // pred_fallthru
      _
    // Predicated region
    $region58: #{play_network_pallas.1} parent=1 // pred_check
      _
    $region59: #{play_network_pallas.1} parent=1 // pred_check_branch
      %59 = sbr.rel (0) target = $region61
    $region60: #{play_network_pallas.1} parent=1 // pred_region
      _
    $region61: #{play_network_pallas.1} parent=1 // pred_fallthru
      _
    // Predicated region
    $region62: #{play_network_pallas.1} parent=1 // pred_check
      _
    $region63: #{play_network_pallas.1} parent=1 // pred_check_branch
      %61 = sbr.rel (0) target = $region65
    $region64: #{play_network_pallas.1} parent=1 // pred_region
      _
    $region65: #{play_network_pallas.1} parent=1 // pred_fallthru
      _
    // Predicated region
    $region66: #{play_network_pallas.1} parent=1 // pred_check
      _
    $region67: #{play_network_pallas.1} parent=1 // pred_check_branch
      %63 = sbr.rel (0) target = $region69
    $region68: #{play_network_pallas.1} parent=1 // pred_region
      _
    $region69: #{play_network_pallas.1} parent=1 // pred_fallthru
      _
    // Predicated region
    $region70: #{play_network_pallas.1} parent=1 // pred_check
      _
    $region71: #{play_network_pallas.1} parent=1 // pred_check_branch
      %65 = sbr.rel (0) target = $region73
    $region72: #{play_network_pallas.1} parent=1 // pred_region
      _
    $region73: #{play_network_pallas.1} parent=1 // pred_fallthru
      _
    %v67 = vld [vmem:[%s0] sm:$0xff]
    %v68 = vld [vmem:[%s0 + $0x8] sm:$0xff]
    %v69 = vld [vmem:[%s0 + $0x10] sm:$0xff]
    %v70 = vld [vmem:[%s0 + $0x18] sm:$0xff]
    %v71 = vld [vmem:[%s2] sm:$0xff]
    %v72 = vld [vmem:[%s2 + $0x8] sm:$0xf]
    %v73 = vld [vmem:[%s2 + $0xc] sm:$0xff]
    %v74 = vld [vmem:[%s2 + $0x14] sm:$0xf]
    %v75 = vld [vmem:[%s2 + $0x18] sm:$0xff]
    %v76 = vld [vmem:[%s2 + $0x20] sm:$0xf]
    %v77 = vld [vmem:[%s2 + $0x24] sm:$0xff]
    %v78 = vld [vmem:[%s2 + $0x2c] sm:$0xf]
    %v79 = vld [vmem:[%s3] sm:$0xff]
    %v80 = vld [vmem:[%s3 + $0x8] sm:$0xff]
    %v81 = vld [vmem:[%s3 + $0x10] sm:$0xff]
    %v82 = vld [vmem:[%s3 + $0x18] sm:$0xff]
    %vm83 = vcmask 1048064
    %84 = vrot.lane.b32.xlu0 %v67, 64
    %v85 = vpop.permute.xlu0 %84
    %v86 = vsel %vm83, %v85, %v67
    %87 = vrot.lane.b32.xlu0 %v68, 64
    %v88 = vpop.permute.xlu0 %87
    %v89 = vsel %vm83, %v88, %v68
    %90 = vrot.lane.b32.xlu0 %v69, 64
    %v91 = vpop.permute.xlu0 %90
    %v92 = vsel %vm83, %v91, %v69
    %93 = vrot.lane.b32.xlu0 %v70, 64
    %v94 = vpop.permute.xlu0 %93
    %v95 = vsel %vm83, %v94, %v70
    %96 = vrot.lane.b32.xlu0 %v86, 64
    %v97 = vpop.permute.xlu0 %96
    %98 = vrot.lane.b32.xlu0 %v89, 64
    %v99 = vpop.permute.xlu0 %98
    %100 = vrot.lane.b32.xlu0 %v92, 64
    %v101 = vpop.permute.xlu0 %100
    %102 = vrot.lane.b32.xlu0 %v95, 64
    %v103 = vpop.permute.xlu0 %102
    %v104 = vsel %vm83, %v97, %v67
    %v105 = vsel %vm83, %v99, %v68
    %v106 = vsel %vm83, %v101, %v69
    %v107 = vsel %vm83, %v103, %v70
    %v108 = vld [vmem:[%s1] sm:$0xff]
    %v109 = vld [vmem:[%s1 + $0x8] sm:$0xff]
    %v110 = vld [vmem:[%s1 + $0x10] sm:$0xff]
    %v111 = vld [vmem:[%s1 + $0x18] sm:$0xff]
    %116 = vrot.lane.b32.xlu0 %v108, 55
    %v117 = vpop.permute.xlu0 %116
    %118 = vrot.lane.b32.xlu0 %v109, 55
    %v119 = vpop.permute.xlu0 %118
    %120 = vrot.lane.b32.xlu0 %v110, 55
    %v121 = vpop.permute.xlu0 %120
    %122 = vrot.lane.b32.xlu0 %v111, 55
    %v123 = vpop.permute.xlu0 %122
    %v128 = vmul.f32 %v104, %v117
    %v129 = vmul.f32 %v105, %v119
    %v130 = vmul.f32 %v106, %v121
    %v131 = vmul.f32 %v107, %v123
    %v132 = vpack.c.bf16 %v129, %v128
    %v133 = vpack.c.bf16 %v131, %v130
    %s134 = scalar_lea.vmem %s1, 32
    %v135 = vld [vmem:[%s134] sm:$0xff]
    %v136 = vld [vmem:[%s134 + $0x8] sm:$0xff]
    %v137 = vld [vmem:[%s134 + $0x10] sm:$0xff]
    %v138 = vld [vmem:[%s134 + $0x18] sm:$0xff]
    %143 = vrot.lane.b32.xlu0 %v135, 56
    %v144 = vpop.permute.xlu0 %143
    %145 = vrot.lane.b32.xlu0 %v136, 56
    %v146 = vpop.permute.xlu0 %145
    %147 = vrot.lane.b32.xlu0 %v137, 56
    %v148 = vpop.permute.xlu0 %147
    %149 = vrot.lane.b32.xlu0 %v138, 56
    %v150 = vpop.permute.xlu0 %149
    %v155 = vmul.f32 %v104, %v144
    %v156 = vmul.f32 %v105, %v146
    %v157 = vmul.f32 %v106, %v148
    %v158 = vmul.f32 %v107, %v150
    %v159 = vpack.c.bf16 %v156, %v155
    %v160 = vpack.c.bf16 %v158, %v157
    %s161 = scalar_lea.vmem %s1, 64
    %v162 = vld [vmem:[%s161] sm:$0xff]
    %v163 = vld [vmem:[%s161 + $0x8] sm:$0xff]
    %v164 = vld [vmem:[%s161 + $0x10] sm:$0xff]
    %v165 = vld [vmem:[%s161 + $0x18] sm:$0xff]
    %170 = vrot.lane.b32.xlu0 %v162, 57
    %v171 = vpop.permute.xlu0 %170
    %172 = vrot.lane.b32.xlu0 %v163, 57
    %v173 = vpop.permute.xlu0 %172
    %174 = vrot.lane.b32.xlu0 %v164, 57
    %v175 = vpop.permute.xlu0 %174
    %176 = vrot.lane.b32.xlu0 %v165, 57
    %v177 = vpop.permute.xlu0 %176
    %v182 = vmul.f32 %v104, %v171
    %v183 = vmul.f32 %v105, %v173
    %v184 = vmul.f32 %v106, %v175
    %v185 = vmul.f32 %v107, %v177
    %v186 = vpack.c.bf16 %v183, %v182
    %v187 = vpack.c.bf16 %v185, %v184
    %s188 = scalar_lea.vmem %s1, 96
    %v189 = vld [vmem:[%s188] sm:$0xff]
    %v190 = vld [vmem:[%s188 + $0x8] sm:$0xff]
    %v191 = vld [vmem:[%s188 + $0x10] sm:$0xff]
    %v192 = vld [vmem:[%s188 + $0x18] sm:$0xff]
    %197 = vrot.lane.b32.xlu0 %v189, 63
    %v198 = vpop.permute.xlu0 %197
    %199 = vrot.lane.b32.xlu0 %v190, 63
    %v200 = vpop.permute.xlu0 %199
    %201 = vrot.lane.b32.xlu0 %v191, 63
    %v202 = vpop.permute.xlu0 %201
    %203 = vrot.lane.b32.xlu0 %v192, 63
    %v204 = vpop.permute.xlu0 %203
    %v209 = vmul.f32 %v104, %v198
    %v210 = vmul.f32 %v105, %v200
    %v211 = vmul.f32 %v106, %v202
    %v212 = vmul.f32 %v107, %v204
    %v213 = vpack.c.bf16 %v210, %v209
    %v214 = vpack.c.bf16 %v212, %v211
    %v215 = vpack.c.bf16 %v68, %v67
    %v216 = vpack.c.bf16 %v70, %v69
    %s217 = scalar_lea.vmem %s1, 128
    %v218 = vld [vmem:[%s217] sm:$0xff]
    %v219 = vld [vmem:[%s217 + $0x8] sm:$0xff]
    %v220 = vld [vmem:[%s217 + $0x10] sm:$0xff]
    %v221 = vld [vmem:[%s217 + $0x18] sm:$0xff]
    %226 = vrot.lane.b32.xlu0 %v218, 1
    %v227 = vpop.permute.xlu0 %226
    %228 = vrot.lane.b32.xlu0 %v219, 1
    %v229 = vpop.permute.xlu0 %228
    %230 = vrot.lane.b32.xlu0 %v220, 1
    %v231 = vpop.permute.xlu0 %230
    %232 = vrot.lane.b32.xlu0 %v221, 1
    %v233 = vpop.permute.xlu0 %232
    %v238 = vmul.f32 %v104, %v227
    %v239 = vmul.f32 %v105, %v229
    %v240 = vmul.f32 %v106, %v231
    %v241 = vmul.f32 %v107, %v233
    %v242 = vpack.c.bf16 %v239, %v238
    %v243 = vpack.c.bf16 %v241, %v240
    %s244 = scalar_lea.vmem %s1, 160
    %v245 = vld [vmem:[%s244] sm:$0xff]
    %v246 = vld [vmem:[%s244 + $0x8] sm:$0xff]
    %v247 = vld [vmem:[%s244 + $0x10] sm:$0xff]
    %v248 = vld [vmem:[%s244 + $0x18] sm:$0xff]
    %253 = vrot.lane.b32.xlu0 %v245, 7
    %v254 = vpop.permute.xlu0 %253
    %255 = vrot.lane.b32.xlu0 %v246, 7
    %v256 = vpop.permute.xlu0 %255
    %257 = vrot.lane.b32.xlu0 %v247, 7
    %v258 = vpop.permute.xlu0 %257
    %259 = vrot.lane.b32.xlu0 %v248, 7
    %v260 = vpop.permute.xlu0 %259
    %v265 = vmul.f32 %v104, %v254
    %v266 = vmul.f32 %v105, %v256
    %v267 = vmul.f32 %v106, %v258
    %v268 = vmul.f32 %v107, %v260
    %v269 = vpack.c.bf16 %v266, %v265
    %v270 = vpack.c.bf16 %v268, %v267
    %s271 = scalar_lea.vmem %s1, 192
    %v272 = vld [vmem:[%s271] sm:$0xff]
    %v273 = vld [vmem:[%s271 + $0x8] sm:$0xff]
    %v274 = vld [vmem:[%s271 + $0x10] sm:$0xff]
    %v275 = vld [vmem:[%s271 + $0x18] sm:$0xff]
    %280 = vrot.lane.b32.xlu0 %v272, 8
    %v281 = vpop.permute.xlu0 %280
    %282 = vrot.lane.b32.xlu0 %v273, 8
    %v283 = vpop.permute.xlu0 %282
    %284 = vrot.lane.b32.xlu0 %v274, 8
    %v285 = vpop.permute.xlu0 %284
    %286 = vrot.lane.b32.xlu0 %v275, 8
    %v287 = vpop.permute.xlu0 %286
    %v292 = vmul.f32 %v104, %v281
    %v293 = vmul.f32 %v105, %v283
    %v294 = vmul.f32 %v106, %v285
    %v295 = vmul.f32 %v107, %v287
    %v296 = vpack.c.bf16 %v293, %v292
    %v297 = vpack.c.bf16 %v295, %v294
    %s298 = scalar_lea.vmem %s1, 224
    %v299 = vld [vmem:[%s298] sm:$0xff]
    %v300 = vld [vmem:[%s298 + $0x8] sm:$0xff]
    %v301 = vld [vmem:[%s298 + $0x10] sm:$0xff]
    %v302 = vld [vmem:[%s298 + $0x18] sm:$0xff]
    %307 = vrot.lane.b32.xlu0 %v299, 9
    %v308 = vpop.permute.xlu0 %307
    %309 = vrot.lane.b32.xlu0 %v300, 9
    %v310 = vpop.permute.xlu0 %309
    %311 = vrot.lane.b32.xlu0 %v301, 9
    %v312 = vpop.permute.xlu0 %311
    %313 = vrot.lane.b32.xlu0 %v302, 9
    %v314 = vpop.permute.xlu0 %313
    %v319 = vmul.f32 %v104, %v308
    %v320 = vmul.f32 %v105, %v310
    %v321 = vmul.f32 %v106, %v312
    %v322 = vmul.f32 %v107, %v314
    %v323 = vpack.c.bf16 %v320, %v319
    %v324 = vpack.c.bf16 %v322, %v321
    %327 = vrot.lane.b32.xlu0 %v159, 127
    %v328 = vpop.permute.xlu0 %327
    %329 = vrot.lane.b32.xlu0 %v160, 127
    %v330 = vpop.permute.xlu0 %329
    %333 = vrot.lane.b32.xlu0 %v186, 126
    %v334 = vpop.permute.xlu0 %333
    %335 = vrot.lane.b32.xlu0 %v187, 126
    %v336 = vpop.permute.xlu0 %335
    %339 = vrot.lane.b32.xlu0 %v213, 120
    %v340 = vpop.permute.xlu0 %339
    %341 = vrot.lane.b32.xlu0 %v214, 120
    %v342 = vpop.permute.xlu0 %341
    %345 = vrot.lane.b32.xlu0 %v215, 55
    %v346 = vpop.permute.xlu0 %345
    %347 = vrot.lane.b32.xlu0 %v216, 55
    %v348 = vpop.permute.xlu0 %347
    %351 = vrot.lane.b32.xlu0 %v242, 54
    %v352 = vpop.permute.xlu0 %351
    %353 = vrot.lane.b32.xlu0 %v243, 54
    %v354 = vpop.permute.xlu0 %353
    %357 = vrot.lane.b32.xlu0 %v269, 48
    %v358 = vpop.permute.xlu0 %357
    %359 = vrot.lane.b32.xlu0 %v270, 48
    %v360 = vpop.permute.xlu0 %359
    %363 = vrot.lane.b32.xlu0 %v296, 47
    %v364 = vpop.permute.xlu0 %363
    %365 = vrot.lane.b32.xlu0 %v297, 47
    %v366 = vpop.permute.xlu0 %365
    %369 = vrot.lane.b32.xlu0 %v323, 46
    %v370 = vpop.permute.xlu0 %369
    %371 = vrot.lane.b32.xlu0 %v324, 46
    %v372 = vpop.permute.xlu0 %371
    %374 = vset.pattern.permute.xlu0 0
    %375 = vperm.xlu0 %374, %v79
    %v376 = vpop.permute.xlu0 %375
    %379 = vset.pattern.permute.xlu0 0
    %380 = vperm.xlu0 %379, %v80
    %v381 = vpop.permute.xlu0 %380
    %384 = vset.pattern.permute.xlu0 0
    %385 = vperm.xlu0 %384, %v81
    %v386 = vpop.permute.xlu0 %385
    %389 = vset.pattern.permute.xlu0 0
    %390 = vperm.xlu0 %389, %v82
    %v391 = vpop.permute.xlu0 %390
    %v401 = vunpack.c.l.b16 %v71
    %v402 = vunpack.c.h.b16 %v71
    %v403 = vunpack.c.l.b16 %v72
    %v404 = vunpack.c.l.b16 %v73
    %v405 = vunpack.c.h.b16 %v73
    %v406 = vunpack.c.l.b16 %v74
    %v407 = vunpack.c.l.b16 %v75
    %v408 = vunpack.c.h.b16 %v75
    %v409 = vunpack.c.l.b16 %v76
    %v410 = vunpack.c.l.b16 %v77
    %v411 = vunpack.c.h.b16 %v77
    %v412 = vunpack.c.l.b16 %v78
    %v413 = vpack.c.b16 %v404, %v401
    %v414 = vpack.c.b16 %v405, %v402
    %v415 = vpack.c.b16 %v406, %v403
    %v416 = vpack.c.b16 %v410, %v407
    %v417 = vpack.c.b16 %v411, %v408
    %v418 = vpack.c.b16 %v412, %v409
    %425 = vrot.lane.b32.xlu0 %v132, 73
    %v426 = vpop.permute.xlu0 %425
    %427 = vrot.lane.b32.xlu0 %v133, 73
    %v428 = vpop.permute.xlu0 %427
    %429 = vrot.lane.b32.xlu0 %v328, 73
    %v430 = vpop.permute.xlu0 %429
    %431 = vrot.lane.b32.xlu0 %v330, 73
    %v432 = vpop.permute.xlu0 %431
    %433 = vrot.lane.b32.xlu0 %v334, 73
    %v434 = vpop.permute.xlu0 %433
    %435 = vrot.lane.b32.xlu0 %v336, 73
    %v436 = vpop.permute.xlu0 %435
    %437 = vrot.lane.b32.xlu0 %v340, 73
    %v438 = vpop.permute.xlu0 %437
    %439 = vrot.lane.b32.xlu0 %v342, 73
    %v440 = vpop.permute.xlu0 %439
    %441 = vrot.lane.b32.xlu0 %v346, 73
    %v442 = vpop.permute.xlu0 %441
    %443 = vrot.lane.b32.xlu0 %v348, 73
    %v444 = vpop.permute.xlu0 %443
    %445 = vrot.lane.b32.xlu0 %v352, 73
    %v446 = vpop.permute.xlu0 %445
    %447 = vrot.lane.b32.xlu0 %v354, 73
    %v448 = vpop.permute.xlu0 %447
    %449 = vrot.lane.b32.xlu0 %v358, 73
    %v450 = vpop.permute.xlu0 %449
    %451 = vrot.lane.b32.xlu0 %v360, 73
    %v452 = vpop.permute.xlu0 %451
    %453 = vrot.lane.b32.xlu0 %v364, 73
    %v454 = vpop.permute.xlu0 %453
    %455 = vrot.lane.b32.xlu0 %v366, 73
    %v456 = vpop.permute.xlu0 %455
    %457 = vrot.lane.b32.xlu0 %v370, 73
    %v458 = vpop.permute.xlu0 %457
    %459 = vrot.lane.b32.xlu0 %v372, 73
    %v460 = vpop.permute.xlu0 %459
    %vm479 = vcmask 261120
    %v481 = vsel %vm479, %v415, 0
    %v484 = vsel %vm479, %v418, 0
    %486 = vmatprep.subr.bf16.mxu0 0
    %487 = vmatpush1.bf16.msra.mxu0 %v426
    %488 = vmatprep.subr.bf16.mxu0 0
    %489 = vmatpush1.bf16.msra.mxu0 %v428
    %490 = vmatprep.subr.bf16.mxu0 0
    %491 = vmatpush1.bf16.msra.mxu0 %v430
    %492 = vmatprep.subr.bf16.mxu0 0
    %493 = vmatpush1.bf16.msra.mxu0 %v432
    %494 = vmatprep.subr.bf16.mxu0 0
    %495 = vmatpush1.bf16.msra.mxu0 %v434
    %496 = vmatprep.subr.bf16.mxu0 0
    %497 = vmatpush1.bf16.msra.mxu0 %v436
    %498 = vmatprep.subr.bf16.mxu0 0
    %499 = vmatpush1.bf16.msra.mxu0 %v438
    %500 = vmatprep.subr.bf16.mxu0 0
    %501 = vmatpush1.bf16.msra.mxu0 %v440
    %502 = vmatprep.subr.bf16.mxu0 0
    %503 = vmatpush1.bf16.msra.mxu0 %v442
    %504 = vmatprep.subr.bf16.mxu0 0
    %505 = vmatpush1.bf16.msra.mxu0 %v444
    %506 = vmatprep.subr.bf16.mxu0 0
    %507 = vmatpush1.bf16.msra.mxu0 %v446
    %508 = vmatprep.subr.bf16.mxu0 0
    %509 = vmatpush1.bf16.msra.mxu0 %v448
    %510 = vmatprep.subr.bf16.mxu0 0
    %511 = vmatpush1.bf16.msra.mxu0 %v450
    %512 = vmatprep.subr.bf16.mxu0 0
    %513 = vmatpush1.bf16.msra.mxu0 %v452
    %514 = vmatprep.subr.bf16.mxu0 0
    %515 = vmatpush1.bf16.msra.mxu0 %v454
    %516 = vmatprep.subr.bf16.mxu0 0
    %517 = vmatpush1.bf16.msra.mxu0 %v456
    %518 = vmatprep.mubr.bf16.mxu0 %v414
    %519 = vmatmul.mubr.bf16.gmra.mrb[0].mxu0 %v413
    %v520 = vpop.f32.mrb[0].mxu0
    %v521 = vadd.f32 %v376, %v520
    %v522 = vpop.f32.mrb[0].mxu0
    %v523 = vpop.f32.mrb[0].mxu0
    %v524 = vadd.f32 %v381, %v523
    %v525 = vpop.f32.mrb[0].mxu0
    %526 = vmatprep.mubr.bf16.mxu0 %v417
    %527 = vmatmul.mubr.bf16.gmra.mrb[0].mxu0 %v416
    %v528 = vpop.f32.mrb[0].mxu0
    %v529 = vadd.f32 %v386, %v528
    %v530 = vpop.f32.mrb[0].mxu0
    %v531 = vpop.f32.mrb[0].mxu0
    %v532 = vadd.f32 %v391, %v531
    %v533 = vpop.f32.mrb[0].mxu0
    %534 = vdwg.mxu0
    %535 = vmatprep.subr.bf16.mxu0 0
    %536 = vmatpush1.bf16.msra.mxu0 %v458
    %537 = vmatprep.subr.bf16.mxu0 0
    %538 = vmatpush1.bf16.msra.mxu0 %v460
    %539 = vmatprep.subr.bf16.mxu0 0
    %540 = vmatpush1.bf16.msra.mxu0 0
    %541 = vmatprep.subr.bf16.mxu0 0
    %542 = vmatpush1.bf16.msra.mxu0 0
    %543 = vmatprep.subr.bf16.mxu0 0
    %544 = vmatpush1.bf16.msra.mxu0 0
    %545 = vmatprep.subr.bf16.mxu0 0
    %546 = vmatpush1.bf16.msra.mxu0 0
    %547 = vmatprep.subr.bf16.mxu0 0
    %548 = vmatpush1.bf16.msra.mxu0 0
    %549 = vmatprep.subr.bf16.mxu0 0
    %550 = vmatpush1.bf16.msra.mxu0 0
    %551 = vmatprep.subr.bf16.mxu0 0
    %552 = vmatpush1.bf16.msra.mxu0 0
    %553 = vmatprep.subr.bf16.mxu0 0
    %554 = vmatpush1.bf16.msra.mxu0 0
    %555 = vmatprep.subr.bf16.mxu0 0
    %556 = vmatpush1.bf16.msra.mxu0 0
    %557 = vmatprep.subr.bf16.mxu0 0
    %558 = vmatpush1.bf16.msra.mxu0 0
    %559 = vmatprep.subr.bf16.mxu0 0
    %560 = vmatpush1.bf16.msra.mxu0 0
    %561 = vmatprep.subr.bf16.mxu0 0
    %562 = vmatpush1.bf16.msra.mxu0 0
    %563 = vmatprep.subr.bf16.mxu0 0
    %564 = vmatpush1.bf16.msra.mxu0 0
    %565 = vmatprep.subr.bf16.mxu0 0
    %566 = vmatpush1.bf16.msra.mxu0 0
    %567 = vmatprep.mubr.bf16.mxu0 0
    %568 = vmatmul.mubr.bf16.gmra.mrb[0].mxu0 %v481
    %v569 = vpop.f32.mrb[0].mxu0
    %v570 = vadd.f32 %v521, %v569
    %v571 = vpop.f32.mrb[0].mxu0
    %v572 = vpop.f32.mrb[0].mxu0
    %v573 = vadd.f32 %v524, %v572
    %v574 = vpop.f32.mrb[0].mxu0
    %575 = vmatprep.mubr.bf16.mxu0 0
    %576 = vmatmul.mubr.bf16.gmra.mrb[0].mxu0 %v484
    %v577 = vpop.f32.mrb[0].mxu0
    %v578 = vadd.f32 %v529, %v577
    %v579 = vpop.f32.mrb[0].mxu0
    %v580 = vpop.f32.mrb[0].mxu0
    %v581 = vadd.f32 %v532, %v580
    %v582 = vpop.f32.mrb[0].mxu0
    %583 = vdwg.mxu0
    %v584 = vmax.f32 %v570, 0.0
    %v585 = vmax.f32 %v573, 0.0
    %v586 = vmax.f32 %v578, 0.0
    %v587 = vmax.f32 %v581, 0.0
    loop: start=0, step=1, limit=10
    $region74: #{play_network_pallas.1} parent=1 // loop_pre_header
      _
    $region75: #{play_network_pallas.1} parent=1 // loop_header
      %s589 = sphi 0, %s593
      %p590 = scmp.ge.s32.totalorder %s589, 10
      %v594 = vphi %v584, %v2172
      %v595 = vphi %v585, %v2173
      %v596 = vphi %v586, %v2174
      %v597 = vphi %v587, %v2175
    $region76: #{play_network_pallas.1} parent=1 // loop_header_branch
      %592 = sbr.rel (%p590) target = $region80
    $region77: #{play_network_pallas.1} parent=1 // loop_body
      %s598 = smul.u32 %s589, 2
      %s599 = sadd.s32 %s598, 1
      %s600 = smul.u32 %s598, 12
      %s601 = smul.addr %s600, 4
      %s602 = scalar_lea.vmem %s4, %s601
      %v603 = vld [vmem:[%s602] sm:$0xff]
      %v604 = vld [vmem:[%s602 + $0x8] sm:$0xf]
      %v605 = vld [vmem:[%s602 + $0xc] sm:$0xff]
      %v606 = vld [vmem:[%s602 + $0x14] sm:$0xf]
      %v607 = vld [vmem:[%s602 + $0x18] sm:$0xff]
      %v608 = vld [vmem:[%s602 + $0x20] sm:$0xf]
      %v609 = vld [vmem:[%s602 + $0x24] sm:$0xff]
      %v610 = vld [vmem:[%s602 + $0x2c] sm:$0xf]
      %s611 = smul.u32 %s598, 32
      %s612 = scalar_lea.vmem %s5, %s611
      %v613 = vld [vmem:[%s612] sm:$0xff]
      %v614 = vld [vmem:[%s612 + $0x8] sm:$0xff]
      %v615 = vld [vmem:[%s612 + $0x10] sm:$0xff]
      %v616 = vld [vmem:[%s612 + $0x18] sm:$0xff]
      %617 = vrot.lane.b32.xlu0 %v594, 64
      %v618 = vpop.permute.xlu0 %617
      %v619 = vsel %vm83, %v618, %v594
      %620 = vrot.lane.b32.xlu0 %v595, 64
      %v621 = vpop.permute.xlu0 %620
      %v622 = vsel %vm83, %v621, %v595
      %623 = vrot.lane.b32.xlu0 %v596, 64
      %v624 = vpop.permute.xlu0 %623
      %v625 = vsel %vm83, %v624, %v596
      %626 = vrot.lane.b32.xlu0 %v597, 64
      %v627 = vpop.permute.xlu0 %626
      %v628 = vsel %vm83, %v627, %v597
      %629 = vrot.lane.b32.xlu0 %v619, 64
      %v630 = vpop.permute.xlu0 %629
      %631 = vrot.lane.b32.xlu0 %v622, 64
      %v632 = vpop.permute.xlu0 %631
      %633 = vrot.lane.b32.xlu0 %v625, 64
      %v634 = vpop.permute.xlu0 %633
      %635 = vrot.lane.b32.xlu0 %v628, 64
      %v636 = vpop.permute.xlu0 %635
      %v637 = vsel %vm83, %v630, %v594
      %v638 = vsel %vm83, %v632, %v595
      %v639 = vsel %vm83, %v634, %v596
      %v640 = vsel %vm83, %v636, %v597
      %v641 = vld [vmem:[%s1] sm:$0xff]
      %v642 = vld [vmem:[%s1 + $0x8] sm:$0xff]
      %v643 = vld [vmem:[%s1 + $0x10] sm:$0xff]
      %v644 = vld [vmem:[%s1 + $0x18] sm:$0xff]
      %649 = vrot.lane.b32.xlu0 %v641, 55
      %v650 = vpop.permute.xlu0 %649
      %651 = vrot.lane.b32.xlu0 %v642, 55
      %v652 = vpop.permute.xlu0 %651
      %653 = vrot.lane.b32.xlu0 %v643, 55
      %v654 = vpop.permute.xlu0 %653
      %655 = vrot.lane.b32.xlu0 %v644, 55
      %v656 = vpop.permute.xlu0 %655
      %v661 = vmul.f32 %v637, %v650
      %v662 = vmul.f32 %v638, %v652
      %v663 = vmul.f32 %v639, %v654
      %v664 = vmul.f32 %v640, %v656
      %v665 = vpack.c.bf16 %v662, %v661
      %v666 = vpack.c.bf16 %v664, %v663
      %v667 = vld [vmem:[%s134] sm:$0xff]
      %v668 = vld [vmem:[%s134 + $0x8] sm:$0xff]
      %v669 = vld [vmem:[%s134 + $0x10] sm:$0xff]
      %v670 = vld [vmem:[%s134 + $0x18] sm:$0xff]
      %675 = vrot.lane.b32.xlu0 %v667, 56
      %v676 = vpop.permute.xlu0 %675
      %677 = vrot.lane.b32.xlu0 %v668, 56
      %v678 = vpop.permute.xlu0 %677
      %679 = vrot.lane.b32.xlu0 %v669, 56
      %v680 = vpop.permute.xlu0 %679
      %681 = vrot.lane.b32.xlu0 %v670, 56
      %v682 = vpop.permute.xlu0 %681
      %v687 = vmul.f32 %v637, %v676
      %v688 = vmul.f32 %v638, %v678
      %v689 = vmul.f32 %v639, %v680
      %v690 = vmul.f32 %v640, %v682
      %v691 = vpack.c.bf16 %v688, %v687
      %v692 = vpack.c.bf16 %v690, %v689
      %v693 = vld [vmem:[%s161] sm:$0xff]
      %v694 = vld [vmem:[%s161 + $0x8] sm:$0xff]
      %v695 = vld [vmem:[%s161 + $0x10] sm:$0xff]
      %v696 = vld [vmem:[%s161 + $0x18] sm:$0xff]
      %701 = vrot.lane.b32.xlu0 %v693, 57
      %v702 = vpop.permute.xlu0 %701
      %703 = vrot.lane.b32.xlu0 %v694, 57
      %v704 = vpop.permute.xlu0 %703
      %705 = vrot.lane.b32.xlu0 %v695, 57
      %v706 = vpop.permute.xlu0 %705
      %707 = vrot.lane.b32.xlu0 %v696, 57
      %v708 = vpop.permute.xlu0 %707
      %v713 = vmul.f32 %v637, %v702
      %v714 = vmul.f32 %v638, %v704
      %v715 = vmul.f32 %v639, %v706
      %v716 = vmul.f32 %v640, %v708
      %v717 = vpack.c.bf16 %v714, %v713
      %v718 = vpack.c.bf16 %v716, %v715
      %v719 = vld [vmem:[%s188] sm:$0xff]
      %v720 = vld [vmem:[%s188 + $0x8] sm:$0xff]
      %v721 = vld [vmem:[%s188 + $0x10] sm:$0xff]
      %v722 = vld [vmem:[%s188 + $0x18] sm:$0xff]
      %727 = vrot.lane.b32.xlu0 %v719, 63
      %v728 = vpop.permute.xlu0 %727
      %729 = vrot.lane.b32.xlu0 %v720, 63
      %v730 = vpop.permute.xlu0 %729
      %731 = vrot.lane.b32.xlu0 %v721, 63
      %v732 = vpop.permute.xlu0 %731
      %733 = vrot.lane.b32.xlu0 %v722, 63
      %v734 = vpop.permute.xlu0 %733
      %v739 = vmul.f32 %v637, %v728
      %v740 = vmul.f32 %v638, %v730
      %v741 = vmul.f32 %v639, %v732
      %v742 = vmul.f32 %v640, %v734
      %v743 = vpack.c.bf16 %v740, %v739
      %v744 = vpack.c.bf16 %v742, %v741
      %v745 = vpack.c.bf16 %v595, %v594
      %v746 = vpack.c.bf16 %v597, %v596
      %v747 = vld [vmem:[%s217] sm:$0xff]
      %v748 = vld [vmem:[%s217 + $0x8] sm:$0xff]
      %v749 = vld [vmem:[%s217 + $0x10] sm:$0xff]
      %v750 = vld [vmem:[%s217 + $0x18] sm:$0xff]
      %755 = vrot.lane.b32.xlu0 %v747, 1
      %v756 = vpop.permute.xlu0 %755
      %757 = vrot.lane.b32.xlu0 %v748, 1
      %v758 = vpop.permute.xlu0 %757
      %759 = vrot.lane.b32.xlu0 %v749, 1
      %v760 = vpop.permute.xlu0 %759
      %761 = vrot.lane.b32.xlu0 %v750, 1
      %v762 = vpop.permute.xlu0 %761
      %v767 = vmul.f32 %v637, %v756
      %v768 = vmul.f32 %v638, %v758
      %v769 = vmul.f32 %v639, %v760
      %v770 = vmul.f32 %v640, %v762
      %v771 = vpack.c.bf16 %v768, %v767
      %v772 = vpack.c.bf16 %v770, %v769
      %v773 = vld [vmem:[%s244] sm:$0xff]
      %v774 = vld [vmem:[%s244 + $0x8] sm:$0xff]
      %v775 = vld [vmem:[%s244 + $0x10] sm:$0xff]
      %v776 = vld [vmem:[%s244 + $0x18] sm:$0xff]
      %781 = vrot.lane.b32.xlu0 %v773, 7
      %v782 = vpop.permute.xlu0 %781
      %783 = vrot.lane.b32.xlu0 %v774, 7
      %v784 = vpop.permute.xlu0 %783
      %785 = vrot.lane.b32.xlu0 %v775, 7
      %v786 = vpop.permute.xlu0 %785
      %787 = vrot.lane.b32.xlu0 %v776, 7
      %v788 = vpop.permute.xlu0 %787
      %v793 = vmul.f32 %v637, %v782
      %v794 = vmul.f32 %v638, %v784
      %v795 = vmul.f32 %v639, %v786
      %v796 = vmul.f32 %v640, %v788
      %v797 = vpack.c.bf16 %v794, %v793
      %v798 = vpack.c.bf16 %v796, %v795
      %v799 = vld [vmem:[%s271] sm:$0xff]
      %v800 = vld [vmem:[%s271 + $0x8] sm:$0xff]
      %v801 = vld [vmem:[%s271 + $0x10] sm:$0xff]
      %v802 = vld [vmem:[%s271 + $0x18] sm:$0xff]
      %807 = vrot.lane.b32.xlu0 %v799, 8
      %v808 = vpop.permute.xlu0 %807
      %809 = vrot.lane.b32.xlu0 %v800, 8
      %v810 = vpop.permute.xlu0 %809
      %811 = vrot.lane.b32.xlu0 %v801, 8
      %v812 = vpop.permute.xlu0 %811
      %813 = vrot.lane.b32.xlu0 %v802, 8
      %v814 = vpop.permute.xlu0 %813
      %v819 = vmul.f32 %v637, %v808
      %v820 = vmul.f32 %v638, %v810
      %v821 = vmul.f32 %v639, %v812
      %v822 = vmul.f32 %v640, %v814
      %v823 = vpack.c.bf16 %v820, %v819
      %v824 = vpack.c.bf16 %v822, %v821
      %v825 = vld [vmem:[%s298] sm:$0xff]
      %v826 = vld [vmem:[%s298 + $0x8] sm:$0xff]
      %v827 = vld [vmem:[%s298 + $0x10] sm:$0xff]
      %v828 = vld [vmem:[%s298 + $0x18] sm:$0xff]
      %833 = vrot.lane.b32.xlu0 %v825, 9
      %v834 = vpop.permute.xlu0 %833
      %835 = vrot.lane.b32.xlu0 %v826, 9
      %v836 = vpop.permute.xlu0 %835
      %837 = vrot.lane.b32.xlu0 %v827, 9
      %v838 = vpop.permute.xlu0 %837
      %839 = vrot.lane.b32.xlu0 %v828, 9
      %v840 = vpop.permute.xlu0 %839
      %v845 = vmul.f32 %v637, %v834
      %v846 = vmul.f32 %v638, %v836
      %v847 = vmul.f32 %v639, %v838
      %v848 = vmul.f32 %v640, %v840
      %v849 = vpack.c.bf16 %v846, %v845
      %v850 = vpack.c.bf16 %v848, %v847
      %853 = vrot.lane.b32.xlu0 %v691, 127
      %v854 = vpop.permute.xlu0 %853
      %855 = vrot.lane.b32.xlu0 %v692, 127
      %v856 = vpop.permute.xlu0 %855
      %859 = vrot.lane.b32.xlu0 %v717, 126
      %v860 = vpop.permute.xlu0 %859
      %861 = vrot.lane.b32.xlu0 %v718, 126
      %v862 = vpop.permute.xlu0 %861
      %865 = vrot.lane.b32.xlu0 %v743, 120
      %v866 = vpop.permute.xlu0 %865
      %867 = vrot.lane.b32.xlu0 %v744, 120
      %v868 = vpop.permute.xlu0 %867
      %871 = vrot.lane.b32.xlu0 %v745, 55
      %v872 = vpop.permute.xlu0 %871
      %873 = vrot.lane.b32.xlu0 %v746, 55
      %v874 = vpop.permute.xlu0 %873
      %877 = vrot.lane.b32.xlu0 %v771, 54
      %v878 = vpop.permute.xlu0 %877
      %879 = vrot.lane.b32.xlu0 %v772, 54
      %v880 = vpop.permute.xlu0 %879
      %883 = vrot.lane.b32.xlu0 %v797, 48
      %v884 = vpop.permute.xlu0 %883
      %885 = vrot.lane.b32.xlu0 %v798, 48
      %v886 = vpop.permute.xlu0 %885
      %889 = vrot.lane.b32.xlu0 %v823, 47
      %v890 = vpop.permute.xlu0 %889
      %891 = vrot.lane.b32.xlu0 %v824, 47
      %v892 = vpop.permute.xlu0 %891
      %895 = vrot.lane.b32.xlu0 %v849, 46
      %v896 = vpop.permute.xlu0 %895
      %897 = vrot.lane.b32.xlu0 %v850, 46
      %v898 = vpop.permute.xlu0 %897
      %900 = vset.pattern.permute.xlu0 0
      %901 = vperm.xlu0 %900, %v613
      %v902 = vpop.permute.xlu0 %901
      %905 = vset.pattern.permute.xlu0 0
      %906 = vperm.xlu0 %905, %v614
      %v907 = vpop.permute.xlu0 %906
      %910 = vset.pattern.permute.xlu0 0
      %911 = vperm.xlu0 %910, %v615
      %v912 = vpop.permute.xlu0 %911
      %915 = vset.pattern.permute.xlu0 0
      %916 = vperm.xlu0 %915, %v616
      %v917 = vpop.permute.xlu0 %916
      %v927 = vunpack.c.l.b16 %v603
      %v928 = vunpack.c.h.b16 %v603
      %v929 = vunpack.c.l.b16 %v604
      %v930 = vunpack.c.l.b16 %v605
      %v931 = vunpack.c.h.b16 %v605
      %v932 = vunpack.c.l.b16 %v606
      %v933 = vunpack.c.l.b16 %v607
      %v934 = vunpack.c.h.b16 %v607
      %v935 = vunpack.c.l.b16 %v608
      %v936 = vunpack.c.l.b16 %v609
      %v937 = vunpack.c.h.b16 %v609
      %v938 = vunpack.c.l.b16 %v610
      %v939 = vpack.c.b16 %v930, %v927
      %v940 = vpack.c.b16 %v931, %v928
      %v941 = vpack.c.b16 %v932, %v929
      %v942 = vpack.c.b16 %v936, %v933
      %v943 = vpack.c.b16 %v937, %v934
      %v944 = vpack.c.b16 %v938, %v935
      %951 = vrot.lane.b32.xlu0 %v665, 73
      %v952 = vpop.permute.xlu0 %951
      %953 = vrot.lane.b32.xlu0 %v666, 73
      %v954 = vpop.permute.xlu0 %953
      %955 = vrot.lane.b32.xlu0 %v854, 73
      %v956 = vpop.permute.xlu0 %955
      %957 = vrot.lane.b32.xlu0 %v856, 73
      %v958 = vpop.permute.xlu0 %957
      %959 = vrot.lane.b32.xlu0 %v860, 73
      %v960 = vpop.permute.xlu0 %959
      %961 = vrot.lane.b32.xlu0 %v862, 73
      %v962 = vpop.permute.xlu0 %961
      %963 = vrot.lane.b32.xlu0 %v866, 73
      %v964 = vpop.permute.xlu0 %963
      %965 = vrot.lane.b32.xlu0 %v868, 73
      %v966 = vpop.permute.xlu0 %965
      %967 = vrot.lane.b32.xlu0 %v872, 73
      %v968 = vpop.permute.xlu0 %967
      %969 = vrot.lane.b32.xlu0 %v874, 73
      %v970 = vpop.permute.xlu0 %969
      %971 = vrot.lane.b32.xlu0 %v878, 73
      %v972 = vpop.permute.xlu0 %971
      %973 = vrot.lane.b32.xlu0 %v880, 73
      %v974 = vpop.permute.xlu0 %973
      %975 = vrot.lane.b32.xlu0 %v884, 73
      %v976 = vpop.permute.xlu0 %975
      %977 = vrot.lane.b32.xlu0 %v886, 73
      %v978 = vpop.permute.xlu0 %977
      %979 = vrot.lane.b32.xlu0 %v890, 73
      %v980 = vpop.permute.xlu0 %979
      %981 = vrot.lane.b32.xlu0 %v892, 73
      %v982 = vpop.permute.xlu0 %981
      %983 = vrot.lane.b32.xlu0 %v896, 73
      %v984 = vpop.permute.xlu0 %983
      %985 = vrot.lane.b32.xlu0 %v898, 73
      %v986 = vpop.permute.xlu0 %985
      %v1006 = vsel %vm479, %v941, 0
      %v1009 = vsel %vm479, %v944, 0
      %1011 = vmatprep.subr.bf16.mxu0 0
      %1012 = vmatpush1.bf16.msra.mxu0 %v952
      %1013 = vmatprep.subr.bf16.mxu0 0
      %1014 = vmatpush1.bf16.msra.mxu0 %v954
      %1015 = vmatprep.subr.bf16.mxu0 0
      %1016 = vmatpush1.bf16.msra.mxu0 %v956
      %1017 = vmatprep.subr.bf16.mxu0 0
      %1018 = vmatpush1.bf16.msra.mxu0 %v958
      %1019 = vmatprep.subr.bf16.mxu0 0
      %1020 = vmatpush1.bf16.msra.mxu0 %v960
      %1021 = vmatprep.subr.bf16.mxu0 0
      %1022 = vmatpush1.bf16.msra.mxu0 %v962
      %1023 = vmatprep.subr.bf16.mxu0 0
      %1024 = vmatpush1.bf16.msra.mxu0 %v964
      %1025 = vmatprep.subr.bf16.mxu0 0
      %1026 = vmatpush1.bf16.msra.mxu0 %v966
      %1027 = vmatprep.subr.bf16.mxu0 0
      %1028 = vmatpush1.bf16.msra.mxu0 %v968
      %1029 = vmatprep.subr.bf16.mxu0 0
      %1030 = vmatpush1.bf16.msra.mxu0 %v970
      %1031 = vmatprep.subr.bf16.mxu0 0
      %1032 = vmatpush1.bf16.msra.mxu0 %v972
      %1033 = vmatprep.subr.bf16.mxu0 0
      %1034 = vmatpush1.bf16.msra.mxu0 %v974
      %1035 = vmatprep.subr.bf16.mxu0 0
      %1036 = vmatpush1.bf16.msra.mxu0 %v976
      %1037 = vmatprep.subr.bf16.mxu0 0
      %1038 = vmatpush1.bf16.msra.mxu0 %v978
      %1039 = vmatprep.subr.bf16.mxu0 0
      %1040 = vmatpush1.bf16.msra.mxu0 %v980
      %1041 = vmatprep.subr.bf16.mxu0 0
      %1042 = vmatpush1.bf16.msra.mxu0 %v982
      %1043 = vmatprep.mubr.bf16.mxu0 %v940
      %1044 = vmatmul.mubr.bf16.gmra.mrb[0].mxu0 %v939
      %v1045 = vpop.f32.mrb[0].mxu0
      %v1046 = vadd.f32 %v902, %v1045
      %v1047 = vpop.f32.mrb[0].mxu0
      %v1048 = vpop.f32.mrb[0].mxu0
      %v1049 = vadd.f32 %v907, %v1048
      %v1050 = vpop.f32.mrb[0].mxu0
      %1051 = vmatprep.mubr.bf16.mxu0 %v943
      %1052 = vmatmul.mubr.bf16.gmra.mrb[0].mxu0 %v942
      %v1053 = vpop.f32.mrb[0].mxu0
      %v1054 = vadd.f32 %v912, %v1053
      %v1055 = vpop.f32.mrb[0].mxu0
      %v1056 = vpop.f32.mrb[0].mxu0
      %v1057 = vadd.f32 %v917, %v1056
      %v1058 = vpop.f32.mrb[0].mxu0
      %1059 = vdwg.mxu0
      %1060 = vmatprep.subr.bf16.mxu0 0
      %1061 = vmatpush1.bf16.msra.mxu0 %v984
      %1062 = vmatprep.subr.bf16.mxu0 0
      %1063 = vmatpush1.bf16.msra.mxu0 %v986
      %1064 = vmatprep.subr.bf16.mxu0 0
      %1065 = vmatpush1.bf16.msra.mxu0 0
      %1066 = vmatprep.subr.bf16.mxu0 0
      %1067 = vmatpush1.bf16.msra.mxu0 0
      %1068 = vmatprep.subr.bf16.mxu0 0
      %1069 = vmatpush1.bf16.msra.mxu0 0
      %1070 = vmatprep.subr.bf16.mxu0 0
      %1071 = vmatpush1.bf16.msra.mxu0 0
      %1072 = vmatprep.subr.bf16.mxu0 0
      %1073 = vmatpush1.bf16.msra.mxu0 0
      %1074 = vmatprep.subr.bf16.mxu0 0
      %1075 = vmatpush1.bf16.msra.mxu0 0
      %1076 = vmatprep.subr.bf16.mxu0 0
      %1077 = vmatpush1.bf16.msra.mxu0 0
      %1078 = vmatprep.subr.bf16.mxu0 0
      %1079 = vmatpush1.bf16.msra.mxu0 0
      %1080 = vmatprep.subr.bf16.mxu0 0
      %1081 = vmatpush1.bf16.msra.mxu0 0
      %1082 = vmatprep.subr.bf16.mxu0 0
      %1083 = vmatpush1.bf16.msra.mxu0 0
      %1084 = vmatprep.subr.bf16.mxu0 0
      %1085 = vmatpush1.bf16.msra.mxu0 0
      %1086 = vmatprep.subr.bf16.mxu0 0
      %1087 = vmatpush1.bf16.msra.mxu0 0
      %1088 = vmatprep.subr.bf16.mxu0 0
      %1089 = vmatpush1.bf16.msra.mxu0 0
      %1090 = vmatprep.subr.bf16.mxu0 0
      %1091 = vmatpush1.bf16.msra.mxu0 0
      %1092 = vmatprep.mubr.bf16.mxu0 0
      %1093 = vmatmul.mubr.bf16.gmra.mrb[0].mxu0 %v1006
      %v1094 = vpop.f32.mrb[0].mxu0
      %v1095 = vadd.f32 %v1046, %v1094
      %v1096 = vpop.f32.mrb[0].mxu0
      %v1097 = vpop.f32.mrb[0].mxu0
      %v1098 = vadd.f32 %v1049, %v1097
      %v1099 = vpop.f32.mrb[0].mxu0
      %1100 = vmatprep.mubr.bf16.mxu0 0
      %1101 = vmatmul.mubr.bf16.gmra.mrb[0].mxu0 %v1009
      %v1102 = vpop.f32.mrb[0].mxu0
      %v1103 = vadd.f32 %v1054, %v1102
      %v1104 = vpop.f32.mrb[0].mxu0
      %v1105 = vpop.f32.mrb[0].mxu0
      %v1106 = vadd.f32 %v1057, %v1105
      %v1107 = vpop.f32.mrb[0].mxu0
      %1108 = vdwg.mxu0
      %v1109 = vmax.f32 %v1095, 0.0
      %v1110 = vmax.f32 %v1098, 0.0
      %v1111 = vmax.f32 %v1103, 0.0
      %v1112 = vmax.f32 %v1106, 0.0
      %s1113 = smul.addr %s600, 4
      %s1114 = scalar_lea.vmem %s6, %s1113
      %v1115 = vld [vmem:[%s1114] sm:$0xff]
      %v1116 = vld [vmem:[%s1114 + $0x8] sm:$0xf]
      %v1117 = vld [vmem:[%s1114 + $0xc] sm:$0xff]
      %v1118 = vld [vmem:[%s1114 + $0x14] sm:$0xf]
      %v1119 = vld [vmem:[%s1114 + $0x18] sm:$0xff]
      %v1120 = vld [vmem:[%s1114 + $0x20] sm:$0xf]
      %v1121 = vld [vmem:[%s1114 + $0x24] sm:$0xff]
      %v1122 = vld [vmem:[%s1114 + $0x2c] sm:$0xf]
      %s1123 = scalar_lea.vmem %s7, %s611
      %v1124 = vld [vmem:[%s1123] sm:$0xff]
      %v1125 = vld [vmem:[%s1123 + $0x8] sm:$0xff]
      %v1126 = vld [vmem:[%s1123 + $0x10] sm:$0xff]
      %v1127 = vld [vmem:[%s1123 + $0x18] sm:$0xff]
      %1128 = vrot.lane.b32.xlu0 %v1109, 64
      %v1129 = vpop.permute.xlu0 %1128
      %v1130 = vsel %vm83, %v1129, %v1109
      %1131 = vrot.lane.b32.xlu0 %v1110, 64
      %v1132 = vpop.permute.xlu0 %1131
      %v1133 = vsel %vm83, %v1132, %v1110
      %1134 = vrot.lane.b32.xlu0 %v1111, 64
      %v1135 = vpop.permute.xlu0 %1134
      %v1136 = vsel %vm83, %v1135, %v1111
      %1137 = vrot.lane.b32.xlu0 %v1112, 64
      %v1138 = vpop.permute.xlu0 %1137
      %v1139 = vsel %vm83, %v1138, %v1112
      %1140 = vrot.lane.b32.xlu0 %v1130, 64
      %v1141 = vpop.permute.xlu0 %1140
      %1142 = vrot.lane.b32.xlu0 %v1133, 64
      %v1143 = vpop.permute.xlu0 %1142
      %1144 = vrot.lane.b32.xlu0 %v1136, 64
      %v1145 = vpop.permute.xlu0 %1144
      %1146 = vrot.lane.b32.xlu0 %v1139, 64
      %v1147 = vpop.permute.xlu0 %1146
      %v1148 = vsel %vm83, %v1141, %v1109
      %v1149 = vsel %vm83, %v1143, %v1110
      %v1150 = vsel %vm83, %v1145, %v1111
      %v1151 = vsel %vm83, %v1147, %v1112
      %v1152 = vmul.f32 %v1148, %v650
      %v1153 = vmul.f32 %v1149, %v652
      %v1154 = vmul.f32 %v1150, %v654
      %v1155 = vmul.f32 %v1151, %v656
      %v1156 = vpack.c.bf16 %v1153, %v1152
      %v1157 = vpack.c.bf16 %v1155, %v1154
      %v1158 = vmul.f32 %v1148, %v676
      %v1159 = vmul.f32 %v1149, %v678
      %v1160 = vmul.f32 %v1150, %v680
      %v1161 = vmul.f32 %v1151, %v682
      %v1162 = vpack.c.bf16 %v1159, %v1158
      %v1163 = vpack.c.bf16 %v1161, %v1160
      %v1164 = vmul.f32 %v1148, %v702
      %v1165 = vmul.f32 %v1149, %v704
      %v1166 = vmul.f32 %v1150, %v706
      %v1167 = vmul.f32 %v1151, %v708
      %v1168 = vpack.c.bf16 %v1165, %v1164
      %v1169 = vpack.c.bf16 %v1167, %v1166
      %v1170 = vmul.f32 %v1148, %v728
      %v1171 = vmul.f32 %v1149, %v730
      %v1172 = vmul.f32 %v1150, %v732
      %v1173 = vmul.f32 %v1151, %v734
      %v1174 = vpack.c.bf16 %v1171, %v1170
      %v1175 = vpack.c.bf16 %v1173, %v1172
      %v1176 = vpack.c.bf16 %v1110, %v1109
      %v1177 = vpack.c.bf16 %v1112, %v1111
      %v1178 = vmul.f32 %v1148, %v756
      %v1179 = vmul.f32 %v1149, %v758
      %v1180 = vmul.f32 %v1150, %v760
      %v1181 = vmul.f32 %v1151, %v762
      %v1182 = vpack.c.bf16 %v1179, %v1178
      %v1183 = vpack.c.bf16 %v1181, %v1180
      %v1184 = vmul.f32 %v1148, %v782
      %v1185 = vmul.f32 %v1149, %v784
      %v1186 = vmul.f32 %v1150, %v786
      %v1187 = vmul.f32 %v1151, %v788
      %v1188 = vpack.c.bf16 %v1185, %v1184
      %v1189 = vpack.c.bf16 %v1187, %v1186
      %v1190 = vmul.f32 %v1148, %v808
      %v1191 = vmul.f32 %v1149, %v810
      %v1192 = vmul.f32 %v1150, %v812
      %v1193 = vmul.f32 %v1151, %v814
      %v1194 = vpack.c.bf16 %v1191, %v1190
      %v1195 = vpack.c.bf16 %v1193, %v1192
      %v1196 = vmul.f32 %v1148, %v834
      %v1197 = vmul.f32 %v1149, %v836
      %v1198 = vmul.f32 %v1150, %v838
      %v1199 = vmul.f32 %v1151, %v840
      %v1200 = vpack.c.bf16 %v1197, %v1196
      %v1201 = vpack.c.bf16 %v1199, %v1198
      %1204 = vrot.lane.b32.xlu0 %v1162, 127
      %v1205 = vpop.permute.xlu0 %1204
      %1206 = vrot.lane.b32.xlu0 %v1163, 127
      %v1207 = vpop.permute.xlu0 %1206
      %1210 = vrot.lane.b32.xlu0 %v1168, 126
      %v1211 = vpop.permute.xlu0 %1210
      %1212 = vrot.lane.b32.xlu0 %v1169, 126
      %v1213 = vpop.permute.xlu0 %1212
      %1216 = vrot.lane.b32.xlu0 %v1174, 120
      %v1217 = vpop.permute.xlu0 %1216
      %1218 = vrot.lane.b32.xlu0 %v1175, 120
      %v1219 = vpop.permute.xlu0 %1218
      %1222 = vrot.lane.b32.xlu0 %v1176, 55
      %v1223 = vpop.permute.xlu0 %1222
      %1224 = vrot.lane.b32.xlu0 %v1177, 55
      %v1225 = vpop.permute.xlu0 %1224
      %1228 = vrot.lane.b32.xlu0 %v1182, 54
      %v1229 = vpop.permute.xlu0 %1228
      %1230 = vrot.lane.b32.xlu0 %v1183, 54
      %v1231 = vpop.permute.xlu0 %1230
      %1234 = vrot.lane.b32.xlu0 %v1188, 48
      %v1235 = vpop.permute.xlu0 %1234
      %1236 = vrot.lane.b32.xlu0 %v1189, 48
      %v1237 = vpop.permute.xlu0 %1236
      %1240 = vrot.lane.b32.xlu0 %v1194, 47
      %v1241 = vpop.permute.xlu0 %1240
      %1242 = vrot.lane.b32.xlu0 %v1195, 47
      %v1243 = vpop.permute.xlu0 %1242
      %1246 = vrot.lane.b32.xlu0 %v1200, 46
      %v1247 = vpop.permute.xlu0 %1246
      %1248 = vrot.lane.b32.xlu0 %v1201, 46
      %v1249 = vpop.permute.xlu0 %1248
      %1251 = vset.pattern.permute.xlu0 0
      %1252 = vperm.xlu0 %1251, %v1124
      %v1253 = vpop.permute.xlu0 %1252
      %1256 = vset.pattern.permute.xlu0 0
      %1257 = vperm.xlu0 %1256, %v1125
      %v1258 = vpop.permute.xlu0 %1257
      %1261 = vset.pattern.permute.xlu0 0
      %1262 = vperm.xlu0 %1261, %v1126
      %v1263 = vpop.permute.xlu0 %1262
      %1266 = vset.pattern.permute.xlu0 0
      %1267 = vperm.xlu0 %1266, %v1127
      %v1268 = vpop.permute.xlu0 %1267
      %v1278 = vunpack.c.l.b16 %v1115
      %v1279 = vunpack.c.h.b16 %v1115
      %v1280 = vunpack.c.l.b16 %v1116
      %v1281 = vunpack.c.l.b16 %v1117
      %v1282 = vunpack.c.h.b16 %v1117
      %v1283 = vunpack.c.l.b16 %v1118
      %v1284 = vunpack.c.l.b16 %v1119
      %v1285 = vunpack.c.h.b16 %v1119
      %v1286 = vunpack.c.l.b16 %v1120
      %v1287 = vunpack.c.l.b16 %v1121
      %v1288 = vunpack.c.h.b16 %v1121
      %v1289 = vunpack.c.l.b16 %v1122
      %v1290 = vpack.c.b16 %v1281, %v1278
      %v1291 = vpack.c.b16 %v1282, %v1279
      %v1292 = vpack.c.b16 %v1283, %v1280
      %v1293 = vpack.c.b16 %v1287, %v1284
      %v1294 = vpack.c.b16 %v1288, %v1285
      %v1295 = vpack.c.b16 %v1289, %v1286
      %1302 = vrot.lane.b32.xlu0 %v1156, 73
      %v1303 = vpop.permute.xlu0 %1302
      %1304 = vrot.lane.b32.xlu0 %v1157, 73
      %v1305 = vpop.permute.xlu0 %1304
      %1306 = vrot.lane.b32.xlu0 %v1205, 73
      %v1307 = vpop.permute.xlu0 %1306
      %1308 = vrot.lane.b32.xlu0 %v1207, 73
      %v1309 = vpop.permute.xlu0 %1308
      %1310 = vrot.lane.b32.xlu0 %v1211, 73
      %v1311 = vpop.permute.xlu0 %1310
      %1312 = vrot.lane.b32.xlu0 %v1213, 73
      %v1313 = vpop.permute.xlu0 %1312
      %1314 = vrot.lane.b32.xlu0 %v1217, 73
      %v1315 = vpop.permute.xlu0 %1314
      %1316 = vrot.lane.b32.xlu0 %v1219, 73
      %v1317 = vpop.permute.xlu0 %1316
      %1318 = vrot.lane.b32.xlu0 %v1223, 73
      %v1319 = vpop.permute.xlu0 %1318
      %1320 = vrot.lane.b32.xlu0 %v1225, 73
      %v1321 = vpop.permute.xlu0 %1320
      %1322 = vrot.lane.b32.xlu0 %v1229, 73
      %v1323 = vpop.permute.xlu0 %1322
      %1324 = vrot.lane.b32.xlu0 %v1231, 73
      %v1325 = vpop.permute.xlu0 %1324
      %1326 = vrot.lane.b32.xlu0 %v1235, 73
      %v1327 = vpop.permute.xlu0 %1326
      %1328 = vrot.lane.b32.xlu0 %v1237, 73
      %v1329 = vpop.permute.xlu0 %1328
      %1330 = vrot.lane.b32.xlu0 %v1241, 73
      %v1331 = vpop.permute.xlu0 %1330
      %1332 = vrot.lane.b32.xlu0 %v1243, 73
      %v1333 = vpop.permute.xlu0 %1332
      %1334 = vrot.lane.b32.xlu0 %v1247, 73
      %v1335 = vpop.permute.xlu0 %1334
      %1336 = vrot.lane.b32.xlu0 %v1249, 73
      %v1337 = vpop.permute.xlu0 %1336
      %v1357 = vsel %vm479, %v1292, 0
      %v1360 = vsel %vm479, %v1295, 0
      %1362 = vmatprep.subr.bf16.mxu0 0
      %1363 = vmatpush1.bf16.msra.mxu0 %v1303
      %1364 = vmatprep.subr.bf16.mxu0 0
      %1365 = vmatpush1.bf16.msra.mxu0 %v1305
      %1366 = vmatprep.subr.bf16.mxu0 0
      %1367 = vmatpush1.bf16.msra.mxu0 %v1307
      %1368 = vmatprep.subr.bf16.mxu0 0
      %1369 = vmatpush1.bf16.msra.mxu0 %v1309
      %1370 = vmatprep.subr.bf16.mxu0 0
      %1371 = vmatpush1.bf16.msra.mxu0 %v1311
      %1372 = vmatprep.subr.bf16.mxu0 0
      %1373 = vmatpush1.bf16.msra.mxu0 %v1313
      %1374 = vmatprep.subr.bf16.mxu0 0
      %1375 = vmatpush1.bf16.msra.mxu0 %v1315
      %1376 = vmatprep.subr.bf16.mxu0 0
      %1377 = vmatpush1.bf16.msra.mxu0 %v1317
      %1378 = vmatprep.subr.bf16.mxu0 0
      %1379 = vmatpush1.bf16.msra.mxu0 %v1319
      %1380 = vmatprep.subr.bf16.mxu0 0
      %1381 = vmatpush1.bf16.msra.mxu0 %v1321
      %1382 = vmatprep.subr.bf16.mxu0 0
      %1383 = vmatpush1.bf16.msra.mxu0 %v1323
      %1384 = vmatprep.subr.bf16.mxu0 0
      %1385 = vmatpush1.bf16.msra.mxu0 %v1325
      %1386 = vmatprep.subr.bf16.mxu0 0
      %1387 = vmatpush1.bf16.msra.mxu0 %v1327
      %1388 = vmatprep.subr.bf16.mxu0 0
      %1389 = vmatpush1.bf16.msra.mxu0 %v1329
      %1390 = vmatprep.subr.bf16.mxu0 0
      %1391 = vmatpush1.bf16.msra.mxu0 %v1331
      %1392 = vmatprep.subr.bf16.mxu0 0
      %1393 = vmatpush1.bf16.msra.mxu0 %v1333
      %1394 = vmatprep.mubr.bf16.mxu0 %v1291
      %1395 = vmatmul.mubr.bf16.gmra.mrb[0].mxu0 %v1290
      %v1396 = vpop.f32.mrb[0].mxu0
      %v1397 = vadd.f32 %v1253, %v1396
      %v1398 = vpop.f32.mrb[0].mxu0
      %v1399 = vpop.f32.mrb[0].mxu0
      %v1400 = vadd.f32 %v1258, %v1399
      %v1401 = vpop.f32.mrb[0].mxu0
      %1402 = vmatprep.mubr.bf16.mxu0 %v1294
      %1403 = vmatmul.mubr.bf16.gmra.mrb[0].mxu0 %v1293
      %v1404 = vpop.f32.mrb[0].mxu0
      %v1405 = vadd.f32 %v1263, %v1404
      %v1406 = vpop.f32.mrb[0].mxu0
      %v1407 = vpop.f32.mrb[0].mxu0
      %v1408 = vadd.f32 %v1268, %v1407
      %v1409 = vpop.f32.mrb[0].mxu0
      %1410 = vdwg.mxu0
      %1411 = vmatprep.subr.bf16.mxu0 0
      %1412 = vmatpush1.bf16.msra.mxu0 %v1335
      %1413 = vmatprep.subr.bf16.mxu0 0
      %1414 = vmatpush1.bf16.msra.mxu0 %v1337
      %1415 = vmatprep.subr.bf16.mxu0 0
      %1416 = vmatpush1.bf16.msra.mxu0 0
      %1417 = vmatprep.subr.bf16.mxu0 0
      %1418 = vmatpush1.bf16.msra.mxu0 0
      %1419 = vmatprep.subr.bf16.mxu0 0
      %1420 = vmatpush1.bf16.msra.mxu0 0
      %1421 = vmatprep.subr.bf16.mxu0 0
      %1422 = vmatpush1.bf16.msra.mxu0 0
      %1423 = vmatprep.subr.bf16.mxu0 0
      %1424 = vmatpush1.bf16.msra.mxu0 0
      %1425 = vmatprep.subr.bf16.mxu0 0
      %1426 = vmatpush1.bf16.msra.mxu0 0
      %1427 = vmatprep.subr.bf16.mxu0 0
      %1428 = vmatpush1.bf16.msra.mxu0 0
      %1429 = vmatprep.subr.bf16.mxu0 0
      %1430 = vmatpush1.bf16.msra.mxu0 0
      %1431 = vmatprep.subr.bf16.mxu0 0
      %1432 = vmatpush1.bf16.msra.mxu0 0
      %1433 = vmatprep.subr.bf16.mxu0 0
      %1434 = vmatpush1.bf16.msra.mxu0 0
      %1435 = vmatprep.subr.bf16.mxu0 0
      %1436 = vmatpush1.bf16.msra.mxu0 0
      %1437 = vmatprep.subr.bf16.mxu0 0
      %1438 = vmatpush1.bf16.msra.mxu0 0
      %1439 = vmatprep.subr.bf16.mxu0 0
      %1440 = vmatpush1.bf16.msra.mxu0 0
      %1441 = vmatprep.subr.bf16.mxu0 0
      %1442 = vmatpush1.bf16.msra.mxu0 0
      %1443 = vmatprep.mubr.bf16.mxu0 0
      %1444 = vmatmul.mubr.bf16.gmra.mrb[0].mxu0 %v1357
      %v1445 = vpop.f32.mrb[0].mxu0
      %v1446 = vadd.f32 %v1397, %v1445
      %v1447 = vpop.f32.mrb[0].mxu0
      %v1448 = vpop.f32.mrb[0].mxu0
      %v1449 = vadd.f32 %v1400, %v1448
      %v1450 = vpop.f32.mrb[0].mxu0
      %1451 = vmatprep.mubr.bf16.mxu0 0
      %1452 = vmatmul.mubr.bf16.gmra.mrb[0].mxu0 %v1360
      %v1453 = vpop.f32.mrb[0].mxu0
      %v1454 = vadd.f32 %v1405, %v1453
      %v1455 = vpop.f32.mrb[0].mxu0
      %v1456 = vpop.f32.mrb[0].mxu0
      %v1457 = vadd.f32 %v1408, %v1456
      %v1458 = vpop.f32.mrb[0].mxu0
      %1459 = vdwg.mxu0
      %v1460 = vadd.f32 %v1446, %v594
      %v1461 = vadd.f32 %v1449, %v595
      %v1462 = vadd.f32 %v1454, %v596
      %v1463 = vadd.f32 %v1457, %v597
      %v1464 = vmax.f32 %v1460, 0.0
      %v1465 = vmax.f32 %v1461, 0.0
      %v1466 = vmax.f32 %v1462, 0.0
      %v1467 = vmax.f32 %v1463, 0.0
      %s1468 = smul.u32 %s599, 12
      %s1469 = smul.addr %s1468, 4
      %s1470 = scalar_lea.vmem %s4, %s1469
      %v1471 = vld [vmem:[%s1470] sm:$0xff]
      %v1472 = vld [vmem:[%s1470 + $0x8] sm:$0xf]
      %v1473 = vld [vmem:[%s1470 + $0xc] sm:$0xff]
      %v1474 = vld [vmem:[%s1470 + $0x14] sm:$0xf]
      %v1475 = vld [vmem:[%s1470 + $0x18] sm:$0xff]
      %v1476 = vld [vmem:[%s1470 + $0x20] sm:$0xf]
      %v1477 = vld [vmem:[%s1470 + $0x24] sm:$0xff]
      %v1478 = vld [vmem:[%s1470 + $0x2c] sm:$0xf]
      %s1479 = smul.u32 %s599, 32
      %s1480 = scalar_lea.vmem %s5, %s1479
      %v1481 = vld [vmem:[%s1480] sm:$0xff]
      %v1482 = vld [vmem:[%s1480 + $0x8] sm:$0xff]
      %v1483 = vld [vmem:[%s1480 + $0x10] sm:$0xff]
      %v1484 = vld [vmem:[%s1480 + $0x18] sm:$0xff]
      %1485 = vrot.lane.b32.xlu0 %v1464, 64
      %v1486 = vpop.permute.xlu0 %1485
      %v1487 = vsel %vm83, %v1486, %v1464
      %1488 = vrot.lane.b32.xlu0 %v1465, 64
      %v1489 = vpop.permute.xlu0 %1488
      %v1490 = vsel %vm83, %v1489, %v1465
      %1491 = vrot.lane.b32.xlu0 %v1466, 64
      %v1492 = vpop.permute.xlu0 %1491
      %v1493 = vsel %vm83, %v1492, %v1466
      %1494 = vrot.lane.b32.xlu0 %v1467, 64
      %v1495 = vpop.permute.xlu0 %1494
      %v1496 = vsel %vm83, %v1495, %v1467
      %1497 = vrot.lane.b32.xlu0 %v1487, 64
      %v1498 = vpop.permute.xlu0 %1497
      %1499 = vrot.lane.b32.xlu0 %v1490, 64
      %v1500 = vpop.permute.xlu0 %1499
      %1501 = vrot.lane.b32.xlu0 %v1493, 64
      %v1502 = vpop.permute.xlu0 %1501
      %1503 = vrot.lane.b32.xlu0 %v1496, 64
      %v1504 = vpop.permute.xlu0 %1503
      %v1505 = vsel %vm83, %v1498, %v1464
      %v1506 = vsel %vm83, %v1500, %v1465
      %v1507 = vsel %vm83, %v1502, %v1466
      %v1508 = vsel %vm83, %v1504, %v1467
      %v1509 = vmul.f32 %v1505, %v650
      %v1510 = vmul.f32 %v1506, %v652
      %v1511 = vmul.f32 %v1507, %v654
      %v1512 = vmul.f32 %v1508, %v656
      %v1513 = vpack.c.bf16 %v1510, %v1509
      %v1514 = vpack.c.bf16 %v1512, %v1511
      %v1515 = vmul.f32 %v1505, %v676
      %v1516 = vmul.f32 %v1506, %v678
      %v1517 = vmul.f32 %v1507, %v680
      %v1518 = vmul.f32 %v1508, %v682
      %v1519 = vpack.c.bf16 %v1516, %v1515
      %v1520 = vpack.c.bf16 %v1518, %v1517
      %v1521 = vmul.f32 %v1505, %v702
      %v1522 = vmul.f32 %v1506, %v704
      %v1523 = vmul.f32 %v1507, %v706
      %v1524 = vmul.f32 %v1508, %v708
      %v1525 = vpack.c.bf16 %v1522, %v1521
      %v1526 = vpack.c.bf16 %v1524, %v1523
      %v1527 = vmul.f32 %v1505, %v728
      %v1528 = vmul.f32 %v1506, %v730
      %v1529 = vmul.f32 %v1507, %v732
      %v1530 = vmul.f32 %v1508, %v734
      %v1531 = vpack.c.bf16 %v1528, %v1527
      %v1532 = vpack.c.bf16 %v1530, %v1529
      %v1533 = vpack.c.bf16 %v1465, %v1464
      %v1534 = vpack.c.bf16 %v1467, %v1466
      %v1535 = vmul.f32 %v1505, %v756
      %v1536 = vmul.f32 %v1506, %v758
      %v1537 = vmul.f32 %v1507, %v760
      %v1538 = vmul.f32 %v1508, %v762
      %v1539 = vpack.c.bf16 %v1536, %v1535
      %v1540 = vpack.c.bf16 %v1538, %v1537
      %v1541 = vmul.f32 %v1505, %v782
      %v1542 = vmul.f32 %v1506, %v784
      %v1543 = vmul.f32 %v1507, %v786
      %v1544 = vmul.f32 %v1508, %v788
      %v1545 = vpack.c.bf16 %v1542, %v1541
      %v1546 = vpack.c.bf16 %v1544, %v1543
      %v1547 = vmul.f32 %v1505, %v808
      %v1548 = vmul.f32 %v1506, %v810
      %v1549 = vmul.f32 %v1507, %v812
      %v1550 = vmul.f32 %v1508, %v814
      %v1551 = vpack.c.bf16 %v1548, %v1547
      %v1552 = vpack.c.bf16 %v1550, %v1549
      %v1553 = vmul.f32 %v1505, %v834
      %v1554 = vmul.f32 %v1506, %v836
      %v1555 = vmul.f32 %v1507, %v838
      %v1556 = vmul.f32 %v1508, %v840
      %v1557 = vpack.c.bf16 %v1554, %v1553
      %v1558 = vpack.c.bf16 %v1556, %v1555
      %1561 = vrot.lane.b32.xlu0 %v1519, 127
      %v1562 = vpop.permute.xlu0 %1561
      %1563 = vrot.lane.b32.xlu0 %v1520, 127
      %v1564 = vpop.permute.xlu0 %1563
      %1567 = vrot.lane.b32.xlu0 %v1525, 126
      %v1568 = vpop.permute.xlu0 %1567
      %1569 = vrot.lane.b32.xlu0 %v1526, 126
      %v1570 = vpop.permute.xlu0 %1569
      %1573 = vrot.lane.b32.xlu0 %v1531, 120
      %v1574 = vpop.permute.xlu0 %1573
      %1575 = vrot.lane.b32.xlu0 %v1532, 120
      %v1576 = vpop.permute.xlu0 %1575
      %1579 = vrot.lane.b32.xlu0 %v1533, 55
      %v1580 = vpop.permute.xlu0 %1579
      %1581 = vrot.lane.b32.xlu0 %v1534, 55
      %v1582 = vpop.permute.xlu0 %1581
      %1585 = vrot.lane.b32.xlu0 %v1539, 54
      %v1586 = vpop.permute.xlu0 %1585
      %1587 = vrot.lane.b32.xlu0 %v1540, 54
      %v1588 = vpop.permute.xlu0 %1587
      %1591 = vrot.lane.b32.xlu0 %v1545, 48
      %v1592 = vpop.permute.xlu0 %1591
      %1593 = vrot.lane.b32.xlu0 %v1546, 48
      %v1594 = vpop.permute.xlu0 %1593
      %1597 = vrot.lane.b32.xlu0 %v1551, 47
      %v1598 = vpop.permute.xlu0 %1597
      %1599 = vrot.lane.b32.xlu0 %v1552, 47
      %v1600 = vpop.permute.xlu0 %1599
      %1603 = vrot.lane.b32.xlu0 %v1557, 46
      %v1604 = vpop.permute.xlu0 %1603
      %1605 = vrot.lane.b32.xlu0 %v1558, 46
      %v1606 = vpop.permute.xlu0 %1605
      %1608 = vset.pattern.permute.xlu0 0
      %1609 = vperm.xlu0 %1608, %v1481
      %v1610 = vpop.permute.xlu0 %1609
      %1613 = vset.pattern.permute.xlu0 0
      %1614 = vperm.xlu0 %1613, %v1482
      %v1615 = vpop.permute.xlu0 %1614
      %1618 = vset.pattern.permute.xlu0 0
      %1619 = vperm.xlu0 %1618, %v1483
      %v1620 = vpop.permute.xlu0 %1619
      %1623 = vset.pattern.permute.xlu0 0
      %1624 = vperm.xlu0 %1623, %v1484
      %v1625 = vpop.permute.xlu0 %1624
      %v1635 = vunpack.c.l.b16 %v1471
      %v1636 = vunpack.c.h.b16 %v1471
      %v1637 = vunpack.c.l.b16 %v1472
      %v1638 = vunpack.c.l.b16 %v1473
      %v1639 = vunpack.c.h.b16 %v1473
      %v1640 = vunpack.c.l.b16 %v1474
      %v1641 = vunpack.c.l.b16 %v1475
      %v1642 = vunpack.c.h.b16 %v1475
      %v1643 = vunpack.c.l.b16 %v1476
      %v1644 = vunpack.c.l.b16 %v1477
      %v1645 = vunpack.c.h.b16 %v1477
      %v1646 = vunpack.c.l.b16 %v1478
      %v1647 = vpack.c.b16 %v1638, %v1635
      %v1648 = vpack.c.b16 %v1639, %v1636
      %v1649 = vpack.c.b16 %v1640, %v1637
      %v1650 = vpack.c.b16 %v1644, %v1641
      %v1651 = vpack.c.b16 %v1645, %v1642
      %v1652 = vpack.c.b16 %v1646, %v1643
      %1659 = vrot.lane.b32.xlu0 %v1513, 73
      %v1660 = vpop.permute.xlu0 %1659
      %1661 = vrot.lane.b32.xlu0 %v1514, 73
      %v1662 = vpop.permute.xlu0 %1661
      %1663 = vrot.lane.b32.xlu0 %v1562, 73
      %v1664 = vpop.permute.xlu0 %1663
      %1665 = vrot.lane.b32.xlu0 %v1564, 73
      %v1666 = vpop.permute.xlu0 %1665
      %1667 = vrot.lane.b32.xlu0 %v1568, 73
      %v1668 = vpop.permute.xlu0 %1667
      %1669 = vrot.lane.b32.xlu0 %v1570, 73
      %v1670 = vpop.permute.xlu0 %1669
      %1671 = vrot.lane.b32.xlu0 %v1574, 73
      %v1672 = vpop.permute.xlu0 %1671
      %1673 = vrot.lane.b32.xlu0 %v1576, 73
      %v1674 = vpop.permute.xlu0 %1673
      %1675 = vrot.lane.b32.xlu0 %v1580, 73
      %v1676 = vpop.permute.xlu0 %1675
      %1677 = vrot.lane.b32.xlu0 %v1582, 73
      %v1678 = vpop.permute.xlu0 %1677
      %1679 = vrot.lane.b32.xlu0 %v1586, 73
      %v1680 = vpop.permute.xlu0 %1679
      %1681 = vrot.lane.b32.xlu0 %v1588, 73
      %v1682 = vpop.permute.xlu0 %1681
      %1683 = vrot.lane.b32.xlu0 %v1592, 73
      %v1684 = vpop.permute.xlu0 %1683
      %1685 = vrot.lane.b32.xlu0 %v1594, 73
      %v1686 = vpop.permute.xlu0 %1685
      %1687 = vrot.lane.b32.xlu0 %v1598, 73
      %v1688 = vpop.permute.xlu0 %1687
      %1689 = vrot.lane.b32.xlu0 %v1600, 73
      %v1690 = vpop.permute.xlu0 %1689
      %1691 = vrot.lane.b32.xlu0 %v1604, 73
      %v1692 = vpop.permute.xlu0 %1691
      %1693 = vrot.lane.b32.xlu0 %v1606, 73
      %v1694 = vpop.permute.xlu0 %1693
      %v1714 = vsel %vm479, %v1649, 0
      %v1717 = vsel %vm479, %v1652, 0
      %1719 = vmatprep.subr.bf16.mxu0 0
      %1720 = vmatpush1.bf16.msra.mxu0 %v1660
      %1721 = vmatprep.subr.bf16.mxu0 0
      %1722 = vmatpush1.bf16.msra.mxu0 %v1662
      %1723 = vmatprep.subr.bf16.mxu0 0
      %1724 = vmatpush1.bf16.msra.mxu0 %v1664
      %1725 = vmatprep.subr.bf16.mxu0 0
      %1726 = vmatpush1.bf16.msra.mxu0 %v1666
      %1727 = vmatprep.subr.bf16.mxu0 0
      %1728 = vmatpush1.bf16.msra.mxu0 %v1668
      %1729 = vmatprep.subr.bf16.mxu0 0
      %1730 = vmatpush1.bf16.msra.mxu0 %v1670
      %1731 = vmatprep.subr.bf16.mxu0 0
      %1732 = vmatpush1.bf16.msra.mxu0 %v1672
      %1733 = vmatprep.subr.bf16.mxu0 0
      %1734 = vmatpush1.bf16.msra.mxu0 %v1674
      %1735 = vmatprep.subr.bf16.mxu0 0
      %1736 = vmatpush1.bf16.msra.mxu0 %v1676
      %1737 = vmatprep.subr.bf16.mxu0 0
      %1738 = vmatpush1.bf16.msra.mxu0 %v1678
      %1739 = vmatprep.subr.bf16.mxu0 0
      %1740 = vmatpush1.bf16.msra.mxu0 %v1680
      %1741 = vmatprep.subr.bf16.mxu0 0
      %1742 = vmatpush1.bf16.msra.mxu0 %v1682
      %1743 = vmatprep.subr.bf16.mxu0 0
      %1744 = vmatpush1.bf16.msra.mxu0 %v1684
      %1745 = vmatprep.subr.bf16.mxu0 0
      %1746 = vmatpush1.bf16.msra.mxu0 %v1686
      %1747 = vmatprep.subr.bf16.mxu0 0
      %1748 = vmatpush1.bf16.msra.mxu0 %v1688
      %1749 = vmatprep.subr.bf16.mxu0 0
      %1750 = vmatpush1.bf16.msra.mxu0 %v1690
      %1751 = vmatprep.mubr.bf16.mxu0 %v1648
      %1752 = vmatmul.mubr.bf16.gmra.mrb[0].mxu0 %v1647
      %v1753 = vpop.f32.mrb[0].mxu0
      %v1754 = vadd.f32 %v1610, %v1753
      %v1755 = vpop.f32.mrb[0].mxu0
      %v1756 = vpop.f32.mrb[0].mxu0
      %v1757 = vadd.f32 %v1615, %v1756
      %v1758 = vpop.f32.mrb[0].mxu0
      %1759 = vmatprep.mubr.bf16.mxu0 %v1651
      %1760 = vmatmul.mubr.bf16.gmra.mrb[0].mxu0 %v1650
      %v1761 = vpop.f32.mrb[0].mxu0
      %v1762 = vadd.f32 %v1620, %v1761
      %v1763 = vpop.f32.mrb[0].mxu0
      %v1764 = vpop.f32.mrb[0].mxu0
      %v1765 = vadd.f32 %v1625, %v1764
      %v1766 = vpop.f32.mrb[0].mxu0
      %1767 = vdwg.mxu0
      %1768 = vmatprep.subr.bf16.mxu0 0
      %1769 = vmatpush1.bf16.msra.mxu0 %v1692
      %1770 = vmatprep.subr.bf16.mxu0 0
      %1771 = vmatpush1.bf16.msra.mxu0 %v1694
      %1772 = vmatprep.subr.bf16.mxu0 0
      %1773 = vmatpush1.bf16.msra.mxu0 0
      %1774 = vmatprep.subr.bf16.mxu0 0
      %1775 = vmatpush1.bf16.msra.mxu0 0
      %1776 = vmatprep.subr.bf16.mxu0 0
      %1777 = vmatpush1.bf16.msra.mxu0 0
      %1778 = vmatprep.subr.bf16.mxu0 0
      %1779 = vmatpush1.bf16.msra.mxu0 0
      %1780 = vmatprep.subr.bf16.mxu0 0
      %1781 = vmatpush1.bf16.msra.mxu0 0
      %1782 = vmatprep.subr.bf16.mxu0 0
      %1783 = vmatpush1.bf16.msra.mxu0 0
      %1784 = vmatprep.subr.bf16.mxu0 0
      %1785 = vmatpush1.bf16.msra.mxu0 0
      %1786 = vmatprep.subr.bf16.mxu0 0
      %1787 = vmatpush1.bf16.msra.mxu0 0
      %1788 = vmatprep.subr.bf16.mxu0 0
      %1789 = vmatpush1.bf16.msra.mxu0 0
      %1790 = vmatprep.subr.bf16.mxu0 0
      %1791 = vmatpush1.bf16.msra.mxu0 0
      %1792 = vmatprep.subr.bf16.mxu0 0
      %1793 = vmatpush1.bf16.msra.mxu0 0
      %1794 = vmatprep.subr.bf16.mxu0 0
      %1795 = vmatpush1.bf16.msra.mxu0 0
      %1796 = vmatprep.subr.bf16.mxu0 0
      %1797 = vmatpush1.bf16.msra.mxu0 0
      %1798 = vmatprep.subr.bf16.mxu0 0
      %1799 = vmatpush1.bf16.msra.mxu0 0
      %1800 = vmatprep.mubr.bf16.mxu0 0
      %1801 = vmatmul.mubr.bf16.gmra.mrb[0].mxu0 %v1714
      %v1802 = vpop.f32.mrb[0].mxu0
      %v1803 = vadd.f32 %v1754, %v1802
      %v1804 = vpop.f32.mrb[0].mxu0
      %v1805 = vpop.f32.mrb[0].mxu0
      %v1806 = vadd.f32 %v1757, %v1805
      %v1807 = vpop.f32.mrb[0].mxu0
      %1808 = vmatprep.mubr.bf16.mxu0 0
      %1809 = vmatmul.mubr.bf16.gmra.mrb[0].mxu0 %v1717
      %v1810 = vpop.f32.mrb[0].mxu0
      %v1811 = vadd.f32 %v1762, %v1810
      %v1812 = vpop.f32.mrb[0].mxu0
      %v1813 = vpop.f32.mrb[0].mxu0
      %v1814 = vadd.f32 %v1765, %v1813
      %v1815 = vpop.f32.mrb[0].mxu0
      %1816 = vdwg.mxu0
      %v1817 = vmax.f32 %v1803, 0.0
      %v1818 = vmax.f32 %v1806, 0.0
      %v1819 = vmax.f32 %v1811, 0.0
      %v1820 = vmax.f32 %v1814, 0.0
      %s1821 = smul.addr %s1468, 4
      %s1822 = scalar_lea.vmem %s6, %s1821
      %v1823 = vld [vmem:[%s1822] sm:$0xff]
      %v1824 = vld [vmem:[%s1822 + $0x8] sm:$0xf]
      %v1825 = vld [vmem:[%s1822 + $0xc] sm:$0xff]
      %v1826 = vld [vmem:[%s1822 + $0x14] sm:$0xf]
      %v1827 = vld [vmem:[%s1822 + $0x18] sm:$0xff]
      %v1828 = vld [vmem:[%s1822 + $0x20] sm:$0xf]
      %v1829 = vld [vmem:[%s1822 + $0x24] sm:$0xff]
      %v1830 = vld [vmem:[%s1822 + $0x2c] sm:$0xf]
      %s1831 = scalar_lea.vmem %s7, %s1479
      %v1832 = vld [vmem:[%s1831] sm:$0xff]
      %v1833 = vld [vmem:[%s1831 + $0x8] sm:$0xff]
      %v1834 = vld [vmem:[%s1831 + $0x10] sm:$0xff]
      %v1835 = vld [vmem:[%s1831 + $0x18] sm:$0xff]
      %1836 = vrot.lane.b32.xlu0 %v1817, 64
      %v1837 = vpop.permute.xlu0 %1836
      %v1838 = vsel %vm83, %v1837, %v1817
      %1839 = vrot.lane.b32.xlu0 %v1818, 64
      %v1840 = vpop.permute.xlu0 %1839
      %v1841 = vsel %vm83, %v1840, %v1818
      %1842 = vrot.lane.b32.xlu0 %v1819, 64
      %v1843 = vpop.permute.xlu0 %1842
      %v1844 = vsel %vm83, %v1843, %v1819
      %1845 = vrot.lane.b32.xlu0 %v1820, 64
      %v1846 = vpop.permute.xlu0 %1845
      %v1847 = vsel %vm83, %v1846, %v1820
      %1848 = vrot.lane.b32.xlu0 %v1838, 64
      %v1849 = vpop.permute.xlu0 %1848
      %1850 = vrot.lane.b32.xlu0 %v1841, 64
      %v1851 = vpop.permute.xlu0 %1850
      %1852 = vrot.lane.b32.xlu0 %v1844, 64
      %v1853 = vpop.permute.xlu0 %1852
      %1854 = vrot.lane.b32.xlu0 %v1847, 64
      %v1855 = vpop.permute.xlu0 %1854
      %v1856 = vsel %vm83, %v1849, %v1817
      %v1857 = vsel %vm83, %v1851, %v1818
      %v1858 = vsel %vm83, %v1853, %v1819
      %v1859 = vsel %vm83, %v1855, %v1820
      %v1860 = vmul.f32 %v1856, %v650
      %v1861 = vmul.f32 %v1857, %v652
      %v1862 = vmul.f32 %v1858, %v654
      %v1863 = vmul.f32 %v1859, %v656
      %v1864 = vpack.c.bf16 %v1861, %v1860
      %v1865 = vpack.c.bf16 %v1863, %v1862
      %v1866 = vmul.f32 %v1856, %v676
      %v1867 = vmul.f32 %v1857, %v678
      %v1868 = vmul.f32 %v1858, %v680
      %v1869 = vmul.f32 %v1859, %v682
      %v1870 = vpack.c.bf16 %v1867, %v1866
      %v1871 = vpack.c.bf16 %v1869, %v1868
      %v1872 = vmul.f32 %v1856, %v702
      %v1873 = vmul.f32 %v1857, %v704
      %v1874 = vmul.f32 %v1858, %v706
      %v1875 = vmul.f32 %v1859, %v708
      %v1876 = vpack.c.bf16 %v1873, %v1872
      %v1877 = vpack.c.bf16 %v1875, %v1874
      %v1878 = vmul.f32 %v1856, %v728
      %v1879 = vmul.f32 %v1857, %v730
      %v1880 = vmul.f32 %v1858, %v732
      %v1881 = vmul.f32 %v1859, %v734
      %v1882 = vpack.c.bf16 %v1879, %v1878
      %v1883 = vpack.c.bf16 %v1881, %v1880
      %v1884 = vpack.c.bf16 %v1818, %v1817
      %v1885 = vpack.c.bf16 %v1820, %v1819
      %v1886 = vmul.f32 %v1856, %v756
      %v1887 = vmul.f32 %v1857, %v758
      %v1888 = vmul.f32 %v1858, %v760
      %v1889 = vmul.f32 %v1859, %v762
      %v1890 = vpack.c.bf16 %v1887, %v1886
      %v1891 = vpack.c.bf16 %v1889, %v1888
      %v1892 = vmul.f32 %v1856, %v782
      %v1893 = vmul.f32 %v1857, %v784
      %v1894 = vmul.f32 %v1858, %v786
      %v1895 = vmul.f32 %v1859, %v788
      %v1896 = vpack.c.bf16 %v1893, %v1892
      %v1897 = vpack.c.bf16 %v1895, %v1894
      %v1898 = vmul.f32 %v1856, %v808
      %v1899 = vmul.f32 %v1857, %v810
      %v1900 = vmul.f32 %v1858, %v812
      %v1901 = vmul.f32 %v1859, %v814
      %v1902 = vpack.c.bf16 %v1899, %v1898
      %v1903 = vpack.c.bf16 %v1901, %v1900
      %v1904 = vmul.f32 %v1856, %v834
      %v1905 = vmul.f32 %v1857, %v836
      %v1906 = vmul.f32 %v1858, %v838
      %v1907 = vmul.f32 %v1859, %v840
      %v1908 = vpack.c.bf16 %v1905, %v1904
      %v1909 = vpack.c.bf16 %v1907, %v1906
      %1912 = vrot.lane.b32.xlu0 %v1870, 127
      %v1913 = vpop.permute.xlu0 %1912
      %1914 = vrot.lane.b32.xlu0 %v1871, 127
      %v1915 = vpop.permute.xlu0 %1914
      %1918 = vrot.lane.b32.xlu0 %v1876, 126
      %v1919 = vpop.permute.xlu0 %1918
      %1920 = vrot.lane.b32.xlu0 %v1877, 126
      %v1921 = vpop.permute.xlu0 %1920
      %1924 = vrot.lane.b32.xlu0 %v1882, 120
      %v1925 = vpop.permute.xlu0 %1924
      %1926 = vrot.lane.b32.xlu0 %v1883, 120
      %v1927 = vpop.permute.xlu0 %1926
      %1930 = vrot.lane.b32.xlu0 %v1884, 55
      %v1931 = vpop.permute.xlu0 %1930
      %1932 = vrot.lane.b32.xlu0 %v1885, 55
      %v1933 = vpop.permute.xlu0 %1932
      %1936 = vrot.lane.b32.xlu0 %v1890, 54
      %v1937 = vpop.permute.xlu0 %1936
      %1938 = vrot.lane.b32.xlu0 %v1891, 54
      %v1939 = vpop.permute.xlu0 %1938
      %1942 = vrot.lane.b32.xlu0 %v1896, 48
      %v1943 = vpop.permute.xlu0 %1942
      %1944 = vrot.lane.b32.xlu0 %v1897, 48
      %v1945 = vpop.permute.xlu0 %1944
      %1948 = vrot.lane.b32.xlu0 %v1902, 47
      %v1949 = vpop.permute.xlu0 %1948
      %1950 = vrot.lane.b32.xlu0 %v1903, 47
      %v1951 = vpop.permute.xlu0 %1950
      %1954 = vrot.lane.b32.xlu0 %v1908, 46
      %v1955 = vpop.permute.xlu0 %1954
      %1956 = vrot.lane.b32.xlu0 %v1909, 46
      %v1957 = vpop.permute.xlu0 %1956
      %1959 = vset.pattern.permute.xlu0 0
      %1960 = vperm.xlu0 %1959, %v1832
      %v1961 = vpop.permute.xlu0 %1960
      %1964 = vset.pattern.permute.xlu0 0
      %1965 = vperm.xlu0 %1964, %v1833
      %v1966 = vpop.permute.xlu0 %1965
      %1969 = vset.pattern.permute.xlu0 0
      %1970 = vperm.xlu0 %1969, %v1834
      %v1971 = vpop.permute.xlu0 %1970
      %1974 = vset.pattern.permute.xlu0 0
      %1975 = vperm.xlu0 %1974, %v1835
      %v1976 = vpop.permute.xlu0 %1975
      %v1986 = vunpack.c.l.b16 %v1823
      %v1987 = vunpack.c.h.b16 %v1823
      %v1988 = vunpack.c.l.b16 %v1824
      %v1989 = vunpack.c.l.b16 %v1825
      %v1990 = vunpack.c.h.b16 %v1825
      %v1991 = vunpack.c.l.b16 %v1826
      %v1992 = vunpack.c.l.b16 %v1827
      %v1993 = vunpack.c.h.b16 %v1827
      %v1994 = vunpack.c.l.b16 %v1828
      %v1995 = vunpack.c.l.b16 %v1829
      %v1996 = vunpack.c.h.b16 %v1829
      %v1997 = vunpack.c.l.b16 %v1830
      %v1998 = vpack.c.b16 %v1989, %v1986
      %v1999 = vpack.c.b16 %v1990, %v1987
      %v2000 = vpack.c.b16 %v1991, %v1988
      %v2001 = vpack.c.b16 %v1995, %v1992
      %v2002 = vpack.c.b16 %v1996, %v1993
      %v2003 = vpack.c.b16 %v1997, %v1994
      %2010 = vrot.lane.b32.xlu0 %v1864, 73
      %v2011 = vpop.permute.xlu0 %2010
      %2012 = vrot.lane.b32.xlu0 %v1865, 73
      %v2013 = vpop.permute.xlu0 %2012
      %2014 = vrot.lane.b32.xlu0 %v1913, 73
      %v2015 = vpop.permute.xlu0 %2014
      %2016 = vrot.lane.b32.xlu0 %v1915, 73
      %v2017 = vpop.permute.xlu0 %2016
      %2018 = vrot.lane.b32.xlu0 %v1919, 73
      %v2019 = vpop.permute.xlu0 %2018
      %2020 = vrot.lane.b32.xlu0 %v1921, 73
      %v2021 = vpop.permute.xlu0 %2020
      %2022 = vrot.lane.b32.xlu0 %v1925, 73
      %v2023 = vpop.permute.xlu0 %2022
      %2024 = vrot.lane.b32.xlu0 %v1927, 73
      %v2025 = vpop.permute.xlu0 %2024
      %2026 = vrot.lane.b32.xlu0 %v1931, 73
      %v2027 = vpop.permute.xlu0 %2026
      %2028 = vrot.lane.b32.xlu0 %v1933, 73
      %v2029 = vpop.permute.xlu0 %2028
      %2030 = vrot.lane.b32.xlu0 %v1937, 73
      %v2031 = vpop.permute.xlu0 %2030
      %2032 = vrot.lane.b32.xlu0 %v1939, 73
      %v2033 = vpop.permute.xlu0 %2032
      %2034 = vrot.lane.b32.xlu0 %v1943, 73
      %v2035 = vpop.permute.xlu0 %2034
      %2036 = vrot.lane.b32.xlu0 %v1945, 73
      %v2037 = vpop.permute.xlu0 %2036
      %2038 = vrot.lane.b32.xlu0 %v1949, 73
      %v2039 = vpop.permute.xlu0 %2038
      %2040 = vrot.lane.b32.xlu0 %v1951, 73
      %v2041 = vpop.permute.xlu0 %2040
      %2042 = vrot.lane.b32.xlu0 %v1955, 73
      %v2043 = vpop.permute.xlu0 %2042
      %2044 = vrot.lane.b32.xlu0 %v1957, 73
      %v2045 = vpop.permute.xlu0 %2044
      %v2065 = vsel %vm479, %v2000, 0
      %v2068 = vsel %vm479, %v2003, 0
      %2070 = vmatprep.subr.bf16.mxu0 0
      %2071 = vmatpush1.bf16.msra.mxu0 %v2011
      %2072 = vmatprep.subr.bf16.mxu0 0
      %2073 = vmatpush1.bf16.msra.mxu0 %v2013
      %2074 = vmatprep.subr.bf16.mxu0 0
      %2075 = vmatpush1.bf16.msra.mxu0 %v2015
      %2076 = vmatprep.subr.bf16.mxu0 0
      %2077 = vmatpush1.bf16.msra.mxu0 %v2017
      %2078 = vmatprep.subr.bf16.mxu0 0
      %2079 = vmatpush1.bf16.msra.mxu0 %v2019
      %2080 = vmatprep.subr.bf16.mxu0 0
      %2081 = vmatpush1.bf16.msra.mxu0 %v2021
      %2082 = vmatprep.subr.bf16.mxu0 0
      %2083 = vmatpush1.bf16.msra.mxu0 %v2023
      %2084 = vmatprep.subr.bf16.mxu0 0
      %2085 = vmatpush1.bf16.msra.mxu0 %v2025
      %2086 = vmatprep.subr.bf16.mxu0 0
      %2087 = vmatpush1.bf16.msra.mxu0 %v2027
      %2088 = vmatprep.subr.bf16.mxu0 0
      %2089 = vmatpush1.bf16.msra.mxu0 %v2029
      %2090 = vmatprep.subr.bf16.mxu0 0
      %2091 = vmatpush1.bf16.msra.mxu0 %v2031
      %2092 = vmatprep.subr.bf16.mxu0 0
      %2093 = vmatpush1.bf16.msra.mxu0 %v2033
      %2094 = vmatprep.subr.bf16.mxu0 0
      %2095 = vmatpush1.bf16.msra.mxu0 %v2035
      %2096 = vmatprep.subr.bf16.mxu0 0
      %2097 = vmatpush1.bf16.msra.mxu0 %v2037
      %2098 = vmatprep.subr.bf16.mxu0 0
      %2099 = vmatpush1.bf16.msra.mxu0 %v2039
      %2100 = vmatprep.subr.bf16.mxu0 0
      %2101 = vmatpush1.bf16.msra.mxu0 %v2041
      %2102 = vmatprep.mubr.bf16.mxu0 %v1999
      %2103 = vmatmul.mubr.bf16.gmra.mrb[0].mxu0 %v1998
      %v2104 = vpop.f32.mrb[0].mxu0
      %v2105 = vadd.f32 %v1961, %v2104
      %v2106 = vpop.f32.mrb[0].mxu0
      %v2107 = vpop.f32.mrb[0].mxu0
      %v2108 = vadd.f32 %v1966, %v2107
      %v2109 = vpop.f32.mrb[0].mxu0
      %2110 = vmatprep.mubr.bf16.mxu0 %v2002
      %2111 = vmatmul.mubr.bf16.gmra.mrb[0].mxu0 %v2001
      %v2112 = vpop.f32.mrb[0].mxu0
      %v2113 = vadd.f32 %v1971, %v2112
      %v2114 = vpop.f32.mrb[0].mxu0
      %v2115 = vpop.f32.mrb[0].mxu0
      %v2116 = vadd.f32 %v1976, %v2115
      %v2117 = vpop.f32.mrb[0].mxu0
      %2118 = vdwg.mxu0
      %2119 = vmatprep.subr.bf16.mxu0 0
      %2120 = vmatpush1.bf16.msra.mxu0 %v2043
      %2121 = vmatprep.subr.bf16.mxu0 0
      %2122 = vmatpush1.bf16.msra.mxu0 %v2045
      %2123 = vmatprep.subr.bf16.mxu0 0
      %2124 = vmatpush1.bf16.msra.mxu0 0
      %2125 = vmatprep.subr.bf16.mxu0 0
      %2126 = vmatpush1.bf16.msra.mxu0 0
      %2127 = vmatprep.subr.bf16.mxu0 0
      %2128 = vmatpush1.bf16.msra.mxu0 0
      %2129 = vmatprep.subr.bf16.mxu0 0
      %2130 = vmatpush1.bf16.msra.mxu0 0
      %2131 = vmatprep.subr.bf16.mxu0 0
      %2132 = vmatpush1.bf16.msra.mxu0 0
      %2133 = vmatprep.subr.bf16.mxu0 0
      %2134 = vmatpush1.bf16.msra.mxu0 0
      %2135 = vmatprep.subr.bf16.mxu0 0
      %2136 = vmatpush1.bf16.msra.mxu0 0
      %2137 = vmatprep.subr.bf16.mxu0 0
      %2138 = vmatpush1.bf16.msra.mxu0 0
      %2139 = vmatprep.subr.bf16.mxu0 0
      %2140 = vmatpush1.bf16.msra.mxu0 0
      %2141 = vmatprep.subr.bf16.mxu0 0
      %2142 = vmatpush1.bf16.msra.mxu0 0
      %2143 = vmatprep.subr.bf16.mxu0 0
      %2144 = vmatpush1.bf16.msra.mxu0 0
      %2145 = vmatprep.subr.bf16.mxu0 0
      %2146 = vmatpush1.bf16.msra.mxu0 0
      %2147 = vmatprep.subr.bf16.mxu0 0
      %2148 = vmatpush1.bf16.msra.mxu0 0
      %2149 = vmatprep.subr.bf16.mxu0 0
      %2150 = vmatpush1.bf16.msra.mxu0 0
      %2151 = vmatprep.mubr.bf16.mxu0 0
      %2152 = vmatmul.mubr.bf16.gmra.mrb[0].mxu0 %v2065
      %v2153 = vpop.f32.mrb[0].mxu0
      %v2154 = vadd.f32 %v2105, %v2153
      %v2155 = vpop.f32.mrb[0].mxu0
      %v2156 = vpop.f32.mrb[0].mxu0
      %v2157 = vadd.f32 %v2108, %v2156
      %v2158 = vpop.f32.mrb[0].mxu0
      %2159 = vmatprep.mubr.bf16.mxu0 0
      %2160 = vmatmul.mubr.bf16.gmra.mrb[0].mxu0 %v2068
      %v2161 = vpop.f32.mrb[0].mxu0
      %v2162 = vadd.f32 %v2113, %v2161
      %v2163 = vpop.f32.mrb[0].mxu0
      %v2164 = vpop.f32.mrb[0].mxu0
      %v2165 = vadd.f32 %v2116, %v2164
      %v2166 = vpop.f32.mrb[0].mxu0
      %2167 = vdwg.mxu0
      %v2168 = vadd.f32 %v2154, %v1464
      %v2169 = vadd.f32 %v2157, %v1465
      %v2170 = vadd.f32 %v2162, %v1466
      %v2171 = vadd.f32 %v2165, %v1467
      %v2172 = vmax.f32 %v2168, 0.0
      %v2173 = vmax.f32 %v2169, 0.0
      %v2174 = vmax.f32 %v2170, 0.0
      %v2175 = vmax.f32 %v2171, 0.0
    $region78: #{play_network_pallas.1} parent=1 // loop_footer
      %s593 = sadd.s32 1, %s589
    $region79: #{play_network_pallas.1} parent=1 // loop_footer_branch
      %588 = sbr.rel target = $region75
    $region80: #{play_network_pallas.1} parent=1 // loop_exit
      _
    %v2176 = vld [vmem:[%s12] sm:$0x1]
    %v2177 = vld [vmem:[#allocation2] sm:$0x1]
    %2179 = vset.pattern.permute.xlu0 0
    %2180 = vperm.xlu0 %2179, %v2177
    %v2181 = vpop.permute.xlu0 %2180
    %v2183 = vlaneseq
    %v2184 = vshrl.u32 %v2183, 7
    %v2185 = vsub.s32 0, %v2184
    %v2186 = vrot.slane %v2181, %v2185
    %v2188 = vsel %vm479, %v2176, 0
    %2190 = vmatprep.subr.mxu0 0.0
    %2191 = vmatpush1.msra.mxu0 %v594
    %2192 = vmatprep.subr.mxu0 0.0
    %2193 = vmatpush1.msra.mxu0 %v595
    %2194 = vmatprep.subr.mxu0 0.0
    %2195 = vmatpush1.msra.mxu0 %v596
    %2196 = vmatprep.subr.mxu0 0.0
    %2197 = vmatpush1.msra.mxu0 %v597
    %2198 = vmatprep.subr.mxu0 0.0
    %2199 = vmatpush1.msra.mxu0 0.0
    %2200 = vmatprep.subr.mxu0 0.0
    %2201 = vmatpush1.msra.mxu0 0.0
    %2202 = vmatprep.subr.mxu0 0.0
    %2203 = vmatpush1.msra.mxu0 0.0
    %2204 = vmatprep.subr.mxu0 0.0
    %2205 = vmatpush1.msra.mxu0 0.0
    %2206 = vmatprep.subr.mxu0 0.0
    %2207 = vmatpush1.msra.mxu0 0.0
    %2208 = vmatprep.subr.mxu0 0.0
    %2209 = vmatpush1.msra.mxu0 0.0
    %2210 = vmatprep.subr.mxu0 0.0
    %2211 = vmatpush1.msra.mxu0 0.0
    %2212 = vmatprep.subr.mxu0 0.0
    %2213 = vmatpush1.msra.mxu0 0.0
    %2214 = vmatprep.subr.mxu0 0.0
    %2215 = vmatpush1.msra.mxu0 0.0
    %2216 = vmatprep.subr.mxu0 0.0
    %2217 = vmatpush1.msra.mxu0 0.0
    %2218 = vmatprep.subr.mxu0 0.0
    %2219 = vmatpush1.msra.mxu0 0.0
    %2220 = vmatprep.subr.mxu0 0.0
    %2221 = vmatpush1.msra.mxu0 0.0
    %2222 = vmatprep.subr.mxu0 0.0
    %2223 = vmatpush1.msra.mxu0 0.0
    %2224 = vmatprep.subr.mxu0 0.0
    %2225 = vmatpush1.msra.mxu0 0.0
    %2226 = vmatprep.subr.mxu0 0.0
    %2227 = vmatpush1.msra.mxu0 0.0
    %2228 = vmatprep.subr.mxu0 0.0
    %2229 = vmatpush1.msra.mxu0 0.0
    %2230 = vmatprep.subr.mxu0 0.0
    %2231 = vmatpush1.msra.mxu0 0.0
    %2232 = vmatprep.subr.mxu0 0.0
    %2233 = vmatpush1.msra.mxu0 0.0
    %2234 = vmatprep.subr.mxu0 0.0
    %2235 = vmatpush1.msra.mxu0 0.0
    %2236 = vmatprep.subr.mxu0 0.0
    %2237 = vmatpush1.msra.mxu0 0.0
    %2238 = vmatprep.subr.mxu0 0.0
    %2239 = vmatpush1.msra.mxu0 0.0
    %2240 = vmatprep.subr.mxu0 0.0
    %2241 = vmatpush1.msra.mxu0 0.0
    %2242 = vmatprep.subr.mxu0 0.0
    %2243 = vmatpush1.msra.mxu0 0.0
    %2244 = vmatprep.subr.mxu0 0.0
    %2245 = vmatpush1.msra.mxu0 0.0
    %2246 = vmatprep.subr.mxu0 0.0
    %2247 = vmatpush1.msra.mxu0 0.0
    %2248 = vmatprep.subr.mxu0 0.0
    %2249 = vmatpush1.msra.mxu0 0.0
    %2250 = vmatprep.subr.mxu0 0.0
    %2251 = vmatpush1.msra.mxu0 0.0
    %2252 = vmatprep.subr.mxu0 0.0
    %2253 = vmatpush1.msra.mxu0 0.0
    %2254 = vmatprep.mubr.f32.mxu0 0.0
    %2255 = vmatmul.mubr.f32.gmra.mrb[0].mxu0 %v2188
    %v2256 = vpop.f32.mrb[0].mxu0
    %v2257 = vadd.f32 %v2186, %v2256
    %v2258 = vpop.f32.mrb[0].mxu0
    %2259 = vdwg.mxu0
    %v2260 = vmax.f32 %v2257, 0.0
    %v2261 = vld [vmem:[%s14] sm:$0xff]
    %v2262 = vld [vmem:[%s14 + $0x8] sm:$0xff]
    %v2263 = vld [vmem:[%s14 + $0x10] sm:$0xff]
    %v2264 = vld [vmem:[%s14 + $0x18] sm:$0xff]
    %v2265 = vld [vmem:[%s14 + $0x20] sm:$0xff]
    %v2266 = vld [vmem:[%s14 + $0x28] sm:$0xff]
    %v2267 = vld [vmem:[%s14 + $0x30] sm:$0xff]
    %v2268 = vld [vmem:[%s14 + $0x38] sm:$0xff]
    %v2269 = vld [vmem:[%s15] sm:$0x1]
    %vm2270 = vcmask 523264
    %v2272 = vsel %vm2270, %v2260, 0
    %2274 = vmatprep.subr.mxu0 0.0
    %2275 = vmatpush1.msra.mxu0 %v2261
    %2276 = vmatprep.subr.mxu0 0.0
    %2277 = vmatpush1.msra.mxu0 %v2262
    %2278 = vmatprep.subr.mxu0 0.0
    %2279 = vmatpush1.msra.mxu0 %v2263
    %2280 = vmatprep.subr.mxu0 0.0
    %2281 = vmatpush1.msra.mxu0 %v2264
    %2282 = vmatprep.subr.mxu0 0.0
    %2283 = vmatpush1.msra.mxu0 %v2265
    %2284 = vmatprep.subr.mxu0 0.0
    %2285 = vmatpush1.msra.mxu0 %v2266
    %2286 = vmatprep.subr.mxu0 0.0
    %2287 = vmatpush1.msra.mxu0 %v2267
    %2288 = vmatprep.subr.mxu0 0.0
    %2289 = vmatpush1.msra.mxu0 %v2268
    %2290 = vmatprep.subr.mxu0 0.0
    %2291 = vmatpush1.msra.mxu0 0.0
    %2292 = vmatprep.subr.mxu0 0.0
    %2293 = vmatpush1.msra.mxu0 0.0
    %2294 = vmatprep.subr.mxu0 0.0
    %2295 = vmatpush1.msra.mxu0 0.0
    %2296 = vmatprep.subr.mxu0 0.0
    %2297 = vmatpush1.msra.mxu0 0.0
    %2298 = vmatprep.subr.mxu0 0.0
    %2299 = vmatpush1.msra.mxu0 0.0
    %2300 = vmatprep.subr.mxu0 0.0
    %2301 = vmatpush1.msra.mxu0 0.0
    %2302 = vmatprep.subr.mxu0 0.0
    %2303 = vmatpush1.msra.mxu0 0.0
    %2304 = vmatprep.subr.mxu0 0.0
    %2305 = vmatpush1.msra.mxu0 0.0
    %2306 = vmatprep.subr.mxu0 0.0
    %2307 = vmatpush1.msra.mxu0 0.0
    %2308 = vmatprep.subr.mxu0 0.0
    %2309 = vmatpush1.msra.mxu0 0.0
    %2310 = vmatprep.subr.mxu0 0.0
    %2311 = vmatpush1.msra.mxu0 0.0
    %2312 = vmatprep.subr.mxu0 0.0
    %2313 = vmatpush1.msra.mxu0 0.0
    %2314 = vmatprep.subr.mxu0 0.0
    %2315 = vmatpush1.msra.mxu0 0.0
    %2316 = vmatprep.subr.mxu0 0.0
    %2317 = vmatpush1.msra.mxu0 0.0
    %2318 = vmatprep.subr.mxu0 0.0
    %2319 = vmatpush1.msra.mxu0 0.0
    %2320 = vmatprep.subr.mxu0 0.0
    %2321 = vmatpush1.msra.mxu0 0.0
    %2322 = vmatprep.subr.mxu0 0.0
    %2323 = vmatpush1.msra.mxu0 0.0
    %2324 = vmatprep.subr.mxu0 0.0
    %2325 = vmatpush1.msra.mxu0 0.0
    %2326 = vmatprep.subr.mxu0 0.0
    %2327 = vmatpush1.msra.mxu0 0.0
    %2328 = vmatprep.subr.mxu0 0.0
    %2329 = vmatpush1.msra.mxu0 0.0
    %2330 = vmatprep.subr.mxu0 0.0
    %2331 = vmatpush1.msra.mxu0 0.0
    %2332 = vmatprep.subr.mxu0 0.0
    %2333 = vmatpush1.msra.mxu0 0.0
    %2334 = vmatprep.subr.mxu0 0.0
    %2335 = vmatpush1.msra.mxu0 0.0
    %2336 = vmatprep.subr.mxu0 0.0
    %2337 = vmatpush1.msra.mxu0 0.0
    %2338 = vmatprep.mubr.f32.mxu0 0.0
    %2339 = vmatmul.mubr.f32.gmra.mrb[0].mxu0 %v2272
    %v2340 = vpop.f32.mrb[0].mxu0
    %v2341 = vadd.f32 %v2269, %v2340
    %v2342 = vpop.f32.mrb[0].mxu0
    %2343 = vdwg.mxu0
    %v2344 = vmax.f32 %v2341, 0.0
    %v2345 = vld [vmem:[%s16] sm:$0xff]
    %v2346 = vld [vmem:[%s16 + $0x8] sm:$0xff]
    %v2347 = vld [vmem:[%s16 + $0x10] sm:$0xff]
    %v2348 = vld [vmem:[%s16 + $0x18] sm:$0xff]
    %v2349 = vld [vmem:[#allocation3] sm:$0x1]
    %v2351 = vsel %vm479, %v2344, 0
    %2353 = vmatprep.subr.mxu0 0.0
    %2354 = vmatpush1.msra.mxu0 %v2345
    %2355 = vmatprep.subr.mxu0 0.0
    %2356 = vmatpush1.msra.mxu0 %v2346
    %2357 = vmatprep.subr.mxu0 0.0
    %2358 = vmatpush1.msra.mxu0 %v2347
    %2359 = vmatprep.subr.mxu0 0.0
    %2360 = vmatpush1.msra.mxu0 %v2348
    %2361 = vmatprep.subr.mxu0 0.0
    %2362 = vmatpush1.msra.mxu0 0.0
    %2363 = vmatprep.subr.mxu0 0.0
    %2364 = vmatpush1.msra.mxu0 0.0
    %2365 = vmatprep.subr.mxu0 0.0
    %2366 = vmatpush1.msra.mxu0 0.0
    %2367 = vmatprep.subr.mxu0 0.0
    %2368 = vmatpush1.msra.mxu0 0.0
    %2369 = vmatprep.subr.mxu0 0.0
    %2370 = vmatpush1.msra.mxu0 0.0
    %2371 = vmatprep.subr.mxu0 0.0
    %2372 = vmatpush1.msra.mxu0 0.0
    %2373 = vmatprep.subr.mxu0 0.0
    %2374 = vmatpush1.msra.mxu0 0.0
    %2375 = vmatprep.subr.mxu0 0.0
    %2376 = vmatpush1.msra.mxu0 0.0
    %2377 = vmatprep.subr.mxu0 0.0
    %2378 = vmatpush1.msra.mxu0 0.0
    %2379 = vmatprep.subr.mxu0 0.0
    %2380 = vmatpush1.msra.mxu0 0.0
    %2381 = vmatprep.subr.mxu0 0.0
    %2382 = vmatpush1.msra.mxu0 0.0
    %2383 = vmatprep.subr.mxu0 0.0
    %2384 = vmatpush1.msra.mxu0 0.0
    %2385 = vmatprep.subr.mxu0 0.0
    %2386 = vmatpush1.msra.mxu0 0.0
    %2387 = vmatprep.subr.mxu0 0.0
    %2388 = vmatpush1.msra.mxu0 0.0
    %2389 = vmatprep.subr.mxu0 0.0
    %2390 = vmatpush1.msra.mxu0 0.0
    %2391 = vmatprep.subr.mxu0 0.0
    %2392 = vmatpush1.msra.mxu0 0.0
    %2393 = vmatprep.subr.mxu0 0.0
    %2394 = vmatpush1.msra.mxu0 0.0
    %2395 = vmatprep.subr.mxu0 0.0
    %2396 = vmatpush1.msra.mxu0 0.0
    %2397 = vmatprep.subr.mxu0 0.0
    %2398 = vmatpush1.msra.mxu0 0.0
    %2399 = vmatprep.subr.mxu0 0.0
    %2400 = vmatpush1.msra.mxu0 0.0
    %2401 = vmatprep.subr.mxu0 0.0
    %2402 = vmatpush1.msra.mxu0 0.0
    %2403 = vmatprep.subr.mxu0 0.0
    %2404 = vmatpush1.msra.mxu0 0.0
    %2405 = vmatprep.subr.mxu0 0.0
    %2406 = vmatpush1.msra.mxu0 0.0
    %2407 = vmatprep.subr.mxu0 0.0
    %2408 = vmatpush1.msra.mxu0 0.0
    %2409 = vmatprep.subr.mxu0 0.0
    %2410 = vmatpush1.msra.mxu0 0.0
    %2411 = vmatprep.subr.mxu0 0.0
    %2412 = vmatpush1.msra.mxu0 0.0
    %2413 = vmatprep.subr.mxu0 0.0
    %2414 = vmatpush1.msra.mxu0 0.0
    %2415 = vmatprep.subr.mxu0 0.0
    %2416 = vmatpush1.msra.mxu0 0.0
    %2417 = vmatprep.mubr.f32.mxu0 0.0
    %2418 = vmatmul.mubr.f32.gmra.mrb[0].mxu0 %v2351
    %v2419 = vpop.f32.mrb[0].mxu0
    %v2420 = vadd.f32 %v2349, %v2419
    %v2421 = vpop.f32.mrb[0].mxu0
    %2422 = vdwg.mxu0
    %v2423 = vtanh.pop %v2420
    %vm2424 = vcmask 0
    %2425 = vst.msk [vmem:[#allocation4] sm:$0x1] %vm2424, %v2423
    %v2426 = vld [vmem:[%s8] sm:$0x3]
    %v2427 = vld [vmem:[%s9] sm:$0x3]
    %2429 = vset.pattern.permute.xlu0 0
    %2430 = vperm.xlu0 %2429, %v2427
    %v2431 = vpop.permute.xlu0 %2430
    %v2434 = vsel %vm479, %v2426, 0
    %2436 = vmatprep.subr.mxu0 0.0
    %2437 = vmatpush1.msra.mxu0 %v594
    %2438 = vmatprep.subr.mxu0 0.0
    %2439 = vmatpush1.msra.mxu0 %v595
    %2440 = vmatprep.subr.mxu0 0.0
    %2441 = vmatpush1.msra.mxu0 %v596
    %2442 = vmatprep.subr.mxu0 0.0
    %2443 = vmatpush1.msra.mxu0 %v597
    %2444 = vmatprep.subr.mxu0 0.0
    %2445 = vmatpush1.msra.mxu0 0.0
    %2446 = vmatprep.subr.mxu0 0.0
    %2447 = vmatpush1.msra.mxu0 0.0
    %2448 = vmatprep.subr.mxu0 0.0
    %2449 = vmatpush1.msra.mxu0 0.0
    %2450 = vmatprep.subr.mxu0 0.0
    %2451 = vmatpush1.msra.mxu0 0.0
    %2452 = vmatprep.subr.mxu0 0.0
    %2453 = vmatpush1.msra.mxu0 0.0
    %2454 = vmatprep.subr.mxu0 0.0
    %2455 = vmatpush1.msra.mxu0 0.0
    %2456 = vmatprep.subr.mxu0 0.0
    %2457 = vmatpush1.msra.mxu0 0.0
    %2458 = vmatprep.subr.mxu0 0.0
    %2459 = vmatpush1.msra.mxu0 0.0
    %2460 = vmatprep.subr.mxu0 0.0
    %2461 = vmatpush1.msra.mxu0 0.0
    %2462 = vmatprep.subr.mxu0 0.0
    %2463 = vmatpush1.msra.mxu0 0.0
    %2464 = vmatprep.subr.mxu0 0.0
    %2465 = vmatpush1.msra.mxu0 0.0
    %2466 = vmatprep.subr.mxu0 0.0
    %2467 = vmatpush1.msra.mxu0 0.0
    %2468 = vmatprep.subr.mxu0 0.0
    %2469 = vmatpush1.msra.mxu0 0.0
    %2470 = vmatprep.subr.mxu0 0.0
    %2471 = vmatpush1.msra.mxu0 0.0
    %2472 = vmatprep.subr.mxu0 0.0
    %2473 = vmatpush1.msra.mxu0 0.0
    %2474 = vmatprep.subr.mxu0 0.0
    %2475 = vmatpush1.msra.mxu0 0.0
    %2476 = vmatprep.subr.mxu0 0.0
    %2477 = vmatpush1.msra.mxu0 0.0
    %2478 = vmatprep.subr.mxu0 0.0
    %2479 = vmatpush1.msra.mxu0 0.0
    %2480 = vmatprep.subr.mxu0 0.0
    %2481 = vmatpush1.msra.mxu0 0.0
    %2482 = vmatprep.subr.mxu0 0.0
    %2483 = vmatpush1.msra.mxu0 0.0
    %2484 = vmatprep.subr.mxu0 0.0
    %2485 = vmatpush1.msra.mxu0 0.0
    %2486 = vmatprep.subr.mxu0 0.0
    %2487 = vmatpush1.msra.mxu0 0.0
    %2488 = vmatprep.subr.mxu0 0.0
    %2489 = vmatpush1.msra.mxu0 0.0
    %2490 = vmatprep.subr.mxu0 0.0
    %2491 = vmatpush1.msra.mxu0 0.0
    %2492 = vmatprep.subr.mxu0 0.0
    %2493 = vmatpush1.msra.mxu0 0.0
    %2494 = vmatprep.subr.mxu0 0.0
    %2495 = vmatpush1.msra.mxu0 0.0
    %2496 = vmatprep.subr.mxu0 0.0
    %2497 = vmatpush1.msra.mxu0 0.0
    %2498 = vmatprep.subr.mxu0 0.0
    %2499 = vmatpush1.msra.mxu0 0.0
    %2500 = vmatprep.mubr.f32.mxu0 0.0
    %2501 = vmatmul.mubr.f32.gmra.mrb[0].mxu0 %v2434
    %v2502 = vpop.f32.mrb[0].mxu0
    %v2503 = vadd.f32 %v2431, %v2502
    %v2504 = vpop.f32.mrb[0].mxu0
    %2505 = vdwg.mxu0
    %v2506 = vmax.f32 %v2503, 0.0
    %v2507 = vpack.c.bf16 %v2506, %v2506
    %v2508 = vld [vmem:[%s10] sm:$0xff]
    %v2509 = vld [vmem:[%s10 + $0x8] sm:$0xff]
    %v2510 = vld [vmem:[%s10 + $0x10] sm:$0xff]
    %v2511 = vld [vmem:[%s10 + $0x18] sm:$0xff]
    %v2512 = vld [vmem:[%s10 + $0x20] sm:$0xff]
    %v2513 = vld [vmem:[%s10 + $0x28] sm:$0xff]
    %v2514 = vld [vmem:[%s10 + $0x30] sm:$0xff]
    %v2515 = vld [vmem:[%s10 + $0x38] sm:$0xff]
    %v2516 = vld [vmem:[%s10 + $0x40] sm:$0xff]
    %v2517 = vld [vmem:[%s10 + $0x48] sm:$0xff]
    %v2518 = vld [vmem:[%s10 + $0x50] sm:$0xff]
    %v2519 = vld [vmem:[%s10 + $0x58] sm:$0xff]
    %v2520 = vld [vmem:[%s10 + $0x60] sm:$0xff]
    %v2521 = vld [vmem:[%s10 + $0x68] sm:$0xff]
    %v2522 = vld [vmem:[%s10 + $0x70] sm:$0xff]
    %v2523 = vld [vmem:[%s10 + $0x78] sm:$0xff]
    %v2524 = vld [vmem:[%s10 + $0x80] sm:$0xff]
    %v2525 = vld [vmem:[%s10 + $0x88] sm:$0xff]
    %v2526 = vld [vmem:[%s10 + $0x90] sm:$0xf]
    %v2527 = vld [vmem:[%s10 + $0x94] sm:$0xff]
    %v2528 = vld [vmem:[%s10 + $0x9c] sm:$0xff]
    %v2529 = vld [vmem:[%s10 + $0xa4] sm:$0xff]
    %v2530 = vld [vmem:[%s10 + $0xac] sm:$0xff]
    %v2531 = vld [vmem:[%s10 + $0xb4] sm:$0xff]
    %v2532 = vld [vmem:[%s10 + $0xbc] sm:$0xff]
    %v2533 = vld [vmem:[%s10 + $0xc4] sm:$0xff]
    %v2534 = vld [vmem:[%s10 + $0xcc] sm:$0xff]
    %v2535 = vld [vmem:[%s10 + $0xd4] sm:$0xff]
    %v2536 = vld [vmem:[%s10 + $0xdc] sm:$0xff]
    %v2537 = vld [vmem:[%s10 + $0xe4] sm:$0xff]
    %v2538 = vld [vmem:[%s10 + $0xec] sm:$0xff]
    %v2539 = vld [vmem:[%s10 + $0xf4] sm:$0xff]
    %v2540 = vld [vmem:[%s10 + $0xfc] sm:$0xff]
    %v2541 = vld [vmem:[%s10 + $0x104] sm:$0xff]
    %v2542 = vld [vmem:[%s10 + $0x10c] sm:$0xff]
    %v2543 = vld [vmem:[%s10 + $0x114] sm:$0xff]
    %v2544 = vld [vmem:[%s10 + $0x11c] sm:$0xff]
    %v2545 = vld [vmem:[%s10 + $0x124] sm:$0xf]
    %v2546 = vld [vmem:[%s10 + $0x128] sm:$0xff]
    %v2547 = vld [vmem:[%s10 + $0x130] sm:$0xff]
    %v2548 = vld [vmem:[%s10 + $0x138] sm:$0xff]
    %v2549 = vld [vmem:[%s10 + $0x140] sm:$0xff]
    %v2550 = vld [vmem:[%s10 + $0x148] sm:$0xff]
    %v2551 = vld [vmem:[%s10 + $0x150] sm:$0xff]
    %v2552 = vld [vmem:[%s10 + $0x158] sm:$0xff]
    %v2553 = vld [vmem:[%s10 + $0x160] sm:$0xff]
    %v2554 = vld [vmem:[%s10 + $0x168] sm:$0xff]
    %v2555 = vld [vmem:[%s10 + $0x170] sm:$0xff]
    %v2556 = vld [vmem:[%s10 + $0x178] sm:$0xff]
    %v2557 = vld [vmem:[%s10 + $0x180] sm:$0xff]
    %v2558 = vld [vmem:[%s10 + $0x188] sm:$0xff]
    %v2559 = vld [vmem:[%s10 + $0x190] sm:$0xff]
    %v2560 = vld [vmem:[%s10 + $0x198] sm:$0xff]
    %v2561 = vld [vmem:[%s10 + $0x1a0] sm:$0xff]
    %v2562 = vld [vmem:[%s10 + $0x1a8] sm:$0xff]
    %v2563 = vld [vmem:[%s10 + $0x1b0] sm:$0xff]
    %v2564 = vld [vmem:[%s10 + $0x1b8] sm:$0xf]
    %v2565 = vld [vmem:[%s10 + $0x1bc] sm:$0xff]
    %v2566 = vld [vmem:[%s10 + $0x1c4] sm:$0xff]
    %v2567 = vld [vmem:[%s10 + $0x1cc] sm:$0xff]
    %v2568 = vld [vmem:[%s10 + $0x1d4] sm:$0xff]
    %v2569 = vld [vmem:[%s10 + $0x1dc] sm:$0xff]
    %v2570 = vld [vmem:[%s10 + $0x1e4] sm:$0xff]
    %v2571 = vld [vmem:[%s10 + $0x1ec] sm:$0xff]
    %v2572 = vld [vmem:[%s10 + $0x1f4] sm:$0xff]
    %v2573 = vld [vmem:[%s10 + $0x1fc] sm:$0xff]
    %v2574 = vld [vmem:[%s10 + $0x204] sm:$0xff]
    %v2575 = vld [vmem:[%s10 + $0x20c] sm:$0xff]
    %v2576 = vld [vmem:[%s10 + $0x214] sm:$0xff]
    %v2577 = vld [vmem:[%s10 + $0x21c] sm:$0xff]
    %v2578 = vld [vmem:[%s10 + $0x224] sm:$0xff]
    %v2579 = vld [vmem:[%s10 + $0x22c] sm:$0xff]
    %v2580 = vld [vmem:[%s10 + $0x234] sm:$0xff]
    %v2581 = vld [vmem:[%s10 + $0x23c] sm:$0xff]
    %v2582 = vld [vmem:[%s10 + $0x244] sm:$0xff]
    %v2583 = vld [vmem:[%s10 + $0x24c] sm:$0xf]
    %v2584 = vld [vmem:[%s10 + $0x250] sm:$0xff]
    %v2585 = vld [vmem:[%s10 + $0x258] sm:$0xff]
    %v2586 = vld [vmem:[%s10 + $0x260] sm:$0xff]
    %v2587 = vld [vmem:[%s10 + $0x268] sm:$0xff]
    %v2588 = vld [vmem:[%s10 + $0x270] sm:$0xff]
    %v2589 = vld [vmem:[%s10 + $0x278] sm:$0xff]
    %v2590 = vld [vmem:[%s10 + $0x280] sm:$0xff]
    %v2591 = vld [vmem:[%s10 + $0x288] sm:$0xff]
    %v2592 = vld [vmem:[%s10 + $0x290] sm:$0xff]
    %v2593 = vld [vmem:[%s10 + $0x298] sm:$0xff]
    %v2594 = vld [vmem:[%s10 + $0x2a0] sm:$0xff]
    %v2595 = vld [vmem:[%s10 + $0x2a8] sm:$0xff]
    %v2596 = vld [vmem:[%s10 + $0x2b0] sm:$0xff]
    %v2597 = vld [vmem:[%s10 + $0x2b8] sm:$0xff]
    %v2598 = vld [vmem:[%s10 + $0x2c0] sm:$0xff]
    %v2599 = vld [vmem:[%s10 + $0x2c8] sm:$0xff]
    %v2600 = vld [vmem:[%s10 + $0x2d0] sm:$0xff]
    %v2601 = vld [vmem:[%s10 + $0x2d8] sm:$0xff]
    %v2602 = vld [vmem:[%s10 + $0x2e0] sm:$0xf]
    %v2603 = vld [vmem:[%s10 + $0x2e4] sm:$0xff]
    %v2604 = vld [vmem:[%s10 + $0x2ec] sm:$0xff]
    %v2605 = vld [vmem:[%s10 + $0x2f4] sm:$0xff]
    %v2606 = vld [vmem:[%s10 + $0x2fc] sm:$0xff]
    %v2607 = vld [vmem:[%s10 + $0x304] sm:$0xff]
    %v2608 = vld [vmem:[%s10 + $0x30c] sm:$0xff]
    %v2609 = vld [vmem:[%s10 + $0x314] sm:$0xff]
    %v2610 = vld [vmem:[%s10 + $0x31c] sm:$0xff]
    %v2611 = vld [vmem:[%s10 + $0x324] sm:$0xff]
    %v2612 = vld [vmem:[%s10 + $0x32c] sm:$0xff]
    %v2613 = vld [vmem:[%s10 + $0x334] sm:$0xff]
    %v2614 = vld [vmem:[%s10 + $0x33c] sm:$0xff]
    %v2615 = vld [vmem:[%s10 + $0x344] sm:$0xff]
    %v2616 = vld [vmem:[%s10 + $0x34c] sm:$0xff]
    %v2617 = vld [vmem:[%s10 + $0x354] sm:$0xff]
    %v2618 = vld [vmem:[%s10 + $0x35c] sm:$0xff]
    %v2619 = vld [vmem:[%s10 + $0x364] sm:$0xff]
    %v2620 = vld [vmem:[%s10 + $0x36c] sm:$0xff]
    %v2621 = vld [vmem:[%s10 + $0x374] sm:$0xf]
    %v2622 = vld [vmem:[%s10 + $0x378] sm:$0xff]
    %v2623 = vld [vmem:[%s10 + $0x380] sm:$0xff]
    %v2624 = vld [vmem:[%s10 + $0x388] sm:$0xff]
    %v2625 = vld [vmem:[%s10 + $0x390] sm:$0xff]
    %v2626 = vld [vmem:[%s10 + $0x398] sm:$0xff]
    %v2627 = vld [vmem:[%s10 + $0x3a0] sm:$0xff]
    %v2628 = vld [vmem:[%s10 + $0x3a8] sm:$0xff]
    %v2629 = vld [vmem:[%s10 + $0x3b0] sm:$0xff]
    %v2630 = vld [vmem:[%s10 + $0x3b8] sm:$0xff]
    %v2631 = vld [vmem:[%s10 + $0x3c0] sm:$0xff]
    %v2632 = vld [vmem:[%s10 + $0x3c8] sm:$0xff]
    %v2633 = vld [vmem:[%s10 + $0x3d0] sm:$0xff]
    %v2634 = vld [vmem:[%s10 + $0x3d8] sm:$0xff]
    %v2635 = vld [vmem:[%s10 + $0x3e0] sm:$0xff]
    %v2636 = vld [vmem:[%s10 + $0x3e8] sm:$0xff]
    %v2637 = vld [vmem:[%s10 + $0x3f0] sm:$0xff]
    %v2638 = vld [vmem:[%s10 + $0x3f8] sm:$0xff]
    %v2639 = vld [vmem:[%s10 + $0x400] sm:$0xff]
    %v2640 = vld [vmem:[%s10 + $0x408] sm:$0xf]
    %v2641 = vld [vmem:[%s10 + $0x40c] sm:$0xff]
    %v2642 = vld [vmem:[%s10 + $0x414] sm:$0xff]
    %v2643 = vld [vmem:[%s10 + $0x41c] sm:$0xff]
    %v2644 = vld [vmem:[%s10 + $0x424] sm:$0xff]
    %v2645 = vld [vmem:[%s10 + $0x42c] sm:$0xff]
    %v2646 = vld [vmem:[%s10 + $0x434] sm:$0xff]
    %v2647 = vld [vmem:[%s10 + $0x43c] sm:$0xff]
    %v2648 = vld [vmem:[%s10 + $0x444] sm:$0xff]
    %v2649 = vld [vmem:[%s10 + $0x44c] sm:$0xff]
    %v2650 = vld [vmem:[%s10 + $0x454] sm:$0xff]
    %v2651 = vld [vmem:[%s10 + $0x45c] sm:$0xff]
    %v2652 = vld [vmem:[%s10 + $0x464] sm:$0xff]
    %v2653 = vld [vmem:[%s10 + $0x46c] sm:$0xff]
    %v2654 = vld [vmem:[%s10 + $0x474] sm:$0xff]
    %v2655 = vld [vmem:[%s10 + $0x47c] sm:$0xff]
    %v2656 = vld [vmem:[%s10 + $0x484] sm:$0xff]
    %v2657 = vld [vmem:[%s10 + $0x48c] sm:$0xff]
    %v2658 = vld [vmem:[%s10 + $0x494] sm:$0xff]
    %v2659 = vld [vmem:[%s10 + $0x49c] sm:$0xf]
    %v2660 = vld [vmem:[%s10 + $0x4a0] sm:$0xff]
    %v2661 = vld [vmem:[%s10 + $0x4a8] sm:$0xff]
    %v2662 = vld [vmem:[%s10 + $0x4b0] sm:$0xff]
    %v2663 = vld [vmem:[%s10 + $0x4b8] sm:$0xff]
    %v2664 = vld [vmem:[%s10 + $0x4c0] sm:$0xff]
    %v2665 = vld [vmem:[%s10 + $0x4c8] sm:$0xff]
    %v2666 = vld [vmem:[%s10 + $0x4d0] sm:$0xff]
    %v2667 = vld [vmem:[%s10 + $0x4d8] sm:$0xff]
    %v2668 = vld [vmem:[%s10 + $0x4e0] sm:$0xff]
    %v2669 = vld [vmem:[%s10 + $0x4e8] sm:$0xff]
    %v2670 = vld [vmem:[%s10 + $0x4f0] sm:$0xff]
    %v2671 = vld [vmem:[%s10 + $0x4f8] sm:$0xff]
    %v2672 = vld [vmem:[%s10 + $0x500] sm:$0xff]
    %v2673 = vld [vmem:[%s10 + $0x508] sm:$0xff]
    %v2674 = vld [vmem:[%s10 + $0x510] sm:$0xff]
    %v2675 = vld [vmem:[%s10 + $0x518] sm:$0xff]
    %v2676 = vld [vmem:[%s10 + $0x520] sm:$0xff]
    %v2677 = vld [vmem:[%s10 + $0x528] sm:$0xff]
    %v2678 = vld [vmem:[%s10 + $0x530] sm:$0xf]
    %v2679 = vld [vmem:[%s10 + $0x534] sm:$0xff]
    %v2680 = vld [vmem:[%s10 + $0x53c] sm:$0xff]
    %v2681 = vld [vmem:[%s10 + $0x544] sm:$0xff]
    %v2682 = vld [vmem:[%s10 + $0x54c] sm:$0xff]
    %v2683 = vld [vmem:[%s10 + $0x554] sm:$0xff]
    %v2684 = vld [vmem:[%s10 + $0x55c] sm:$0xff]
    %v2685 = vld [vmem:[%s10 + $0x564] sm:$0xff]
    %v2686 = vld [vmem:[%s10 + $0x56c] sm:$0xff]
    %v2687 = vld [vmem:[%s10 + $0x574] sm:$0xff]
    %v2688 = vld [vmem:[%s10 + $0x57c] sm:$0xff]
    %v2689 = vld [vmem:[%s10 + $0x584] sm:$0xff]
    %v2690 = vld [vmem:[%s10 + $0x58c] sm:$0xff]
    %v2691 = vld [vmem:[%s10 + $0x594] sm:$0xff]
    %v2692 = vld [vmem:[%s10 + $0x59c] sm:$0xff]
    %v2693 = vld [vmem:[%s10 + $0x5a4] sm:$0xff]
    %v2694 = vld [vmem:[%s10 + $0x5ac] sm:$0xff]
    %v2695 = vld [vmem:[%s10 + $0x5b4] sm:$0xff]
    %v2696 = vld [vmem:[%s10 + $0x5bc] sm:$0xff]
    %v2697 = vld [vmem:[%s10 + $0x5c4] sm:$0xf]
    %v2698 = vld [vmem:[%s10 + $0x5c8] sm:$0xff]
    %v2699 = vld [vmem:[%s10 + $0x5d0] sm:$0xff]
    %v2700 = vld [vmem:[%s10 + $0x5d8] sm:$0xff]
    %v2701 = vld [vmem:[%s10 + $0x5e0] sm:$0xff]
    %v2702 = vld [vmem:[%s10 + $0x5e8] sm:$0xff]
    %v2703 = vld [vmem:[%s10 + $0x5f0] sm:$0xff]
    %v2704 = vld [vmem:[%s10 + $0x5f8] sm:$0xff]
    %v2705 = vld [vmem:[%s10 + $0x600] sm:$0xff]
    %v2706 = vld [vmem:[%s10 + $0x608] sm:$0xff]
    %v2707 = vld [vmem:[%s10 + $0x610] sm:$0xff]
    %v2708 = vld [vmem:[%s10 + $0x618] sm:$0xff]
    %v2709 = vld [vmem:[%s10 + $0x620] sm:$0xff]
    %v2710 = vld [vmem:[%s10 + $0x628] sm:$0xff]
    %v2711 = vld [vmem:[%s10 + $0x630] sm:$0xff]
    %v2712 = vld [vmem:[%s10 + $0x638] sm:$0xff]
    %v2713 = vld [vmem:[%s10 + $0x640] sm:$0xff]
    %v2714 = vld [vmem:[%s10 + $0x648] sm:$0xff]
    %v2715 = vld [vmem:[%s10 + $0x650] sm:$0xff]
    %v2716 = vld [vmem:[%s10 + $0x658] sm:$0xf]
    %v2717 = vld [vmem:[%s10 + $0x65c] sm:$0xff]
    %v2718 = vld [vmem:[%s10 + $0x664] sm:$0xff]
    %v2719 = vld [vmem:[%s10 + $0x66c] sm:$0xff]
    %v2720 = vld [vmem:[%s10 + $0x674] sm:$0xff]
    %v2721 = vld [vmem:[%s10 + $0x67c] sm:$0xff]
    %v2722 = vld [vmem:[%s10 + $0x684] sm:$0xff]
    %v2723 = vld [vmem:[%s10 + $0x68c] sm:$0xff]
    %v2724 = vld [vmem:[%s10 + $0x694] sm:$0xff]
    %v2725 = vld [vmem:[%s10 + $0x69c] sm:$0xff]
    %v2726 = vld [vmem:[%s10 + $0x6a4] sm:$0xff]
    %v2727 = vld [vmem:[%s10 + $0x6ac] sm:$0xff]
    %v2728 = vld [vmem:[%s10 + $0x6b4] sm:$0xff]
    %v2729 = vld [vmem:[%s10 + $0x6bc] sm:$0xff]
    %v2730 = vld [vmem:[%s10 + $0x6c4] sm:$0xff]
    %v2731 = vld [vmem:[%s10 + $0x6cc] sm:$0xff]
    %v2732 = vld [vmem:[%s10 + $0x6d4] sm:$0xff]
    %v2733 = vld [vmem:[%s10 + $0x6dc] sm:$0xff]
    %v2734 = vld [vmem:[%s10 + $0x6e4] sm:$0xff]
    %v2735 = vld [vmem:[%s10 + $0x6ec] sm:$0xf]
    %v2736 = vld [vmem:[%s10 + $0x6f0] sm:$0xff]
    %v2737 = vld [vmem:[%s10 + $0x6f8] sm:$0xff]
    %v2738 = vld [vmem:[%s10 + $0x700] sm:$0xff]
    %v2739 = vld [vmem:[%s10 + $0x708] sm:$0xff]
    %v2740 = vld [vmem:[%s10 + $0x710] sm:$0xff]
    %v2741 = vld [vmem:[%s10 + $0x718] sm:$0xff]
    %v2742 = vld [vmem:[%s10 + $0x720] sm:$0xff]
    %v2743 = vld [vmem:[%s10 + $0x728] sm:$0xff]
    %v2744 = vld [vmem:[%s10 + $0x730] sm:$0xff]
    %v2745 = vld [vmem:[%s10 + $0x738] sm:$0xff]
    %v2746 = vld [vmem:[%s10 + $0x740] sm:$0xff]
    %v2747 = vld [vmem:[%s10 + $0x748] sm:$0xff]
    %v2748 = vld [vmem:[%s10 + $0x750] sm:$0xff]
    %v2749 = vld [vmem:[%s10 + $0x758] sm:$0xff]
    %v2750 = vld [vmem:[%s10 + $0x760] sm:$0xff]
    %v2751 = vld [vmem:[%s10 + $0x768] sm:$0xff]
    %v2752 = vld [vmem:[%s10 + $0x770] sm:$0xff]
    %v2753 = vld [vmem:[%s10 + $0x778] sm:$0xff]
    %v2754 = vld [vmem:[%s10 + $0x780] sm:$0xf]
    %v2755 = vld [vmem:[%s10 + $0x784] sm:$0xff]
    %v2756 = vld [vmem:[%s10 + $0x78c] sm:$0xff]
    %v2757 = vld [vmem:[%s10 + $0x794] sm:$0xff]
    %v2758 = vld [vmem:[%s10 + $0x79c] sm:$0xff]
    %v2759 = vld [vmem:[%s10 + $0x7a4] sm:$0xff]
    %v2760 = vld [vmem:[%s10 + $0x7ac] sm:$0xff]
    %v2761 = vld [vmem:[%s10 + $0x7b4] sm:$0xff]
    %v2762 = vld [vmem:[%s10 + $0x7bc] sm:$0xff]
    %v2763 = vld [vmem:[%s10 + $0x7c4] sm:$0xff]
    %v2764 = vld [vmem:[%s10 + $0x7cc] sm:$0xff]
    %v2765 = vld [vmem:[%s10 + $0x7d4] sm:$0xff]
    %v2766 = vld [vmem:[%s10 + $0x7dc] sm:$0xff]
    %v2767 = vld [vmem:[%s10 + $0x7e4] sm:$0xff]
    %v2768 = vld [vmem:[%s10 + $0x7ec] sm:$0xff]
    %v2769 = vld [vmem:[%s10 + $0x7f4] sm:$0xff]
    %v2770 = vld [vmem:[%s10 + $0x7fc] sm:$0xff]
    %v2771 = vld [vmem:[%s10 + $0x804] sm:$0xff]
    %v2772 = vld [vmem:[%s10 + $0x80c] sm:$0xff]
    %v2773 = vld [vmem:[%s10 + $0x814] sm:$0xf]
    %v2774 = vld [vmem:[%s10 + $0x818] sm:$0xff]
    %v2775 = vld [vmem:[%s10 + $0x820] sm:$0xff]
    %v2776 = vld [vmem:[%s10 + $0x828] sm:$0xff]
    %v2777 = vld [vmem:[%s10 + $0x830] sm:$0xff]
    %v2778 = vld [vmem:[%s10 + $0x838] sm:$0xff]
    %v2779 = vld [vmem:[%s10 + $0x840] sm:$0xff]
    %v2780 = vld [vmem:[%s10 + $0x848] sm:$0xff]
    %v2781 = vld [vmem:[%s10 + $0x850] sm:$0xff]
    %v2782 = vld [vmem:[%s10 + $0x858] sm:$0xff]
    %v2783 = vld [vmem:[%s10 + $0x860] sm:$0xff]
    %v2784 = vld [vmem:[%s10 + $0x868] sm:$0xff]
    %v2785 = vld [vmem:[%s10 + $0x870] sm:$0xff]
    %v2786 = vld [vmem:[%s10 + $0x878] sm:$0xff]
    %v2787 = vld [vmem:[%s10 + $0x880] sm:$0xff]
    %v2788 = vld [vmem:[%s10 + $0x888] sm:$0xff]
    %v2789 = vld [vmem:[%s10 + $0x890] sm:$0xff]
    %v2790 = vld [vmem:[%s10 + $0x898] sm:$0xff]
    %v2791 = vld [vmem:[%s10 + $0x8a0] sm:$0xff]
    %v2792 = vld [vmem:[%s10 + $0x8a8] sm:$0xf]
    %v2793 = vld [vmem:[%s10 + $0x8ac] sm:$0xff]
    %v2794 = vld [vmem:[%s10 + $0x8b4] sm:$0xff]
    %v2795 = vld [vmem:[%s10 + $0x8bc] sm:$0xff]
    %v2796 = vld [vmem:[%s10 + $0x8c4] sm:$0xff]
    %v2797 = vld [vmem:[%s10 + $0x8cc] sm:$0xff]
    %v2798 = vld [vmem:[%s10 + $0x8d4] sm:$0xff]
    %v2799 = vld [vmem:[%s10 + $0x8dc] sm:$0xff]
    %v2800 = vld [vmem:[%s10 + $0x8e4] sm:$0xff]
    %v2801 = vld [vmem:[%s10 + $0x8ec] sm:$0xff]
    %v2802 = vld [vmem:[%s10 + $0x8f4] sm:$0xff]
    %v2803 = vld [vmem:[%s10 + $0x8fc] sm:$0xff]
    %v2804 = vld [vmem:[%s10 + $0x904] sm:$0xff]
    %v2805 = vld [vmem:[%s10 + $0x90c] sm:$0xff]
    %v2806 = vld [vmem:[%s10 + $0x914] sm:$0xff]
    %v2807 = vld [vmem:[%s10 + $0x91c] sm:$0xff]
    %v2808 = vld [vmem:[%s10 + $0x924] sm:$0xff]
    %v2809 = vld [vmem:[%s10 + $0x92c] sm:$0xff]
    %v2810 = vld [vmem:[%s10 + $0x934] sm:$0xff]
    %v2811 = vld [vmem:[%s10 + $0x93c] sm:$0xf]
    %v2813 = vshrl.u32 %v2507, 16
    %v2967 = vunpack.c.l.b16 %v2660
    %v2968 = vunpack.c.h.b16 %v2660
    %v2969 = vunpack.c.l.b16 %v2661
    %v2970 = vunpack.c.h.b16 %v2661
    %v2971 = vunpack.c.l.b16 %v2662
    %v2972 = vunpack.c.h.b16 %v2662
    %v2973 = vunpack.c.l.b16 %v2663
    %v2974 = vunpack.c.h.b16 %v2663
    %v2975 = vunpack.c.l.b16 %v2664
    %v2976 = vunpack.c.h.b16 %v2664
    %v2977 = vunpack.c.l.b16 %v2665
    %v2978 = vunpack.c.h.b16 %v2665
    %v2979 = vunpack.c.l.b16 %v2666
    %v2980 = vunpack.c.h.b16 %v2666
    %v2981 = vunpack.c.l.b16 %v2667
    %v2982 = vunpack.c.h.b16 %v2667
    %v2983 = vunpack.c.l.b16 %v2668
    %v2984 = vunpack.c.h.b16 %v2668
    %v2985 = vunpack.c.l.b16 %v2669
    %v2986 = vunpack.c.h.b16 %v2669
    %v2987 = vunpack.c.l.b16 %v2670
    %v2988 = vunpack.c.h.b16 %v2670
    %v2989 = vunpack.c.l.b16 %v2671
    %v2990 = vunpack.c.h.b16 %v2671
    %v2991 = vunpack.c.l.b16 %v2672
    %v2992 = vunpack.c.h.b16 %v2672
    %v2993 = vunpack.c.l.b16 %v2673
    %v2994 = vunpack.c.h.b16 %v2673
    %v2995 = vunpack.c.l.b16 %v2674
    %v2996 = vunpack.c.h.b16 %v2674
    %v2997 = vunpack.c.l.b16 %v2675
    %v2998 = vunpack.c.h.b16 %v2675
    %v2999 = vunpack.c.l.b16 %v2676
    %v3000 = vunpack.c.h.b16 %v2676
    %v3001 = vunpack.c.l.b16 %v2677
    %v3002 = vunpack.c.h.b16 %v2677
    %v3003 = vunpack.c.l.b16 %v2678
    %v3004 = vunpack.c.l.b16 %v2679
    %v3005 = vunpack.c.h.b16 %v2679
    %v3006 = vunpack.c.l.b16 %v2680
    %v3007 = vunpack.c.h.b16 %v2680
    %v3008 = vunpack.c.l.b16 %v2681
    %v3009 = vunpack.c.h.b16 %v2681
    %v3010 = vunpack.c.l.b16 %v2682
    %v3011 = vunpack.c.h.b16 %v2682
    %v3012 = vunpack.c.l.b16 %v2683
    %v3013 = vunpack.c.h.b16 %v2683
    %v3014 = vunpack.c.l.b16 %v2684
    %v3015 = vunpack.c.h.b16 %v2684
    %v3016 = vunpack.c.l.b16 %v2685
    %v3017 = vunpack.c.h.b16 %v2685
    %v3018 = vunpack.c.l.b16 %v2686
    %v3019 = vunpack.c.h.b16 %v2686
    %v3020 = vunpack.c.l.b16 %v2687
    %v3021 = vunpack.c.h.b16 %v2687
    %v3022 = vunpack.c.l.b16 %v2688
    %v3023 = vunpack.c.h.b16 %v2688
    %v3024 = vunpack.c.l.b16 %v2689
    %v3025 = vunpack.c.h.b16 %v2689
    %v3026 = vunpack.c.l.b16 %v2690
    %v3027 = vunpack.c.h.b16 %v2690
    %v3028 = vunpack.c.l.b16 %v2691
    %v3029 = vunpack.c.h.b16 %v2691
    %v3030 = vunpack.c.l.b16 %v2692
    %v3031 = vunpack.c.h.b16 %v2692
    %v3032 = vunpack.c.l.b16 %v2693
    %v3033 = vunpack.c.h.b16 %v2693
    %v3034 = vunpack.c.l.b16 %v2694
    %v3035 = vunpack.c.h.b16 %v2694
    %v3036 = vunpack.c.l.b16 %v2695
    %v3037 = vunpack.c.h.b16 %v2695
    %v3038 = vunpack.c.l.b16 %v2696
    %v3039 = vunpack.c.h.b16 %v2696
    %v3040 = vunpack.c.l.b16 %v2697
    %v3041 = vunpack.c.l.b16 %v2698
    %v3042 = vunpack.c.h.b16 %v2698
    %v3043 = vunpack.c.l.b16 %v2699
    %v3044 = vunpack.c.h.b16 %v2699
    %v3045 = vunpack.c.l.b16 %v2700
    %v3046 = vunpack.c.h.b16 %v2700
    %v3047 = vunpack.c.l.b16 %v2701
    %v3048 = vunpack.c.h.b16 %v2701
    %v3049 = vunpack.c.l.b16 %v2702
    %v3050 = vunpack.c.h.b16 %v2702
    %v3051 = vunpack.c.l.b16 %v2703
    %v3052 = vunpack.c.h.b16 %v2703
    %v3053 = vunpack.c.l.b16 %v2704
    %v3054 = vunpack.c.h.b16 %v2704
    %v3055 = vunpack.c.l.b16 %v2705
    %v3056 = vunpack.c.h.b16 %v2705
    %v3057 = vunpack.c.l.b16 %v2706
    %v3058 = vunpack.c.h.b16 %v2706
    %v3059 = vunpack.c.l.b16 %v2707
    %v3060 = vunpack.c.h.b16 %v2707
    %v3061 = vunpack.c.l.b16 %v2708
    %v3062 = vunpack.c.h.b16 %v2708
    %v3063 = vunpack.c.l.b16 %v2709
    %v3064 = vunpack.c.h.b16 %v2709
    %v3065 = vunpack.c.l.b16 %v2710
    %v3066 = vunpack.c.h.b16 %v2710
    %v3067 = vunpack.c.l.b16 %v2711
    %v3068 = vunpack.c.h.b16 %v2711
    %v3069 = vunpack.c.l.b16 %v2712
    %v3070 = vunpack.c.h.b16 %v2712
    %v3071 = vunpack.c.l.b16 %v2713
    %v3072 = vunpack.c.h.b16 %v2713
    %v3073 = vunpack.c.l.b16 %v2714
    %v3074 = vunpack.c.h.b16 %v2714
    %v3075 = vunpack.c.l.b16 %v2715
    %v3076 = vunpack.c.h.b16 %v2715
    %v3077 = vunpack.c.l.b16 %v2716
    %v3078 = vunpack.c.l.b16 %v2717
    %v3079 = vunpack.c.h.b16 %v2717
    %v3080 = vunpack.c.l.b16 %v2718
    %v3081 = vunpack.c.h.b16 %v2718
    %v3082 = vunpack.c.l.b16 %v2719
    %v3083 = vunpack.c.h.b16 %v2719
    %v3084 = vunpack.c.l.b16 %v2720
    %v3085 = vunpack.c.h.b16 %v2720
    %v3086 = vunpack.c.l.b16 %v2721
    %v3087 = vunpack.c.h.b16 %v2721
    %v3088 = vunpack.c.l.b16 %v2722
    %v3089 = vunpack.c.h.b16 %v2722
    %v3090 = vunpack.c.l.b16 %v2723
    %v3091 = vunpack.c.h.b16 %v2723
    %v3092 = vunpack.c.l.b16 %v2724
    %v3093 = vunpack.c.h.b16 %v2724
    %v3094 = vunpack.c.l.b16 %v2725
    %v3095 = vunpack.c.h.b16 %v2725
    %v3096 = vunpack.c.l.b16 %v2726
    %v3097 = vunpack.c.h.b16 %v2726
    %v3098 = vunpack.c.l.b16 %v2727
    %v3099 = vunpack.c.h.b16 %v2727
    %v3100 = vunpack.c.l.b16 %v2728
    %v3101 = vunpack.c.h.b16 %v2728
    %v3102 = vunpack.c.l.b16 %v2729
    %v3103 = vunpack.c.h.b16 %v2729
    %v3104 = vunpack.c.l.b16 %v2730
    %v3105 = vunpack.c.h.b16 %v2730
    %v3106 = vunpack.c.l.b16 %v2731
    %v3107 = vunpack.c.h.b16 %v2731
    %v3108 = vunpack.c.l.b16 %v2732
    %v3109 = vunpack.c.h.b16 %v2732
    %v3110 = vunpack.c.l.b16 %v2733
    %v3111 = vunpack.c.h.b16 %v2733
    %v3112 = vunpack.c.l.b16 %v2734
    %v3113 = vunpack.c.h.b16 %v2734
    %v3114 = vunpack.c.l.b16 %v2735
    %v3115 = vunpack.c.l.b16 %v2736
    %v3116 = vunpack.c.h.b16 %v2736
    %v3117 = vunpack.c.l.b16 %v2737
    %v3118 = vunpack.c.h.b16 %v2737
    %v3119 = vunpack.c.l.b16 %v2738
    %v3120 = vunpack.c.h.b16 %v2738
    %v3121 = vunpack.c.l.b16 %v2739
    %v3122 = vunpack.c.h.b16 %v2739
    %v3123 = vunpack.c.l.b16 %v2740
    %v3124 = vunpack.c.h.b16 %v2740
    %v3125 = vunpack.c.l.b16 %v2741
    %v3126 = vunpack.c.h.b16 %v2741
    %v3127 = vunpack.c.l.b16 %v2742
    %v3128 = vunpack.c.h.b16 %v2742
    %v3129 = vunpack.c.l.b16 %v2743
    %v3130 = vunpack.c.h.b16 %v2743
    %v3131 = vunpack.c.l.b16 %v2744
    %v3132 = vunpack.c.h.b16 %v2744
    %v3133 = vunpack.c.l.b16 %v2745
    %v3134 = vunpack.c.h.b16 %v2745
    %v3135 = vunpack.c.l.b16 %v2746
    %v3136 = vunpack.c.h.b16 %v2746
    %v3137 = vunpack.c.l.b16 %v2747
    %v3138 = vunpack.c.h.b16 %v2747
    %v3139 = vunpack.c.l.b16 %v2748
    %v3140 = vunpack.c.h.b16 %v2748
    %v3141 = vunpack.c.l.b16 %v2749
    %v3142 = vunpack.c.h.b16 %v2749
    %v3143 = vunpack.c.l.b16 %v2750
    %v3144 = vunpack.c.h.b16 %v2750
    %v3145 = vunpack.c.l.b16 %v2751
    %v3146 = vunpack.c.h.b16 %v2751
    %v3147 = vunpack.c.l.b16 %v2752
    %v3148 = vunpack.c.h.b16 %v2752
    %v3149 = vunpack.c.l.b16 %v2753
    %v3150 = vunpack.c.h.b16 %v2753
    %v3151 = vunpack.c.l.b16 %v2754
    %v3152 = vunpack.c.l.b16 %v2755
    %v3153 = vunpack.c.h.b16 %v2755
    %v3154 = vunpack.c.l.b16 %v2756
    %v3155 = vunpack.c.h.b16 %v2756
    %v3156 = vunpack.c.l.b16 %v2757
    %v3157 = vunpack.c.h.b16 %v2757
    %v3158 = vunpack.c.l.b16 %v2758
    %v3159 = vunpack.c.h.b16 %v2758
    %v3160 = vunpack.c.l.b16 %v2759
    %v3161 = vunpack.c.h.b16 %v2759
    %v3162 = vunpack.c.l.b16 %v2760
    %v3163 = vunpack.c.h.b16 %v2760
    %v3164 = vunpack.c.l.b16 %v2761
    %v3165 = vunpack.c.h.b16 %v2761
    %v3166 = vunpack.c.l.b16 %v2762
    %v3167 = vunpack.c.h.b16 %v2762
    %v3168 = vunpack.c.l.b16 %v2763
    %v3169 = vunpack.c.h.b16 %v2763
    %v3170 = vunpack.c.l.b16 %v2764
    %v3171 = vunpack.c.h.b16 %v2764
    %v3172 = vunpack.c.l.b16 %v2765
    %v3173 = vunpack.c.h.b16 %v2765
    %v3174 = vunpack.c.l.b16 %v2766
    %v3175 = vunpack.c.h.b16 %v2766
    %v3176 = vunpack.c.l.b16 %v2767
    %v3177 = vunpack.c.h.b16 %v2767
    %v3178 = vunpack.c.l.b16 %v2768
    %v3179 = vunpack.c.h.b16 %v2768
    %v3180 = vunpack.c.l.b16 %v2769
    %v3181 = vunpack.c.h.b16 %v2769
    %v3182 = vunpack.c.l.b16 %v2770
    %v3183 = vunpack.c.h.b16 %v2770
    %v3184 = vunpack.c.l.b16 %v2771
    %v3185 = vunpack.c.h.b16 %v2771
    %v3186 = vunpack.c.l.b16 %v2772
    %v3187 = vunpack.c.h.b16 %v2772
    %v3188 = vunpack.c.l.b16 %v2773
    %v3189 = vunpack.c.l.b16 %v2774
    %v3190 = vunpack.c.h.b16 %v2774
    %v3191 = vunpack.c.l.b16 %v2775
    %v3192 = vunpack.c.h.b16 %v2775
    %v3193 = vunpack.c.l.b16 %v2776
    %v3194 = vunpack.c.h.b16 %v2776
    %v3195 = vunpack.c.l.b16 %v2777
    %v3196 = vunpack.c.h.b16 %v2777
    %v3197 = vunpack.c.l.b16 %v2778
    %v3198 = vunpack.c.h.b16 %v2778
    %v3199 = vunpack.c.l.b16 %v2779
    %v3200 = vunpack.c.h.b16 %v2779
    %v3201 = vunpack.c.l.b16 %v2780
    %v3202 = vunpack.c.h.b16 %v2780
    %v3203 = vunpack.c.l.b16 %v2781
    %v3204 = vunpack.c.h.b16 %v2781
    %v3205 = vunpack.c.l.b16 %v2782
    %v3206 = vunpack.c.h.b16 %v2782
    %v3207 = vunpack.c.l.b16 %v2783
    %v3208 = vunpack.c.h.b16 %v2783
    %v3209 = vunpack.c.l.b16 %v2784
    %v3210 = vunpack.c.h.b16 %v2784
    %v3211 = vunpack.c.l.b16 %v2785
    %v3212 = vunpack.c.h.b16 %v2785
    %v3213 = vunpack.c.l.b16 %v2786
    %v3214 = vunpack.c.h.b16 %v2786
    %v3215 = vunpack.c.l.b16 %v2787
    %v3216 = vunpack.c.h.b16 %v2787
    %v3217 = vunpack.c.l.b16 %v2788
    %v3218 = vunpack.c.h.b16 %v2788
    %v3219 = vunpack.c.l.b16 %v2789
    %v3220 = vunpack.c.h.b16 %v2789
    %v3221 = vunpack.c.l.b16 %v2790
    %v3222 = vunpack.c.h.b16 %v2790
    %v3223 = vunpack.c.l.b16 %v2791
    %v3224 = vunpack.c.h.b16 %v2791
    %v3225 = vunpack.c.l.b16 %v2792
    %v3226 = vunpack.c.l.b16 %v2793
    %v3227 = vunpack.c.h.b16 %v2793
    %v3228 = vunpack.c.l.b16 %v2794
    %v3229 = vunpack.c.h.b16 %v2794
    %v3230 = vunpack.c.l.b16 %v2795
    %v3231 = vunpack.c.h.b16 %v2795
    %v3232 = vunpack.c.l.b16 %v2796
    %v3233 = vunpack.c.h.b16 %v2796
    %v3234 = vunpack.c.l.b16 %v2797
    %v3235 = vunpack.c.h.b16 %v2797
    %v3236 = vunpack.c.l.b16 %v2798
    %v3237 = vunpack.c.h.b16 %v2798
    %v3238 = vunpack.c.l.b16 %v2799
    %v3239 = vunpack.c.h.b16 %v2799
    %v3240 = vunpack.c.l.b16 %v2800
    %v3241 = vunpack.c.h.b16 %v2800
    %v3242 = vunpack.c.l.b16 %v2801
    %v3243 = vunpack.c.h.b16 %v2801
    %v3244 = vunpack.c.l.b16 %v2802
    %v3245 = vunpack.c.h.b16 %v2802
    %v3246 = vunpack.c.l.b16 %v2803
    %v3247 = vunpack.c.h.b16 %v2803
    %v3248 = vunpack.c.l.b16 %v2804
    %v3249 = vunpack.c.h.b16 %v2804
    %v3250 = vunpack.c.l.b16 %v2805
    %v3251 = vunpack.c.h.b16 %v2805
    %v3252 = vunpack.c.l.b16 %v2806
    %v3253 = vunpack.c.h.b16 %v2806
    %v3254 = vunpack.c.l.b16 %v2807
    %v3255 = vunpack.c.h.b16 %v2807
    %v3256 = vunpack.c.l.b16 %v2808
    %v3257 = vunpack.c.h.b16 %v2808
    %v3258 = vunpack.c.l.b16 %v2809
    %v3259 = vunpack.c.h.b16 %v2809
    %v3260 = vunpack.c.l.b16 %v2810
    %v3261 = vunpack.c.h.b16 %v2810
    %v3262 = vunpack.c.l.b16 %v2811
    %v3263 = vpack.c.b16 %v3004, %v2967
    %v3264 = vpack.c.b16 %v3005, %v2968
    %v3265 = vpack.c.b16 %v3006, %v2969
    %v3266 = vpack.c.b16 %v3007, %v2970
    %v3267 = vpack.c.b16 %v3008, %v2971
    %v3268 = vpack.c.b16 %v3009, %v2972
    %v3269 = vpack.c.b16 %v3010, %v2973
    %v3270 = vpack.c.b16 %v3011, %v2974
    %v3271 = vpack.c.b16 %v3012, %v2975
    %v3272 = vpack.c.b16 %v3013, %v2976
    %v3273 = vpack.c.b16 %v3014, %v2977
    %v3274 = vpack.c.b16 %v3015, %v2978
    %v3275 = vpack.c.b16 %v3016, %v2979
    %v3276 = vpack.c.b16 %v3017, %v2980
    %v3277 = vpack.c.b16 %v3018, %v2981
    %v3278 = vpack.c.b16 %v3019, %v2982
    %v3279 = vpack.c.b16 %v3020, %v2983
    %v3280 = vpack.c.b16 %v3021, %v2984
    %v3281 = vpack.c.b16 %v3022, %v2985
    %v3282 = vpack.c.b16 %v3023, %v2986
    %v3283 = vpack.c.b16 %v3024, %v2987
    %v3284 = vpack.c.b16 %v3025, %v2988
    %v3285 = vpack.c.b16 %v3026, %v2989
    %v3286 = vpack.c.b16 %v3027, %v2990
    %v3287 = vpack.c.b16 %v3028, %v2991
    %v3288 = vpack.c.b16 %v3029, %v2992
    %v3289 = vpack.c.b16 %v3030, %v2993
    %v3290 = vpack.c.b16 %v3031, %v2994
    %v3291 = vpack.c.b16 %v3032, %v2995
    %v3292 = vpack.c.b16 %v3033, %v2996
    %v3293 = vpack.c.b16 %v3034, %v2997
    %v3294 = vpack.c.b16 %v3035, %v2998
    %v3295 = vpack.c.b16 %v3036, %v2999
    %v3296 = vpack.c.b16 %v3037, %v3000
    %v3297 = vpack.c.b16 %v3038, %v3001
    %v3298 = vpack.c.b16 %v3039, %v3002
    %v3299 = vpack.c.b16 %v3040, %v3003
    %v3300 = vpack.c.b16 %v3078, %v3041
    %v3301 = vpack.c.b16 %v3079, %v3042
    %v3302 = vpack.c.b16 %v3080, %v3043
    %v3303 = vpack.c.b16 %v3081, %v3044
    %v3304 = vpack.c.b16 %v3082, %v3045
    %v3305 = vpack.c.b16 %v3083, %v3046
    %v3306 = vpack.c.b16 %v3084, %v3047
    %v3307 = vpack.c.b16 %v3085, %v3048
    %v3308 = vpack.c.b16 %v3086, %v3049
    %v3309 = vpack.c.b16 %v3087, %v3050
    %v3310 = vpack.c.b16 %v3088, %v3051
    %v3311 = vpack.c.b16 %v3089, %v3052
    %v3312 = vpack.c.b16 %v3090, %v3053
    %v3313 = vpack.c.b16 %v3091, %v3054
    %v3314 = vpack.c.b16 %v3092, %v3055
    %v3315 = vpack.c.b16 %v3093, %v3056
    %v3316 = vpack.c.b16 %v3094, %v3057
    %v3317 = vpack.c.b16 %v3095, %v3058
    %v3318 = vpack.c.b16 %v3096, %v3059
    %v3319 = vpack.c.b16 %v3097, %v3060
    %v3320 = vpack.c.b16 %v3098, %v3061
    %v3321 = vpack.c.b16 %v3099, %v3062
    %v3322 = vpack.c.b16 %v3100, %v3063
    %v3323 = vpack.c.b16 %v3101, %v3064
    %v3324 = vpack.c.b16 %v3102, %v3065
    %v3325 = vpack.c.b16 %v3103, %v3066
    %v3326 = vpack.c.b16 %v3104, %v3067
    %v3327 = vpack.c.b16 %v3105, %v3068
    %v3328 = vpack.c.b16 %v3106, %v3069
    %v3329 = vpack.c.b16 %v3107, %v3070
    %v3330 = vpack.c.b16 %v3108, %v3071
    %v3331 = vpack.c.b16 %v3109, %v3072
    %v3332 = vpack.c.b16 %v3110, %v3073
    %v3333 = vpack.c.b16 %v3111, %v3074
    %v3334 = vpack.c.b16 %v3112, %v3075
    %v3335 = vpack.c.b16 %v3113, %v3076
    %v3336 = vpack.c.b16 %v3114, %v3077
    %v3337 = vpack.c.b16 %v3152, %v3115
    %v3338 = vpack.c.b16 %v3153, %v3116
    %v3339 = vpack.c.b16 %v3154, %v3117
    %v3340 = vpack.c.b16 %v3155, %v3118
    %v3341 = vpack.c.b16 %v3156, %v3119
    %v3342 = vpack.c.b16 %v3157, %v3120
    %v3343 = vpack.c.b16 %v3158, %v3121
    %v3344 = vpack.c.b16 %v3159, %v3122
    %v3345 = vpack.c.b16 %v3160, %v3123
    %v3346 = vpack.c.b16 %v3161, %v3124
    %v3347 = vpack.c.b16 %v3162, %v3125
    %v3348 = vpack.c.b16 %v3163, %v3126
    %v3349 = vpack.c.b16 %v3164, %v3127
    %v3350 = vpack.c.b16 %v3165, %v3128
    %v3351 = vpack.c.b16 %v3166, %v3129
    %v3352 = vpack.c.b16 %v3167, %v3130
    %v3353 = vpack.c.b16 %v3168, %v3131
    %v3354 = vpack.c.b16 %v3169, %v3132
    %v3355 = vpack.c.b16 %v3170, %v3133
    %v3356 = vpack.c.b16 %v3171, %v3134
    %v3357 = vpack.c.b16 %v3172, %v3135
    %v3358 = vpack.c.b16 %v3173, %v3136
    %v3359 = vpack.c.b16 %v3174, %v3137
    %v3360 = vpack.c.b16 %v3175, %v3138
    %v3361 = vpack.c.b16 %v3176, %v3139
    %v3362 = vpack.c.b16 %v3177, %v3140
    %v3363 = vpack.c.b16 %v3178, %v3141
    %v3364 = vpack.c.b16 %v3179, %v3142
    %v3365 = vpack.c.b16 %v3180, %v3143
    %v3366 = vpack.c.b16 %v3181, %v3144
    %v3367 = vpack.c.b16 %v3182, %v3145
    %v3368 = vpack.c.b16 %v3183, %v3146
    %v3369 = vpack.c.b16 %v3184, %v3147
    %v3370 = vpack.c.b16 %v3185, %v3148
    %v3371 = vpack.c.b16 %v3186, %v3149
    %v3372 = vpack.c.b16 %v3187, %v3150
    %v3373 = vpack.c.b16 %v3188, %v3151
    %v3374 = vpack.c.b16 %v3226, %v3189
    %v3375 = vpack.c.b16 %v3227, %v3190
    %v3376 = vpack.c.b16 %v3228, %v3191
    %v3377 = vpack.c.b16 %v3229, %v3192
    %v3378 = vpack.c.b16 %v3230, %v3193
    %v3379 = vpack.c.b16 %v3231, %v3194
    %v3380 = vpack.c.b16 %v3232, %v3195
    %v3381 = vpack.c.b16 %v3233, %v3196
    %v3382 = vpack.c.b16 %v3234, %v3197
    %v3383 = vpack.c.b16 %v3235, %v3198
    %v3384 = vpack.c.b16 %v3236, %v3199
    %v3385 = vpack.c.b16 %v3237, %v3200
    %v3386 = vpack.c.b16 %v3238, %v3201
    %v3387 = vpack.c.b16 %v3239, %v3202
    %v3388 = vpack.c.b16 %v3240, %v3203
    %v3389 = vpack.c.b16 %v3241, %v3204
    %v3390 = vpack.c.b16 %v3242, %v3205
    %v3391 = vpack.c.b16 %v3243, %v3206
    %v3392 = vpack.c.b16 %v3244, %v3207
    %v3393 = vpack.c.b16 %v3245, %v3208
    %v3394 = vpack.c.b16 %v3246, %v3209
    %v3395 = vpack.c.b16 %v3247, %v3210
    %v3396 = vpack.c.b16 %v3248, %v3211
    %v3397 = vpack.c.b16 %v3249, %v3212
    %v3398 = vpack.c.b16 %v3250, %v3213
    %v3399 = vpack.c.b16 %v3251, %v3214
    %v3400 = vpack.c.b16 %v3252, %v3215
    %v3401 = vpack.c.b16 %v3253, %v3216
    %v3402 = vpack.c.b16 %v3254, %v3217
    %v3403 = vpack.c.b16 %v3255, %v3218
    %v3404 = vpack.c.b16 %v3256, %v3219
    %v3405 = vpack.c.b16 %v3257, %v3220
    %v3406 = vpack.c.b16 %v3258, %v3221
    %v3407 = vpack.c.b16 %v3259, %v3222
    %v3408 = vpack.c.b16 %v3260, %v3223
    %v3409 = vpack.c.b16 %v3261, %v3224
    %v3410 = vpack.c.b16 %v3262, %v3225
    %v3560 = vsel %vm2270, %v2813, 0
    %3562 = vmatprep.subr.bf16.mxu0 %v3264
    %3563 = vmatpush1.bf16.msra.mxu0 %v3263
    %3564 = vmatprep.subr.bf16.mxu0 %v3301
    %3565 = vmatpush1.bf16.msra.mxu0 %v3300
    %3566 = vmatprep.subr.bf16.mxu0 %v3338
    %3567 = vmatpush1.bf16.msra.mxu0 %v3337
    %3568 = vmatprep.subr.bf16.mxu0 %v3375
    %3569 = vmatpush1.bf16.msra.mxu0 %v3374
    %3570 = vmatprep.subr.bf16.mxu0 0
    %3571 = vmatpush1.bf16.msra.mxu0 0
    %3572 = vmatprep.subr.bf16.mxu0 0
    %3573 = vmatpush1.bf16.msra.mxu0 0
    %3574 = vmatprep.subr.bf16.mxu0 0
    %3575 = vmatpush1.bf16.msra.mxu0 0
    %3576 = vmatprep.subr.bf16.mxu0 0
    %3577 = vmatpush1.bf16.msra.mxu0 0
    %3578 = vmatprep.subr.bf16.mxu0 0
    %3579 = vmatpush1.bf16.msra.mxu0 0
    %3580 = vmatprep.subr.bf16.mxu0 0
    %3581 = vmatpush1.bf16.msra.mxu0 0
    %3582 = vmatprep.subr.bf16.mxu0 0
    %3583 = vmatpush1.bf16.msra.mxu0 0
    %3584 = vmatprep.subr.bf16.mxu0 0
    %3585 = vmatpush1.bf16.msra.mxu0 0
    %3586 = vmatprep.subr.bf16.mxu0 0
    %3587 = vmatpush1.bf16.msra.mxu0 0
    %3588 = vmatprep.subr.bf16.mxu0 0
    %3589 = vmatpush1.bf16.msra.mxu0 0
    %3590 = vmatprep.subr.bf16.mxu0 0
    %3591 = vmatpush1.bf16.msra.mxu0 0
    %3592 = vmatprep.subr.bf16.mxu0 0
    %3593 = vmatpush1.bf16.msra.mxu0 0
    %3594 = vmatprep.mubr.bf16.mxu0 0
    %3595 = vmatmul.mubr.bf16.gmra.mrb[0].mxu0 %v3560
    %v3596 = vpop.f32.mrb[0].mxu0
    %v3597 = vadd.f32 0.0, %v3596
    %v3598 = vpop.f32.mrb[0].mxu0
    %v3599 = vadd.f32 0.0, %v3598
    %v3600 = vpop.f32.mrb[0].mxu0
    %v3601 = vpop.f32.mrb[0].mxu0
    %3602 = vdwg.mxu0
    %3603 = vmatprep.subr.bf16.mxu0 %v3266
    %3604 = vmatpush1.bf16.msra.mxu0 %v3265
    %3605 = vmatprep.subr.bf16.mxu0 %v3303
    %3606 = vmatpush1.bf16.msra.mxu0 %v3302
    %3607 = vmatprep.subr.bf16.mxu0 %v3340
    %3608 = vmatpush1.bf16.msra.mxu0 %v3339
    %3609 = vmatprep.subr.bf16.mxu0 %v3377
    %3610 = vmatpush1.bf16.msra.mxu0 %v3376
    %3611 = vmatprep.subr.bf16.mxu0 0
    %3612 = vmatpush1.bf16.msra.mxu0 0
    %3613 = vmatprep.subr.bf16.mxu0 0
    %3614 = vmatpush1.bf16.msra.mxu0 0
    %3615 = vmatprep.subr.bf16.mxu0 0
    %3616 = vmatpush1.bf16.msra.mxu0 0
    %3617 = vmatprep.subr.bf16.mxu0 0
    %3618 = vmatpush1.bf16.msra.mxu0 0
    %3619 = vmatprep.subr.bf16.mxu0 0
    %3620 = vmatpush1.bf16.msra.mxu0 0
    %3621 = vmatprep.subr.bf16.mxu0 0
    %3622 = vmatpush1.bf16.msra.mxu0 0
    %3623 = vmatprep.subr.bf16.mxu0 0
    %3624 = vmatpush1.bf16.msra.mxu0 0
    %3625 = vmatprep.subr.bf16.mxu0 0
    %3626 = vmatpush1.bf16.msra.mxu0 0
    %3627 = vmatprep.subr.bf16.mxu0 0
    %3628 = vmatpush1.bf16.msra.mxu0 0
    %3629 = vmatprep.subr.bf16.mxu0 0
    %3630 = vmatpush1.bf16.msra.mxu0 0
    %3631 = vmatprep.subr.bf16.mxu0 0
    %3632 = vmatpush1.bf16.msra.mxu0 0
    %3633 = vmatprep.subr.bf16.mxu0 0
    %3634 = vmatpush1.bf16.msra.mxu0 0
    %3635 = vmatprep.mubr.bf16.mxu0 0
    %3636 = vmatmul.mubr.bf16.gmra.mrb[0].mxu0 %v3560
    %v3637 = vpop.f32.mrb[0].mxu0
    %v3638 = vadd.f32 0.0, %v3637
    %v3639 = vpop.f32.mrb[0].mxu0
    %v3640 = vadd.f32 0.0, %v3639
    %v3641 = vpop.f32.mrb[0].mxu0
    %v3642 = vpop.f32.mrb[0].mxu0
    %3643 = vdwg.mxu0
    %3644 = vmatprep.subr.bf16.mxu0 %v3268
    %3645 = vmatpush1.bf16.msra.mxu0 %v3267
    %3646 = vmatprep.subr.bf16.mxu0 %v3305
    %3647 = vmatpush1.bf16.msra.mxu0 %v3304
    %3648 = vmatprep.subr.bf16.mxu0 %v3342
    %3649 = vmatpush1.bf16.msra.mxu0 %v3341
    %3650 = vmatprep.subr.bf16.mxu0 %v3379
    %3651 = vmatpush1.bf16.msra.mxu0 %v3378
    %3652 = vmatprep.subr.bf16.mxu0 0
    %3653 = vmatpush1.bf16.msra.mxu0 0
    %3654 = vmatprep.subr.bf16.mxu0 0
    %3655 = vmatpush1.bf16.msra.mxu0 0
    %3656 = vmatprep.subr.bf16.mxu0 0
    %3657 = vmatpush1.bf16.msra.mxu0 0
    %3658 = vmatprep.subr.bf16.mxu0 0
    %3659 = vmatpush1.bf16.msra.mxu0 0
    %3660 = vmatprep.subr.bf16.mxu0 0
    %3661 = vmatpush1.bf16.msra.mxu0 0
    %3662 = vmatprep.subr.bf16.mxu0 0
    %3663 = vmatpush1.bf16.msra.mxu0 0
    %3664 = vmatprep.subr.bf16.mxu0 0
    %3665 = vmatpush1.bf16.msra.mxu0 0
    %3666 = vmatprep.subr.bf16.mxu0 0
    %3667 = vmatpush1.bf16.msra.mxu0 0
    %3668 = vmatprep.subr.bf16.mxu0 0
    %3669 = vmatpush1.bf16.msra.mxu0 0
    %3670 = vmatprep.subr.bf16.mxu0 0
    %3671 = vmatpush1.bf16.msra.mxu0 0
    %3672 = vmatprep.subr.bf16.mxu0 0
    %3673 = vmatpush1.bf16.msra.mxu0 0
    %3674 = vmatprep.subr.bf16.mxu0 0
    %3675 = vmatpush1.bf16.msra.mxu0 0
    %3676 = vmatprep.mubr.bf16.mxu0 0
    %3677 = vmatmul.mubr.bf16.gmra.mrb[0].mxu0 %v3560
    %v3678 = vpop.f32.mrb[0].mxu0
    %v3679 = vadd.f32 0.0, %v3678
    %v3680 = vpop.f32.mrb[0].mxu0
    %v3681 = vadd.f32 0.0, %v3680
    %v3682 = vpop.f32.mrb[0].mxu0
    %v3683 = vpop.f32.mrb[0].mxu0
    %3684 = vdwg.mxu0
    %3685 = vmatprep.subr.bf16.mxu0 %v3270
    %3686 = vmatpush1.bf16.msra.mxu0 %v3269
    %3687 = vmatprep.subr.bf16.mxu0 %v3307
    %3688 = vmatpush1.bf16.msra.mxu0 %v3306
    %3689 = vmatprep.subr.bf16.mxu0 %v3344
    %3690 = vmatpush1.bf16.msra.mxu0 %v3343
    %3691 = vmatprep.subr.bf16.mxu0 %v3381
    %3692 = vmatpush1.bf16.msra.mxu0 %v3380
    %3693 = vmatprep.subr.bf16.mxu0 0
    %3694 = vmatpush1.bf16.msra.mxu0 0
    %3695 = vmatprep.subr.bf16.mxu0 0
    %3696 = vmatpush1.bf16.msra.mxu0 0
    %3697 = vmatprep.subr.bf16.mxu0 0
    %3698 = vmatpush1.bf16.msra.mxu0 0
    %3699 = vmatprep.subr.bf16.mxu0 0
    %3700 = vmatpush1.bf16.msra.mxu0 0
    %3701 = vmatprep.subr.bf16.mxu0 0
    %3702 = vmatpush1.bf16.msra.mxu0 0
    %3703 = vmatprep.subr.bf16.mxu0 0
    %3704 = vmatpush1.bf16.msra.mxu0 0
    %3705 = vmatprep.subr.bf16.mxu0 0
    %3706 = vmatpush1.bf16.msra.mxu0 0
    %3707 = vmatprep.subr.bf16.mxu0 0
    %3708 = vmatpush1.bf16.msra.mxu0 0
    %3709 = vmatprep.subr.bf16.mxu0 0
    %3710 = vmatpush1.bf16.msra.mxu0 0
    %3711 = vmatprep.subr.bf16.mxu0 0
    %3712 = vmatpush1.bf16.msra.mxu0 0
    %3713 = vmatprep.subr.bf16.mxu0 0
    %3714 = vmatpush1.bf16.msra.mxu0 0
    %3715 = vmatprep.subr.bf16.mxu0 0
    %3716 = vmatpush1.bf16.msra.mxu0 0
    %3717 = vmatprep.mubr.bf16.mxu0 0
    %3718 = vmatmul.mubr.bf16.gmra.mrb[0].mxu0 %v3560
    %v3719 = vpop.f32.mrb[0].mxu0
    %v3720 = vadd.f32 0.0, %v3719
    %v3721 = vpop.f32.mrb[0].mxu0
    %v3722 = vadd.f32 0.0, %v3721
    %v3723 = vpop.f32.mrb[0].mxu0
    %v3724 = vpop.f32.mrb[0].mxu0
    %3725 = vdwg.mxu0
    %3726 = vmatprep.subr.bf16.mxu0 %v3272
    %3727 = vmatpush1.bf16.msra.mxu0 %v3271
    %3728 = vmatprep.subr.bf16.mxu0 %v3309
    %3729 = vmatpush1.bf16.msra.mxu0 %v3308
    %3730 = vmatprep.subr.bf16.mxu0 %v3346
    %3731 = vmatpush1.bf16.msra.mxu0 %v3345
    %3732 = vmatprep.subr.bf16.mxu0 %v3383
    %3733 = vmatpush1.bf16.msra.mxu0 %v3382
    %3734 = vmatprep.subr.bf16.mxu0 0
    %3735 = vmatpush1.bf16.msra.mxu0 0
    %3736 = vmatprep.subr.bf16.mxu0 0
    %3737 = vmatpush1.bf16.msra.mxu0 0
    %3738 = vmatprep.subr.bf16.mxu0 0
    %3739 = vmatpush1.bf16.msra.mxu0 0
    %3740 = vmatprep.subr.bf16.mxu0 0
    %3741 = vmatpush1.bf16.msra.mxu0 0
    %3742 = vmatprep.subr.bf16.mxu0 0
    %3743 = vmatpush1.bf16.msra.mxu0 0
    %3744 = vmatprep.subr.bf16.mxu0 0
    %3745 = vmatpush1.bf16.msra.mxu0 0
    %3746 = vmatprep.subr.bf16.mxu0 0
    %3747 = vmatpush1.bf16.msra.mxu0 0
    %3748 = vmatprep.subr.bf16.mxu0 0
    %3749 = vmatpush1.bf16.msra.mxu0 0
    %3750 = vmatprep.subr.bf16.mxu0 0
    %3751 = vmatpush1.bf16.msra.mxu0 0
    %3752 = vmatprep.subr.bf16.mxu0 0
    %3753 = vmatpush1.bf16.msra.mxu0 0
    %3754 = vmatprep.subr.bf16.mxu0 0
    %3755 = vmatpush1.bf16.msra.mxu0 0
    %3756 = vmatprep.subr.bf16.mxu0 0
    %3757 = vmatpush1.bf16.msra.mxu0 0
    %3758 = vmatprep.mubr.bf16.mxu0 0
    %3759 = vmatmul.mubr.bf16.gmra.mrb[0].mxu0 %v3560
    %v3760 = vpop.f32.mrb[0].mxu0
    %v3761 = vadd.f32 0.0, %v3760
    %v3762 = vpop.f32.mrb[0].mxu0
    %v3763 = vadd.f32 0.0, %v3762
    %v3764 = vpop.f32.mrb[0].mxu0
    %v3765 = vpop.f32.mrb[0].mxu0
    %3766 = vdwg.mxu0
    %3767 = vmatprep.subr.bf16.mxu0 %v3274
    %3768 = vmatpush1.bf16.msra.mxu0 %v3273
    %3769 = vmatprep.subr.bf16.mxu0 %v3311
    %3770 = vmatpush1.bf16.msra.mxu0 %v3310
    %3771 = vmatprep.subr.bf16.mxu0 %v3348
    %3772 = vmatpush1.bf16.msra.mxu0 %v3347
    %3773 = vmatprep.subr.bf16.mxu0 %v3385
    %3774 = vmatpush1.bf16.msra.mxu0 %v3384
    %3775 = vmatprep.subr.bf16.mxu0 0
    %3776 = vmatpush1.bf16.msra.mxu0 0
    %3777 = vmatprep.subr.bf16.mxu0 0
    %3778 = vmatpush1.bf16.msra.mxu0 0
    %3779 = vmatprep.subr.bf16.mxu0 0
    %3780 = vmatpush1.bf16.msra.mxu0 0
    %3781 = vmatprep.subr.bf16.mxu0 0
    %3782 = vmatpush1.bf16.msra.mxu0 0
    %3783 = vmatprep.subr.bf16.mxu0 0
    %3784 = vmatpush1.bf16.msra.mxu0 0
    %3785 = vmatprep.subr.bf16.mxu0 0
    %3786 = vmatpush1.bf16.msra.mxu0 0
    %3787 = vmatprep.subr.bf16.mxu0 0
    %3788 = vmatpush1.bf16.msra.mxu0 0
    %3789 = vmatprep.subr.bf16.mxu0 0
    %3790 = vmatpush1.bf16.msra.mxu0 0
    %3791 = vmatprep.subr.bf16.mxu0 0
    %3792 = vmatpush1.bf16.msra.mxu0 0
    %3793 = vmatprep.subr.bf16.mxu0 0
    %3794 = vmatpush1.bf16.msra.mxu0 0
    %3795 = vmatprep.subr.bf16.mxu0 0
    %3796 = vmatpush1.bf16.msra.mxu0 0
    %3797 = vmatprep.subr.bf16.mxu0 0
    %3798 = vmatpush1.bf16.msra.mxu0 0
    %3799 = vmatprep.mubr.bf16.mxu0 0
    %3800 = vmatmul.mubr.bf16.gmra.mrb[0].mxu0 %v3560
    %v3801 = vpop.f32.mrb[0].mxu0
    %v3802 = vadd.f32 0.0, %v3801
    %v3803 = vpop.f32.mrb[0].mxu0
    %v3804 = vadd.f32 0.0, %v3803
    %v3805 = vpop.f32.mrb[0].mxu0
    %v3806 = vpop.f32.mrb[0].mxu0
    %3807 = vdwg.mxu0
    %3808 = vmatprep.subr.bf16.mxu0 %v3276
    %3809 = vmatpush1.bf16.msra.mxu0 %v3275
    %3810 = vmatprep.subr.bf16.mxu0 %v3313
    %3811 = vmatpush1.bf16.msra.mxu0 %v3312
    %3812 = vmatprep.subr.bf16.mxu0 %v3350
    %3813 = vmatpush1.bf16.msra.mxu0 %v3349
    %3814 = vmatprep.subr.bf16.mxu0 %v3387
    %3815 = vmatpush1.bf16.msra.mxu0 %v3386
    %3816 = vmatprep.subr.bf16.mxu0 0
    %3817 = vmatpush1.bf16.msra.mxu0 0
    %3818 = vmatprep.subr.bf16.mxu0 0
    %3819 = vmatpush1.bf16.msra.mxu0 0
    %3820 = vmatprep.subr.bf16.mxu0 0
    %3821 = vmatpush1.bf16.msra.mxu0 0
    %3822 = vmatprep.subr.bf16.mxu0 0
    %3823 = vmatpush1.bf16.msra.mxu0 0
    %3824 = vmatprep.subr.bf16.mxu0 0
    %3825 = vmatpush1.bf16.msra.mxu0 0
    %3826 = vmatprep.subr.bf16.mxu0 0
    %3827 = vmatpush1.bf16.msra.mxu0 0
    %3828 = vmatprep.subr.bf16.mxu0 0
    %3829 = vmatpush1.bf16.msra.mxu0 0
    %3830 = vmatprep.subr.bf16.mxu0 0
    %3831 = vmatpush1.bf16.msra.mxu0 0
    %3832 = vmatprep.subr.bf16.mxu0 0
    %3833 = vmatpush1.bf16.msra.mxu0 0
    %3834 = vmatprep.subr.bf16.mxu0 0
    %3835 = vmatpush1.bf16.msra.mxu0 0
    %3836 = vmatprep.subr.bf16.mxu0 0
    %3837 = vmatpush1.bf16.msra.mxu0 0
    %3838 = vmatprep.subr.bf16.mxu0 0
    %3839 = vmatpush1.bf16.msra.mxu0 0
    %3840 = vmatprep.mubr.bf16.mxu0 0
    %3841 = vmatmul.mubr.bf16.gmra.mrb[0].mxu0 %v3560
    %v3842 = vpop.f32.mrb[0].mxu0
    %v3843 = vadd.f32 0.0, %v3842
    %v3844 = vpop.f32.mrb[0].mxu0
    %v3845 = vadd.f32 0.0, %v3844
    %v3846 = vpop.f32.mrb[0].mxu0
    %v3847 = vpop.f32.mrb[0].mxu0
    %3848 = vdwg.mxu0
    %3849 = vmatprep.subr.bf16.mxu0 %v3278
    %3850 = vmatpush1.bf16.msra.mxu0 %v3277
    %3851 = vmatprep.subr.bf16.mxu0 %v3315
    %3852 = vmatpush1.bf16.msra.mxu0 %v3314
    %3853 = vmatprep.subr.bf16.mxu0 %v3352
    %3854 = vmatpush1.bf16.msra.mxu0 %v3351
    %3855 = vmatprep.subr.bf16.mxu0 %v3389
    %3856 = vmatpush1.bf16.msra.mxu0 %v3388
    %3857 = vmatprep.subr.bf16.mxu0 0
    %3858 = vmatpush1.bf16.msra.mxu0 0
    %3859 = vmatprep.subr.bf16.mxu0 0
    %3860 = vmatpush1.bf16.msra.mxu0 0
    %3861 = vmatprep.subr.bf16.mxu0 0
    %3862 = vmatpush1.bf16.msra.mxu0 0
    %3863 = vmatprep.subr.bf16.mxu0 0
    %3864 = vmatpush1.bf16.msra.mxu0 0
    %3865 = vmatprep.subr.bf16.mxu0 0
    %3866 = vmatpush1.bf16.msra.mxu0 0
    %3867 = vmatprep.subr.bf16.mxu0 0
    %3868 = vmatpush1.bf16.msra.mxu0 0
    %3869 = vmatprep.subr.bf16.mxu0 0
    %3870 = vmatpush1.bf16.msra.mxu0 0
    %3871 = vmatprep.subr.bf16.mxu0 0
    %3872 = vmatpush1.bf16.msra.mxu0 0
    %3873 = vmatprep.subr.bf16.mxu0 0
    %3874 = vmatpush1.bf16.msra.mxu0 0
    %3875 = vmatprep.subr.bf16.mxu0 0
    %3876 = vmatpush1.bf16.msra.mxu0 0
    %3877 = vmatprep.subr.bf16.mxu0 0
    %3878 = vmatpush1.bf16.msra.mxu0 0
    %3879 = vmatprep.subr.bf16.mxu0 0
    %3880 = vmatpush1.bf16.msra.mxu0 0
    %3881 = vmatprep.mubr.bf16.mxu0 0
    %3882 = vmatmul.mubr.bf16.gmra.mrb[0].mxu0 %v3560
    %v3883 = vpop.f32.mrb[0].mxu0
    %v3884 = vadd.f32 0.0, %v3883
    %v3885 = vpop.f32.mrb[0].mxu0
    %v3886 = vadd.f32 0.0, %v3885
    %v3887 = vpop.f32.mrb[0].mxu0
    %v3888 = vpop.f32.mrb[0].mxu0
    %3889 = vdwg.mxu0
    %3890 = vmatprep.subr.bf16.mxu0 %v3280
    %3891 = vmatpush1.bf16.msra.mxu0 %v3279
    %3892 = vmatprep.subr.bf16.mxu0 %v3317
    %3893 = vmatpush1.bf16.msra.mxu0 %v3316
    %3894 = vmatprep.subr.bf16.mxu0 %v3354
    %3895 = vmatpush1.bf16.msra.mxu0 %v3353
    %3896 = vmatprep.subr.bf16.mxu0 %v3391
    %3897 = vmatpush1.bf16.msra.mxu0 %v3390
    %3898 = vmatprep.subr.bf16.mxu0 0
    %3899 = vmatpush1.bf16.msra.mxu0 0
    %3900 = vmatprep.subr.bf16.mxu0 0
    %3901 = vmatpush1.bf16.msra.mxu0 0
    %3902 = vmatprep.subr.bf16.mxu0 0
    %3903 = vmatpush1.bf16.msra.mxu0 0
    %3904 = vmatprep.subr.bf16.mxu0 0
    %3905 = vmatpush1.bf16.msra.mxu0 0
    %3906 = vmatprep.subr.bf16.mxu0 0
    %3907 = vmatpush1.bf16.msra.mxu0 0
    %3908 = vmatprep.subr.bf16.mxu0 0
    %3909 = vmatpush1.bf16.msra.mxu0 0
    %3910 = vmatprep.subr.bf16.mxu0 0
    %3911 = vmatpush1.bf16.msra.mxu0 0
    %3912 = vmatprep.subr.bf16.mxu0 0
    %3913 = vmatpush1.bf16.msra.mxu0 0
    %3914 = vmatprep.subr.bf16.mxu0 0
    %3915 = vmatpush1.bf16.msra.mxu0 0
    %3916 = vmatprep.subr.bf16.mxu0 0
    %3917 = vmatpush1.bf16.msra.mxu0 0
    %3918 = vmatprep.subr.bf16.mxu0 0
    %3919 = vmatpush1.bf16.msra.mxu0 0
    %3920 = vmatprep.subr.bf16.mxu0 0
    %3921 = vmatpush1.bf16.msra.mxu0 0
    %3922 = vmatprep.mubr.bf16.mxu0 0
    %3923 = vmatmul.mubr.bf16.gmra.mrb[0].mxu0 %v3560
    %v3924 = vpop.f32.mrb[0].mxu0
    %v3925 = vadd.f32 0.0, %v3924
    %v3926 = vpop.f32.mrb[0].mxu0
    %v3927 = vadd.f32 0.0, %v3926
    %v3928 = vpop.f32.mrb[0].mxu0
    %v3929 = vpop.f32.mrb[0].mxu0
    %3930 = vdwg.mxu0
    %3931 = vmatprep.subr.bf16.mxu0 %v3282
    %3932 = vmatpush1.bf16.msra.mxu0 %v3281
    %3933 = vmatprep.subr.bf16.mxu0 %v3319
    %3934 = vmatpush1.bf16.msra.mxu0 %v3318
    %3935 = vmatprep.subr.bf16.mxu0 %v3356
    %3936 = vmatpush1.bf16.msra.mxu0 %v3355
    %3937 = vmatprep.subr.bf16.mxu0 %v3393
    %3938 = vmatpush1.bf16.msra.mxu0 %v3392
    %3939 = vmatprep.subr.bf16.mxu0 0
    %3940 = vmatpush1.bf16.msra.mxu0 0
    %3941 = vmatprep.subr.bf16.mxu0 0
    %3942 = vmatpush1.bf16.msra.mxu0 0
    %3943 = vmatprep.subr.bf16.mxu0 0
    %3944 = vmatpush1.bf16.msra.mxu0 0
    %3945 = vmatprep.subr.bf16.mxu0 0
    %3946 = vmatpush1.bf16.msra.mxu0 0
    %3947 = vmatprep.subr.bf16.mxu0 0
    %3948 = vmatpush1.bf16.msra.mxu0 0
    %3949 = vmatprep.subr.bf16.mxu0 0
    %3950 = vmatpush1.bf16.msra.mxu0 0
    %3951 = vmatprep.subr.bf16.mxu0 0
    %3952 = vmatpush1.bf16.msra.mxu0 0
    %3953 = vmatprep.subr.bf16.mxu0 0
    %3954 = vmatpush1.bf16.msra.mxu0 0
    %3955 = vmatprep.subr.bf16.mxu0 0
    %3956 = vmatpush1.bf16.msra.mxu0 0
    %3957 = vmatprep.subr.bf16.mxu0 0
    %3958 = vmatpush1.bf16.msra.mxu0 0
    %3959 = vmatprep.subr.bf16.mxu0 0
    %3960 = vmatpush1.bf16.msra.mxu0 0
    %3961 = vmatprep.subr.bf16.mxu0 0
    %3962 = vmatpush1.bf16.msra.mxu0 0
    %3963 = vmatprep.mubr.bf16.mxu0 0
    %3964 = vmatmul.mubr.bf16.gmra.mrb[0].mxu0 %v3560
    %v3965 = vpop.f32.mrb[0].mxu0
    %v3966 = vadd.f32 0.0, %v3965
    %v3967 = vpop.f32.mrb[0].mxu0
    %v3968 = vadd.f32 0.0, %v3967
    %v3969 = vpop.f32.mrb[0].mxu0
    %v3970 = vpop.f32.mrb[0].mxu0
    %3971 = vdwg.mxu0
    %3972 = vmatprep.subr.bf16.mxu0 %v3284
    %3973 = vmatpush1.bf16.msra.mxu0 %v3283
    %3974 = vmatprep.subr.bf16.mxu0 %v3321
    %3975 = vmatpush1.bf16.msra.mxu0 %v3320
    %3976 = vmatprep.subr.bf16.mxu0 %v3358
    %3977 = vmatpush1.bf16.msra.mxu0 %v3357
    %3978 = vmatprep.subr.bf16.mxu0 %v3395
    %3979 = vmatpush1.bf16.msra.mxu0 %v3394
    %3980 = vmatprep.subr.bf16.mxu0 0
    %3981 = vmatpush1.bf16.msra.mxu0 0
    %3982 = vmatprep.subr.bf16.mxu0 0
    %3983 = vmatpush1.bf16.msra.mxu0 0
    %3984 = vmatprep.subr.bf16.mxu0 0
    %3985 = vmatpush1.bf16.msra.mxu0 0
    %3986 = vmatprep.subr.bf16.mxu0 0
    %3987 = vmatpush1.bf16.msra.mxu0 0
    %3988 = vmatprep.subr.bf16.mxu0 0
    %3989 = vmatpush1.bf16.msra.mxu0 0
    %3990 = vmatprep.subr.bf16.mxu0 0
    %3991 = vmatpush1.bf16.msra.mxu0 0
    %3992 = vmatprep.subr.bf16.mxu0 0
    %3993 = vmatpush1.bf16.msra.mxu0 0
    %3994 = vmatprep.subr.bf16.mxu0 0
    %3995 = vmatpush1.bf16.msra.mxu0 0
    %3996 = vmatprep.subr.bf16.mxu0 0
    %3997 = vmatpush1.bf16.msra.mxu0 0
    %3998 = vmatprep.subr.bf16.mxu0 0
    %3999 = vmatpush1.bf16.msra.mxu0 0
    %4000 = vmatprep.subr.bf16.mxu0 0
    %4001 = vmatpush1.bf16.msra.mxu0 0
    %4002 = vmatprep.subr.bf16.mxu0 0
    %4003 = vmatpush1.bf16.msra.mxu0 0
    %4004 = vmatprep.mubr.bf16.mxu0 0
    %4005 = vmatmul.mubr.bf16.gmra.mrb[0].mxu0 %v3560
    %v4006 = vpop.f32.mrb[0].mxu0
    %v4007 = vadd.f32 0.0, %v4006
    %v4008 = vpop.f32.mrb[0].mxu0
    %v4009 = vadd.f32 0.0, %v4008
    %v4010 = vpop.f32.mrb[0].mxu0
    %v4011 = vpop.f32.mrb[0].mxu0
    %4012 = vdwg.mxu0
    %4013 = vmatprep.subr.bf16.mxu0 %v3286
    %4014 = vmatpush1.bf16.msra.mxu0 %v3285
    %4015 = vmatprep.subr.bf16.mxu0 %v3323
    %4016 = vmatpush1.bf16.msra.mxu0 %v3322
    %4017 = vmatprep.subr.bf16.mxu0 %v3360
    %4018 = vmatpush1.bf16.msra.mxu0 %v3359
    %4019 = vmatprep.subr.bf16.mxu0 %v3397
    %4020 = vmatpush1.bf16.msra.mxu0 %v3396
    %4021 = vmatprep.subr.bf16.mxu0 0
    %4022 = vmatpush1.bf16.msra.mxu0 0
    %4023 = vmatprep.subr.bf16.mxu0 0
    %4024 = vmatpush1.bf16.msra.mxu0 0
    %4025 = vmatprep.subr.bf16.mxu0 0
    %4026 = vmatpush1.bf16.msra.mxu0 0
    %4027 = vmatprep.subr.bf16.mxu0 0
    %4028 = vmatpush1.bf16.msra.mxu0 0
    %4029 = vmatprep.subr.bf16.mxu0 0
    %4030 = vmatpush1.bf16.msra.mxu0 0
    %4031 = vmatprep.subr.bf16.mxu0 0
    %4032 = vmatpush1.bf16.msra.mxu0 0
    %4033 = vmatprep.subr.bf16.mxu0 0
    %4034 = vmatpush1.bf16.msra.mxu0 0
    %4035 = vmatprep.subr.bf16.mxu0 0
    %4036 = vmatpush1.bf16.msra.mxu0 0
    %4037 = vmatprep.subr.bf16.mxu0 0
    %4038 = vmatpush1.bf16.msra.mxu0 0
    %4039 = vmatprep.subr.bf16.mxu0 0
    %4040 = vmatpush1.bf16.msra.mxu0 0
    %4041 = vmatprep.subr.bf16.mxu0 0
    %4042 = vmatpush1.bf16.msra.mxu0 0
    %4043 = vmatprep.subr.bf16.mxu0 0
    %4044 = vmatpush1.bf16.msra.mxu0 0
    %4045 = vmatprep.mubr.bf16.mxu0 0
    %4046 = vmatmul.mubr.bf16.gmra.mrb[0].mxu0 %v3560
    %v4047 = vpop.f32.mrb[0].mxu0
    %v4048 = vadd.f32 0.0, %v4047
    %v4049 = vpop.f32.mrb[0].mxu0
    %v4050 = vadd.f32 0.0, %v4049
    %v4051 = vpop.f32.mrb[0].mxu0
    %v4052 = vpop.f32.mrb[0].mxu0
    %4053 = vdwg.mxu0
    %4054 = vmatprep.subr.bf16.mxu0 %v3288
    %4055 = vmatpush1.bf16.msra.mxu0 %v3287
    %4056 = vmatprep.subr.bf16.mxu0 %v3325
    %4057 = vmatpush1.bf16.msra.mxu0 %v3324
    %4058 = vmatprep.subr.bf16.mxu0 %v3362
    %4059 = vmatpush1.bf16.msra.mxu0 %v3361
    %4060 = vmatprep.subr.bf16.mxu0 %v3399
    %4061 = vmatpush1.bf16.msra.mxu0 %v3398
    %4062 = vmatprep.subr.bf16.mxu0 0
    %4063 = vmatpush1.bf16.msra.mxu0 0
    %4064 = vmatprep.subr.bf16.mxu0 0
    %4065 = vmatpush1.bf16.msra.mxu0 0
    %4066 = vmatprep.subr.bf16.mxu0 0
    %4067 = vmatpush1.bf16.msra.mxu0 0
    %4068 = vmatprep.subr.bf16.mxu0 0
    %4069 = vmatpush1.bf16.msra.mxu0 0
    %4070 = vmatprep.subr.bf16.mxu0 0
    %4071 = vmatpush1.bf16.msra.mxu0 0
    %4072 = vmatprep.subr.bf16.mxu0 0
    %4073 = vmatpush1.bf16.msra.mxu0 0
    %4074 = vmatprep.subr.bf16.mxu0 0
    %4075 = vmatpush1.bf16.msra.mxu0 0
    %4076 = vmatprep.subr.bf16.mxu0 0
    %4077 = vmatpush1.bf16.msra.mxu0 0
    %4078 = vmatprep.subr.bf16.mxu0 0
    %4079 = vmatpush1.bf16.msra.mxu0 0
    %4080 = vmatprep.subr.bf16.mxu0 0
    %4081 = vmatpush1.bf16.msra.mxu0 0
    %4082 = vmatprep.subr.bf16.mxu0 0
    %4083 = vmatpush1.bf16.msra.mxu0 0
    %4084 = vmatprep.subr.bf16.mxu0 0
    %4085 = vmatpush1.bf16.msra.mxu0 0
    %4086 = vmatprep.mubr.bf16.mxu0 0
    %4087 = vmatmul.mubr.bf16.gmra.mrb[0].mxu0 %v3560
    %v4088 = vpop.f32.mrb[0].mxu0
    %v4089 = vadd.f32 0.0, %v4088
    %v4090 = vpop.f32.mrb[0].mxu0
    %v4091 = vadd.f32 0.0, %v4090
    %v4092 = vpop.f32.mrb[0].mxu0
    %v4093 = vpop.f32.mrb[0].mxu0
    %4094 = vdwg.mxu0
    %4095 = vmatprep.subr.bf16.mxu0 %v3290
    %4096 = vmatpush1.bf16.msra.mxu0 %v3289
    %4097 = vmatprep.subr.bf16.mxu0 %v3327
    %4098 = vmatpush1.bf16.msra.mxu0 %v3326
    %4099 = vmatprep.subr.bf16.mxu0 %v3364
    %4100 = vmatpush1.bf16.msra.mxu0 %v3363
    %4101 = vmatprep.subr.bf16.mxu0 %v3401
    %4102 = vmatpush1.bf16.msra.mxu0 %v3400
    %4103 = vmatprep.subr.bf16.mxu0 0
    %4104 = vmatpush1.bf16.msra.mxu0 0
    %4105 = vmatprep.subr.bf16.mxu0 0
    %4106 = vmatpush1.bf16.msra.mxu0 0
    %4107 = vmatprep.subr.bf16.mxu0 0
    %4108 = vmatpush1.bf16.msra.mxu0 0
    %4109 = vmatprep.subr.bf16.mxu0 0
    %4110 = vmatpush1.bf16.msra.mxu0 0
    %4111 = vmatprep.subr.bf16.mxu0 0
    %4112 = vmatpush1.bf16.msra.mxu0 0
    %4113 = vmatprep.subr.bf16.mxu0 0
    %4114 = vmatpush1.bf16.msra.mxu0 0
    %4115 = vmatprep.subr.bf16.mxu0 0
    %4116 = vmatpush1.bf16.msra.mxu0 0
    %4117 = vmatprep.subr.bf16.mxu0 0
    %4118 = vmatpush1.bf16.msra.mxu0 0
    %4119 = vmatprep.subr.bf16.mxu0 0
    %4120 = vmatpush1.bf16.msra.mxu0 0
    %4121 = vmatprep.subr.bf16.mxu0 0
    %4122 = vmatpush1.bf16.msra.mxu0 0
    %4123 = vmatprep.subr.bf16.mxu0 0
    %4124 = vmatpush1.bf16.msra.mxu0 0
    %4125 = vmatprep.subr.bf16.mxu0 0
    %4126 = vmatpush1.bf16.msra.mxu0 0
    %4127 = vmatprep.mubr.bf16.mxu0 0
    %4128 = vmatmul.mubr.bf16.gmra.mrb[0].mxu0 %v3560
    %v4129 = vpop.f32.mrb[0].mxu0
    %v4130 = vadd.f32 0.0, %v4129
    %v4131 = vpop.f32.mrb[0].mxu0
    %v4132 = vadd.f32 0.0, %v4131
    %v4133 = vpop.f32.mrb[0].mxu0
    %v4134 = vpop.f32.mrb[0].mxu0
    %4135 = vdwg.mxu0
    %4136 = vmatprep.subr.bf16.mxu0 %v3292
    %4137 = vmatpush1.bf16.msra.mxu0 %v3291
    %4138 = vmatprep.subr.bf16.mxu0 %v3329
    %4139 = vmatpush1.bf16.msra.mxu0 %v3328
    %4140 = vmatprep.subr.bf16.mxu0 %v3366
    %4141 = vmatpush1.bf16.msra.mxu0 %v3365
    %4142 = vmatprep.subr.bf16.mxu0 %v3403
    %4143 = vmatpush1.bf16.msra.mxu0 %v3402
    %4144 = vmatprep.subr.bf16.mxu0 0
    %4145 = vmatpush1.bf16.msra.mxu0 0
    %4146 = vmatprep.subr.bf16.mxu0 0
    %4147 = vmatpush1.bf16.msra.mxu0 0
    %4148 = vmatprep.subr.bf16.mxu0 0
    %4149 = vmatpush1.bf16.msra.mxu0 0
    %4150 = vmatprep.subr.bf16.mxu0 0
    %4151 = vmatpush1.bf16.msra.mxu0 0
    %4152 = vmatprep.subr.bf16.mxu0 0
    %4153 = vmatpush1.bf16.msra.mxu0 0
    %4154 = vmatprep.subr.bf16.mxu0 0
    %4155 = vmatpush1.bf16.msra.mxu0 0
    %4156 = vmatprep.subr.bf16.mxu0 0
    %4157 = vmatpush1.bf16.msra.mxu0 0
    %4158 = vmatprep.subr.bf16.mxu0 0
    %4159 = vmatpush1.bf16.msra.mxu0 0
    %4160 = vmatprep.subr.bf16.mxu0 0
    %4161 = vmatpush1.bf16.msra.mxu0 0
    %4162 = vmatprep.subr.bf16.mxu0 0
    %4163 = vmatpush1.bf16.msra.mxu0 0
    %4164 = vmatprep.subr.bf16.mxu0 0
    %4165 = vmatpush1.bf16.msra.mxu0 0
    %4166 = vmatprep.subr.bf16.mxu0 0
    %4167 = vmatpush1.bf16.msra.mxu0 0
    %4168 = vmatprep.mubr.bf16.mxu0 0
    %4169 = vmatmul.mubr.bf16.gmra.mrb[0].mxu0 %v3560
    %v4170 = vpop.f32.mrb[0].mxu0
    %v4171 = vadd.f32 0.0, %v4170
    %v4172 = vpop.f32.mrb[0].mxu0
    %v4173 = vadd.f32 0.0, %v4172
    %v4174 = vpop.f32.mrb[0].mxu0
    %v4175 = vpop.f32.mrb[0].mxu0
    %4176 = vdwg.mxu0
    %4177 = vmatprep.subr.bf16.mxu0 %v3294
    %4178 = vmatpush1.bf16.msra.mxu0 %v3293
    %4179 = vmatprep.subr.bf16.mxu0 %v3331
    %4180 = vmatpush1.bf16.msra.mxu0 %v3330
    %4181 = vmatprep.subr.bf16.mxu0 %v3368
    %4182 = vmatpush1.bf16.msra.mxu0 %v3367
    %4183 = vmatprep.subr.bf16.mxu0 %v3405
    %4184 = vmatpush1.bf16.msra.mxu0 %v3404
    %4185 = vmatprep.subr.bf16.mxu0 0
    %4186 = vmatpush1.bf16.msra.mxu0 0
    %4187 = vmatprep.subr.bf16.mxu0 0
    %4188 = vmatpush1.bf16.msra.mxu0 0
    %4189 = vmatprep.subr.bf16.mxu0 0
    %4190 = vmatpush1.bf16.msra.mxu0 0
    %4191 = vmatprep.subr.bf16.mxu0 0
    %4192 = vmatpush1.bf16.msra.mxu0 0
    %4193 = vmatprep.subr.bf16.mxu0 0
    %4194 = vmatpush1.bf16.msra.mxu0 0
    %4195 = vmatprep.subr.bf16.mxu0 0
    %4196 = vmatpush1.bf16.msra.mxu0 0
    %4197 = vmatprep.subr.bf16.mxu0 0
    %4198 = vmatpush1.bf16.msra.mxu0 0
    %4199 = vmatprep.subr.bf16.mxu0 0
    %4200 = vmatpush1.bf16.msra.mxu0 0
    %4201 = vmatprep.subr.bf16.mxu0 0
    %4202 = vmatpush1.bf16.msra.mxu0 0
    %4203 = vmatprep.subr.bf16.mxu0 0
    %4204 = vmatpush1.bf16.msra.mxu0 0
    %4205 = vmatprep.subr.bf16.mxu0 0
    %4206 = vmatpush1.bf16.msra.mxu0 0
    %4207 = vmatprep.subr.bf16.mxu0 0
    %4208 = vmatpush1.bf16.msra.mxu0 0
    %4209 = vmatprep.mubr.bf16.mxu0 0
    %4210 = vmatmul.mubr.bf16.gmra.mrb[0].mxu0 %v3560
    %v4211 = vpop.f32.mrb[0].mxu0
    %v4212 = vadd.f32 0.0, %v4211
    %v4213 = vpop.f32.mrb[0].mxu0
    %v4214 = vadd.f32 0.0, %v4213
    %v4215 = vpop.f32.mrb[0].mxu0
    %v4216 = vpop.f32.mrb[0].mxu0
    %4217 = vdwg.mxu0
    %4218 = vmatprep.subr.bf16.mxu0 %v3296
    %4219 = vmatpush1.bf16.msra.mxu0 %v3295
    %4220 = vmatprep.subr.bf16.mxu0 %v3333
    %4221 = vmatpush1.bf16.msra.mxu0 %v3332
    %4222 = vmatprep.subr.bf16.mxu0 %v3370
    %4223 = vmatpush1.bf16.msra.mxu0 %v3369
    %4224 = vmatprep.subr.bf16.mxu0 %v3407
    %4225 = vmatpush1.bf16.msra.mxu0 %v3406
    %4226 = vmatprep.subr.bf16.mxu0 0
    %4227 = vmatpush1.bf16.msra.mxu0 0
    %4228 = vmatprep.subr.bf16.mxu0 0
    %4229 = vmatpush1.bf16.msra.mxu0 0
    %4230 = vmatprep.subr.bf16.mxu0 0
    %4231 = vmatpush1.bf16.msra.mxu0 0
    %4232 = vmatprep.subr.bf16.mxu0 0
    %4233 = vmatpush1.bf16.msra.mxu0 0
    %4234 = vmatprep.subr.bf16.mxu0 0
    %4235 = vmatpush1.bf16.msra.mxu0 0
    %4236 = vmatprep.subr.bf16.mxu0 0
    %4237 = vmatpush1.bf16.msra.mxu0 0
    %4238 = vmatprep.subr.bf16.mxu0 0
    %4239 = vmatpush1.bf16.msra.mxu0 0
    %4240 = vmatprep.subr.bf16.mxu0 0
    %4241 = vmatpush1.bf16.msra.mxu0 0
    %4242 = vmatprep.subr.bf16.mxu0 0
    %4243 = vmatpush1.bf16.msra.mxu0 0
    %4244 = vmatprep.subr.bf16.mxu0 0
    %4245 = vmatpush1.bf16.msra.mxu0 0
    %4246 = vmatprep.subr.bf16.mxu0 0
    %4247 = vmatpush1.bf16.msra.mxu0 0
    %4248 = vmatprep.subr.bf16.mxu0 0
    %4249 = vmatpush1.bf16.msra.mxu0 0
    %4250 = vmatprep.mubr.bf16.mxu0 0
    %4251 = vmatmul.mubr.bf16.gmra.mrb[0].mxu0 %v3560
    %v4252 = vpop.f32.mrb[0].mxu0
    %v4253 = vadd.f32 0.0, %v4252
    %v4254 = vpop.f32.mrb[0].mxu0
    %v4255 = vadd.f32 0.0, %v4254
    %v4256 = vpop.f32.mrb[0].mxu0
    %v4257 = vpop.f32.mrb[0].mxu0
    %4258 = vdwg.mxu0
    %4259 = vmatprep.subr.bf16.mxu0 %v3298
    %4260 = vmatpush1.bf16.msra.mxu0 %v3297
    %4261 = vmatprep.subr.bf16.mxu0 %v3335
    %4262 = vmatpush1.bf16.msra.mxu0 %v3334
    %4263 = vmatprep.subr.bf16.mxu0 %v3372
    %4264 = vmatpush1.bf16.msra.mxu0 %v3371
    %4265 = vmatprep.subr.bf16.mxu0 %v3409
    %4266 = vmatpush1.bf16.msra.mxu0 %v3408
    %4267 = vmatprep.subr.bf16.mxu0 0
    %4268 = vmatpush1.bf16.msra.mxu0 0
    %4269 = vmatprep.subr.bf16.mxu0 0
    %4270 = vmatpush1.bf16.msra.mxu0 0
    %4271 = vmatprep.subr.bf16.mxu0 0
    %4272 = vmatpush1.bf16.msra.mxu0 0
    %4273 = vmatprep.subr.bf16.mxu0 0
    %4274 = vmatpush1.bf16.msra.mxu0 0
    %4275 = vmatprep.subr.bf16.mxu0 0
    %4276 = vmatpush1.bf16.msra.mxu0 0
    %4277 = vmatprep.subr.bf16.mxu0 0
    %4278 = vmatpush1.bf16.msra.mxu0 0
    %4279 = vmatprep.subr.bf16.mxu0 0
    %4280 = vmatpush1.bf16.msra.mxu0 0
    %4281 = vmatprep.subr.bf16.mxu0 0
    %4282 = vmatpush1.bf16.msra.mxu0 0
    %4283 = vmatprep.subr.bf16.mxu0 0
    %4284 = vmatpush1.bf16.msra.mxu0 0
    %4285 = vmatprep.subr.bf16.mxu0 0
    %4286 = vmatpush1.bf16.msra.mxu0 0
    %4287 = vmatprep.subr.bf16.mxu0 0
    %4288 = vmatpush1.bf16.msra.mxu0 0
    %4289 = vmatprep.subr.bf16.mxu0 0
    %4290 = vmatpush1.bf16.msra.mxu0 0
    %4291 = vmatprep.mubr.bf16.mxu0 0
    %4292 = vmatmul.mubr.bf16.gmra.mrb[0].mxu0 %v3560
    %v4293 = vpop.f32.mrb[0].mxu0
    %v4294 = vadd.f32 0.0, %v4293
    %v4295 = vpop.f32.mrb[0].mxu0
    %v4296 = vadd.f32 0.0, %v4295
    %v4297 = vpop.f32.mrb[0].mxu0
    %v4298 = vpop.f32.mrb[0].mxu0
    %4299 = vdwg.mxu0
    %4300 = vmatprep.subr.bf16.mxu0 0
    %4301 = vmatpush1.bf16.msra.mxu0 %v3299
    %4302 = vmatprep.subr.bf16.mxu0 0
    %4303 = vmatpush1.bf16.msra.mxu0 %v3336
    %4304 = vmatprep.subr.bf16.mxu0 0
    %4305 = vmatpush1.bf16.msra.mxu0 %v3373
    %4306 = vmatprep.subr.bf16.mxu0 0
    %4307 = vmatpush1.bf16.msra.mxu0 %v3410
    %4308 = vmatprep.subr.bf16.mxu0 0
    %4309 = vmatpush1.bf16.msra.mxu0 0
    %4310 = vmatprep.subr.bf16.mxu0 0
    %4311 = vmatpush1.bf16.msra.mxu0 0
    %4312 = vmatprep.subr.bf16.mxu0 0
    %4313 = vmatpush1.bf16.msra.mxu0 0
    %4314 = vmatprep.subr.bf16.mxu0 0
    %4315 = vmatpush1.bf16.msra.mxu0 0
    %4316 = vmatprep.subr.bf16.mxu0 0
    %4317 = vmatpush1.bf16.msra.mxu0 0
    %4318 = vmatprep.subr.bf16.mxu0 0
    %4319 = vmatpush1.bf16.msra.mxu0 0
    %4320 = vmatprep.subr.bf16.mxu0 0
    %4321 = vmatpush1.bf16.msra.mxu0 0
    %4322 = vmatprep.subr.bf16.mxu0 0
    %4323 = vmatpush1.bf16.msra.mxu0 0
    %4324 = vmatprep.subr.bf16.mxu0 0
    %4325 = vmatpush1.bf16.msra.mxu0 0
    %4326 = vmatprep.subr.bf16.mxu0 0
    %4327 = vmatpush1.bf16.msra.mxu0 0
    %4328 = vmatprep.subr.bf16.mxu0 0
    %4329 = vmatpush1.bf16.msra.mxu0 0
    %4330 = vmatprep.subr.bf16.mxu0 0
    %4331 = vmatpush1.bf16.msra.mxu0 0
    %4332 = vmatprep.mubr.bf16.mxu0 0
    %4333 = vmatmul.mubr.bf16.gmra.mrb[0].mxu0 %v3560
    %v4334 = vpop.f32.mrb[0].mxu0
    %v4335 = vadd.f32 0.0, %v4334
    %v4336 = vpop.f32.mrb[0].mxu0
    %v4337 = vpop.f32.mrb[0].mxu0
    %v4338 = vpop.f32.mrb[0].mxu0
    %4339 = vdwg.mxu0
    %v4492 = vunpack.c.l.b16 %v2508
    %v4493 = vunpack.c.h.b16 %v2508
    %v4494 = vunpack.c.l.b16 %v2509
    %v4495 = vunpack.c.h.b16 %v2509
    %v4496 = vunpack.c.l.b16 %v2510
    %v4497 = vunpack.c.h.b16 %v2510
    %v4498 = vunpack.c.l.b16 %v2511
    %v4499 = vunpack.c.h.b16 %v2511
    %v4500 = vunpack.c.l.b16 %v2512
    %v4501 = vunpack.c.h.b16 %v2512
    %v4502 = vunpack.c.l.b16 %v2513
    %v4503 = vunpack.c.h.b16 %v2513
    %v4504 = vunpack.c.l.b16 %v2514
    %v4505 = vunpack.c.h.b16 %v2514
    %v4506 = vunpack.c.l.b16 %v2515
    %v4507 = vunpack.c.h.b16 %v2515
    %v4508 = vunpack.c.l.b16 %v2516
    %v4509 = vunpack.c.h.b16 %v2516
    %v4510 = vunpack.c.l.b16 %v2517
    %v4511 = vunpack.c.h.b16 %v2517
    %v4512 = vunpack.c.l.b16 %v2518
    %v4513 = vunpack.c.h.b16 %v2518
    %v4514 = vunpack.c.l.b16 %v2519
    %v4515 = vunpack.c.h.b16 %v2519
    %v4516 = vunpack.c.l.b16 %v2520
    %v4517 = vunpack.c.h.b16 %v2520
    %v4518 = vunpack.c.l.b16 %v2521
    %v4519 = vunpack.c.h.b16 %v2521
    %v4520 = vunpack.c.l.b16 %v2522
    %v4521 = vunpack.c.h.b16 %v2522
    %v4522 = vunpack.c.l.b16 %v2523
    %v4523 = vunpack.c.h.b16 %v2523
    %v4524 = vunpack.c.l.b16 %v2524
    %v4525 = vunpack.c.h.b16 %v2524
    %v4526 = vunpack.c.l.b16 %v2525
    %v4527 = vunpack.c.h.b16 %v2525
    %v4528 = vunpack.c.l.b16 %v2526
    %v4529 = vunpack.c.l.b16 %v2527
    %v4530 = vunpack.c.h.b16 %v2527
    %v4531 = vunpack.c.l.b16 %v2528
    %v4532 = vunpack.c.h.b16 %v2528
    %v4533 = vunpack.c.l.b16 %v2529
    %v4534 = vunpack.c.h.b16 %v2529
    %v4535 = vunpack.c.l.b16 %v2530
    %v4536 = vunpack.c.h.b16 %v2530
    %v4537 = vunpack.c.l.b16 %v2531
    %v4538 = vunpack.c.h.b16 %v2531
    %v4539 = vunpack.c.l.b16 %v2532
    %v4540 = vunpack.c.h.b16 %v2532
    %v4541 = vunpack.c.l.b16 %v2533
    %v4542 = vunpack.c.h.b16 %v2533
    %v4543 = vunpack.c.l.b16 %v2534
    %v4544 = vunpack.c.h.b16 %v2534
    %v4545 = vunpack.c.l.b16 %v2535
    %v4546 = vunpack.c.h.b16 %v2535
    %v4547 = vunpack.c.l.b16 %v2536
    %v4548 = vunpack.c.h.b16 %v2536
    %v4549 = vunpack.c.l.b16 %v2537
    %v4550 = vunpack.c.h.b16 %v2537
    %v4551 = vunpack.c.l.b16 %v2538
    %v4552 = vunpack.c.h.b16 %v2538
    %v4553 = vunpack.c.l.b16 %v2539
    %v4554 = vunpack.c.h.b16 %v2539
    %v4555 = vunpack.c.l.b16 %v2540
    %v4556 = vunpack.c.h.b16 %v2540
    %v4557 = vunpack.c.l.b16 %v2541
    %v4558 = vunpack.c.h.b16 %v2541
    %v4559 = vunpack.c.l.b16 %v2542
    %v4560 = vunpack.c.h.b16 %v2542
    %v4561 = vunpack.c.l.b16 %v2543
    %v4562 = vunpack.c.h.b16 %v2543
    %v4563 = vunpack.c.l.b16 %v2544
    %v4564 = vunpack.c.h.b16 %v2544
    %v4565 = vunpack.c.l.b16 %v2545
    %v4566 = vunpack.c.l.b16 %v2546
    %v4567 = vunpack.c.h.b16 %v2546
    %v4568 = vunpack.c.l.b16 %v2547
    %v4569 = vunpack.c.h.b16 %v2547
    %v4570 = vunpack.c.l.b16 %v2548
    %v4571 = vunpack.c.h.b16 %v2548
    %v4572 = vunpack.c.l.b16 %v2549
    %v4573 = vunpack.c.h.b16 %v2549
    %v4574 = vunpack.c.l.b16 %v2550
    %v4575 = vunpack.c.h.b16 %v2550
    %v4576 = vunpack.c.l.b16 %v2551
    %v4577 = vunpack.c.h.b16 %v2551
    %v4578 = vunpack.c.l.b16 %v2552
    %v4579 = vunpack.c.h.b16 %v2552
    %v4580 = vunpack.c.l.b16 %v2553
    %v4581 = vunpack.c.h.b16 %v2553
    %v4582 = vunpack.c.l.b16 %v2554
    %v4583 = vunpack.c.h.b16 %v2554
    %v4584 = vunpack.c.l.b16 %v2555
    %v4585 = vunpack.c.h.b16 %v2555
    %v4586 = vunpack.c.l.b16 %v2556
    %v4587 = vunpack.c.h.b16 %v2556
    %v4588 = vunpack.c.l.b16 %v2557
    %v4589 = vunpack.c.h.b16 %v2557
    %v4590 = vunpack.c.l.b16 %v2558
    %v4591 = vunpack.c.h.b16 %v2558
    %v4592 = vunpack.c.l.b16 %v2559
    %v4593 = vunpack.c.h.b16 %v2559
    %v4594 = vunpack.c.l.b16 %v2560
    %v4595 = vunpack.c.h.b16 %v2560
    %v4596 = vunpack.c.l.b16 %v2561
    %v4597 = vunpack.c.h.b16 %v2561
    %v4598 = vunpack.c.l.b16 %v2562
    %v4599 = vunpack.c.h.b16 %v2562
    %v4600 = vunpack.c.l.b16 %v2563
    %v4601 = vunpack.c.h.b16 %v2563
    %v4602 = vunpack.c.l.b16 %v2564
    %v4603 = vunpack.c.l.b16 %v2565
    %v4604 = vunpack.c.h.b16 %v2565
    %v4605 = vunpack.c.l.b16 %v2566
    %v4606 = vunpack.c.h.b16 %v2566
    %v4607 = vunpack.c.l.b16 %v2567
    %v4608 = vunpack.c.h.b16 %v2567
    %v4609 = vunpack.c.l.b16 %v2568
    %v4610 = vunpack.c.h.b16 %v2568
    %v4611 = vunpack.c.l.b16 %v2569
    %v4612 = vunpack.c.h.b16 %v2569
    %v4613 = vunpack.c.l.b16 %v2570
    %v4614 = vunpack.c.h.b16 %v2570
    %v4615 = vunpack.c.l.b16 %v2571
    %v4616 = vunpack.c.h.b16 %v2571
    %v4617 = vunpack.c.l.b16 %v2572
    %v4618 = vunpack.c.h.b16 %v2572
    %v4619 = vunpack.c.l.b16 %v2573
    %v4620 = vunpack.c.h.b16 %v2573
    %v4621 = vunpack.c.l.b16 %v2574
    %v4622 = vunpack.c.h.b16 %v2574
    %v4623 = vunpack.c.l.b16 %v2575
    %v4624 = vunpack.c.h.b16 %v2575
    %v4625 = vunpack.c.l.b16 %v2576
    %v4626 = vunpack.c.h.b16 %v2576
    %v4627 = vunpack.c.l.b16 %v2577
    %v4628 = vunpack.c.h.b16 %v2577
    %v4629 = vunpack.c.l.b16 %v2578
    %v4630 = vunpack.c.h.b16 %v2578
    %v4631 = vunpack.c.l.b16 %v2579
    %v4632 = vunpack.c.h.b16 %v2579
    %v4633 = vunpack.c.l.b16 %v2580
    %v4634 = vunpack.c.h.b16 %v2580
    %v4635 = vunpack.c.l.b16 %v2581
    %v4636 = vunpack.c.h.b16 %v2581
    %v4637 = vunpack.c.l.b16 %v2582
    %v4638 = vunpack.c.h.b16 %v2582
    %v4639 = vunpack.c.l.b16 %v2583
    %v4640 = vunpack.c.l.b16 %v2584
    %v4641 = vunpack.c.h.b16 %v2584
    %v4642 = vunpack.c.l.b16 %v2585
    %v4643 = vunpack.c.h.b16 %v2585
    %v4644 = vunpack.c.l.b16 %v2586
    %v4645 = vunpack.c.h.b16 %v2586
    %v4646 = vunpack.c.l.b16 %v2587
    %v4647 = vunpack.c.h.b16 %v2587
    %v4648 = vunpack.c.l.b16 %v2588
    %v4649 = vunpack.c.h.b16 %v2588
    %v4650 = vunpack.c.l.b16 %v2589
    %v4651 = vunpack.c.h.b16 %v2589
    %v4652 = vunpack.c.l.b16 %v2590
    %v4653 = vunpack.c.h.b16 %v2590
    %v4654 = vunpack.c.l.b16 %v2591
    %v4655 = vunpack.c.h.b16 %v2591
    %v4656 = vunpack.c.l.b16 %v2592
    %v4657 = vunpack.c.h.b16 %v2592
    %v4658 = vunpack.c.l.b16 %v2593
    %v4659 = vunpack.c.h.b16 %v2593
    %v4660 = vunpack.c.l.b16 %v2594
    %v4661 = vunpack.c.h.b16 %v2594
    %v4662 = vunpack.c.l.b16 %v2595
    %v4663 = vunpack.c.h.b16 %v2595
    %v4664 = vunpack.c.l.b16 %v2596
    %v4665 = vunpack.c.h.b16 %v2596
    %v4666 = vunpack.c.l.b16 %v2597
    %v4667 = vunpack.c.h.b16 %v2597
    %v4668 = vunpack.c.l.b16 %v2598
    %v4669 = vunpack.c.h.b16 %v2598
    %v4670 = vunpack.c.l.b16 %v2599
    %v4671 = vunpack.c.h.b16 %v2599
    %v4672 = vunpack.c.l.b16 %v2600
    %v4673 = vunpack.c.h.b16 %v2600
    %v4674 = vunpack.c.l.b16 %v2601
    %v4675 = vunpack.c.h.b16 %v2601
    %v4676 = vunpack.c.l.b16 %v2602
    %v4677 = vunpack.c.l.b16 %v2603
    %v4678 = vunpack.c.h.b16 %v2603
    %v4679 = vunpack.c.l.b16 %v2604
    %v4680 = vunpack.c.h.b16 %v2604
    %v4681 = vunpack.c.l.b16 %v2605
    %v4682 = vunpack.c.h.b16 %v2605
    %v4683 = vunpack.c.l.b16 %v2606
    %v4684 = vunpack.c.h.b16 %v2606
    %v4685 = vunpack.c.l.b16 %v2607
    %v4686 = vunpack.c.h.b16 %v2607
    %v4687 = vunpack.c.l.b16 %v2608
    %v4688 = vunpack.c.h.b16 %v2608
    %v4689 = vunpack.c.l.b16 %v2609
    %v4690 = vunpack.c.h.b16 %v2609
    %v4691 = vunpack.c.l.b16 %v2610
    %v4692 = vunpack.c.h.b16 %v2610
    %v4693 = vunpack.c.l.b16 %v2611
    %v4694 = vunpack.c.h.b16 %v2611
    %v4695 = vunpack.c.l.b16 %v2612
    %v4696 = vunpack.c.h.b16 %v2612
    %v4697 = vunpack.c.l.b16 %v2613
    %v4698 = vunpack.c.h.b16 %v2613
    %v4699 = vunpack.c.l.b16 %v2614
    %v4700 = vunpack.c.h.b16 %v2614
    %v4701 = vunpack.c.l.b16 %v2615
    %v4702 = vunpack.c.h.b16 %v2615
    %v4703 = vunpack.c.l.b16 %v2616
    %v4704 = vunpack.c.h.b16 %v2616
    %v4705 = vunpack.c.l.b16 %v2617
    %v4706 = vunpack.c.h.b16 %v2617
    %v4707 = vunpack.c.l.b16 %v2618
    %v4708 = vunpack.c.h.b16 %v2618
    %v4709 = vunpack.c.l.b16 %v2619
    %v4710 = vunpack.c.h.b16 %v2619
    %v4711 = vunpack.c.l.b16 %v2620
    %v4712 = vunpack.c.h.b16 %v2620
    %v4713 = vunpack.c.l.b16 %v2621
    %v4714 = vunpack.c.l.b16 %v2622
    %v4715 = vunpack.c.h.b16 %v2622
    %v4716 = vunpack.c.l.b16 %v2623
    %v4717 = vunpack.c.h.b16 %v2623
    %v4718 = vunpack.c.l.b16 %v2624
    %v4719 = vunpack.c.h.b16 %v2624
    %v4720 = vunpack.c.l.b16 %v2625
    %v4721 = vunpack.c.h.b16 %v2625
    %v4722 = vunpack.c.l.b16 %v2626
    %v4723 = vunpack.c.h.b16 %v2626
    %v4724 = vunpack.c.l.b16 %v2627
    %v4725 = vunpack.c.h.b16 %v2627
    %v4726 = vunpack.c.l.b16 %v2628
    %v4727 = vunpack.c.h.b16 %v2628
    %v4728 = vunpack.c.l.b16 %v2629
    %v4729 = vunpack.c.h.b16 %v2629
    %v4730 = vunpack.c.l.b16 %v2630
    %v4731 = vunpack.c.h.b16 %v2630
    %v4732 = vunpack.c.l.b16 %v2631
    %v4733 = vunpack.c.h.b16 %v2631
    %v4734 = vunpack.c.l.b16 %v2632
    %v4735 = vunpack.c.h.b16 %v2632
    %v4736 = vunpack.c.l.b16 %v2633
    %v4737 = vunpack.c.h.b16 %v2633
    %v4738 = vunpack.c.l.b16 %v2634
    %v4739 = vunpack.c.h.b16 %v2634
    %v4740 = vunpack.c.l.b16 %v2635
    %v4741 = vunpack.c.h.b16 %v2635
    %v4742 = vunpack.c.l.b16 %v2636
    %v4743 = vunpack.c.h.b16 %v2636
    %v4744 = vunpack.c.l.b16 %v2637
    %v4745 = vunpack.c.h.b16 %v2637
    %v4746 = vunpack.c.l.b16 %v2638
    %v4747 = vunpack.c.h.b16 %v2638
    %v4748 = vunpack.c.l.b16 %v2639
    %v4749 = vunpack.c.h.b16 %v2639
    %v4750 = vunpack.c.l.b16 %v2640
    %v4751 = vunpack.c.l.b16 %v2641
    %v4752 = vunpack.c.h.b16 %v2641
    %v4753 = vunpack.c.l.b16 %v2642
    %v4754 = vunpack.c.h.b16 %v2642
    %v4755 = vunpack.c.l.b16 %v2643
    %v4756 = vunpack.c.h.b16 %v2643
    %v4757 = vunpack.c.l.b16 %v2644
    %v4758 = vunpack.c.h.b16 %v2644
    %v4759 = vunpack.c.l.b16 %v2645
    %v4760 = vunpack.c.h.b16 %v2645
    %v4761 = vunpack.c.l.b16 %v2646
    %v4762 = vunpack.c.h.b16 %v2646
    %v4763 = vunpack.c.l.b16 %v2647
    %v4764 = vunpack.c.h.b16 %v2647
    %v4765 = vunpack.c.l.b16 %v2648
    %v4766 = vunpack.c.h.b16 %v2648
    %v4767 = vunpack.c.l.b16 %v2649
    %v4768 = vunpack.c.h.b16 %v2649
    %v4769 = vunpack.c.l.b16 %v2650
    %v4770 = vunpack.c.h.b16 %v2650
    %v4771 = vunpack.c.l.b16 %v2651
    %v4772 = vunpack.c.h.b16 %v2651
    %v4773 = vunpack.c.l.b16 %v2652
    %v4774 = vunpack.c.h.b16 %v2652
    %v4775 = vunpack.c.l.b16 %v2653
    %v4776 = vunpack.c.h.b16 %v2653
    %v4777 = vunpack.c.l.b16 %v2654
    %v4778 = vunpack.c.h.b16 %v2654
    %v4779 = vunpack.c.l.b16 %v2655
    %v4780 = vunpack.c.h.b16 %v2655
    %v4781 = vunpack.c.l.b16 %v2656
    %v4782 = vunpack.c.h.b16 %v2656
    %v4783 = vunpack.c.l.b16 %v2657
    %v4784 = vunpack.c.h.b16 %v2657
    %v4785 = vunpack.c.l.b16 %v2658
    %v4786 = vunpack.c.h.b16 %v2658
    %v4787 = vunpack.c.l.b16 %v2659
    %v4788 = vpack.c.b16 %v4529, %v4492
    %v4789 = vpack.c.b16 %v4530, %v4493
    %v4790 = vpack.c.b16 %v4531, %v4494
    %v4791 = vpack.c.b16 %v4532, %v4495
    %v4792 = vpack.c.b16 %v4533, %v4496
    %v4793 = vpack.c.b16 %v4534, %v4497
    %v4794 = vpack.c.b16 %v4535, %v4498
    %v4795 = vpack.c.b16 %v4536, %v4499
    %v4796 = vpack.c.b16 %v4537, %v4500
    %v4797 = vpack.c.b16 %v4538, %v4501
    %v4798 = vpack.c.b16 %v4539, %v4502
    %v4799 = vpack.c.b16 %v4540, %v4503
    %v4800 = vpack.c.b16 %v4541, %v4504
    %v4801 = vpack.c.b16 %v4542, %v4505
    %v4802 = vpack.c.b16 %v4543, %v4506
    %v4803 = vpack.c.b16 %v4544, %v4507
    %v4804 = vpack.c.b16 %v4545, %v4508
    %v4805 = vpack.c.b16 %v4546, %v4509
    %v4806 = vpack.c.b16 %v4547, %v4510
    %v4807 = vpack.c.b16 %v4548, %v4511
    %v4808 = vpack.c.b16 %v4549, %v4512
    %v4809 = vpack.c.b16 %v4550, %v4513
    %v4810 = vpack.c.b16 %v4551, %v4514
    %v4811 = vpack.c.b16 %v4552, %v4515
    %v4812 = vpack.c.b16 %v4553, %v4516
    %v4813 = vpack.c.b16 %v4554, %v4517
    %v4814 = vpack.c.b16 %v4555, %v4518
    %v4815 = vpack.c.b16 %v4556, %v4519
    %v4816 = vpack.c.b16 %v4557, %v4520
    %v4817 = vpack.c.b16 %v4558, %v4521
    %v4818 = vpack.c.b16 %v4559, %v4522
    %v4819 = vpack.c.b16 %v4560, %v4523
    %v4820 = vpack.c.b16 %v4561, %v4524
    %v4821 = vpack.c.b16 %v4562, %v4525
    %v4822 = vpack.c.b16 %v4563, %v4526
    %v4823 = vpack.c.b16 %v4564, %v4527
    %v4824 = vpack.c.b16 %v4565, %v4528
    %v4825 = vpack.c.b16 %v4603, %v4566
    %v4826 = vpack.c.b16 %v4604, %v4567
    %v4827 = vpack.c.b16 %v4605, %v4568
    %v4828 = vpack.c.b16 %v4606, %v4569
    %v4829 = vpack.c.b16 %v4607, %v4570
    %v4830 = vpack.c.b16 %v4608, %v4571
    %v4831 = vpack.c.b16 %v4609, %v4572
    %v4832 = vpack.c.b16 %v4610, %v4573
    %v4833 = vpack.c.b16 %v4611, %v4574
    %v4834 = vpack.c.b16 %v4612, %v4575
    %v4835 = vpack.c.b16 %v4613, %v4576
    %v4836 = vpack.c.b16 %v4614, %v4577
    %v4837 = vpack.c.b16 %v4615, %v4578
    %v4838 = vpack.c.b16 %v4616, %v4579
    %v4839 = vpack.c.b16 %v4617, %v4580
    %v4840 = vpack.c.b16 %v4618, %v4581
    %v4841 = vpack.c.b16 %v4619, %v4582
    %v4842 = vpack.c.b16 %v4620, %v4583
    %v4843 = vpack.c.b16 %v4621, %v4584
    %v4844 = vpack.c.b16 %v4622, %v4585
    %v4845 = vpack.c.b16 %v4623, %v4586
    %v4846 = vpack.c.b16 %v4624, %v4587
    %v4847 = vpack.c.b16 %v4625, %v4588
    %v4848 = vpack.c.b16 %v4626, %v4589
    %v4849 = vpack.c.b16 %v4627, %v4590
    %v4850 = vpack.c.b16 %v4628, %v4591
    %v4851 = vpack.c.b16 %v4629, %v4592
    %v4852 = vpack.c.b16 %v4630, %v4593
    %v4853 = vpack.c.b16 %v4631, %v4594
    %v4854 = vpack.c.b16 %v4632, %v4595
    %v4855 = vpack.c.b16 %v4633, %v4596
    %v4856 = vpack.c.b16 %v4634, %v4597
    %v4857 = vpack.c.b16 %v4635, %v4598
    %v4858 = vpack.c.b16 %v4636, %v4599
    %v4859 = vpack.c.b16 %v4637, %v4600
    %v4860 = vpack.c.b16 %v4638, %v4601
    %v4861 = vpack.c.b16 %v4639, %v4602
    %v4862 = vpack.c.b16 %v4677, %v4640
    %v4863 = vpack.c.b16 %v4678, %v4641
    %v4864 = vpack.c.b16 %v4679, %v4642
    %v4865 = vpack.c.b16 %v4680, %v4643
    %v4866 = vpack.c.b16 %v4681, %v4644
    %v4867 = vpack.c.b16 %v4682, %v4645
    %v4868 = vpack.c.b16 %v4683, %v4646
    %v4869 = vpack.c.b16 %v4684, %v4647
    %v4870 = vpack.c.b16 %v4685, %v4648
    %v4871 = vpack.c.b16 %v4686, %v4649
    %v4872 = vpack.c.b16 %v4687, %v4650
    %v4873 = vpack.c.b16 %v4688, %v4651
    %v4874 = vpack.c.b16 %v4689, %v4652
    %v4875 = vpack.c.b16 %v4690, %v4653
    %v4876 = vpack.c.b16 %v4691, %v4654
    %v4877 = vpack.c.b16 %v4692, %v4655
    %v4878 = vpack.c.b16 %v4693, %v4656
    %v4879 = vpack.c.b16 %v4694, %v4657
    %v4880 = vpack.c.b16 %v4695, %v4658
    %v4881 = vpack.c.b16 %v4696, %v4659
    %v4882 = vpack.c.b16 %v4697, %v4660
    %v4883 = vpack.c.b16 %v4698, %v4661
    %v4884 = vpack.c.b16 %v4699, %v4662
    %v4885 = vpack.c.b16 %v4700, %v4663
    %v4886 = vpack.c.b16 %v4701, %v4664
    %v4887 = vpack.c.b16 %v4702, %v4665
    %v4888 = vpack.c.b16 %v4703, %v4666
    %v4889 = vpack.c.b16 %v4704, %v4667
    %v4890 = vpack.c.b16 %v4705, %v4668
    %v4891 = vpack.c.b16 %v4706, %v4669
    %v4892 = vpack.c.b16 %v4707, %v4670
    %v4893 = vpack.c.b16 %v4708, %v4671
    %v4894 = vpack.c.b16 %v4709, %v4672
    %v4895 = vpack.c.b16 %v4710, %v4673
    %v4896 = vpack.c.b16 %v4711, %v4674
    %v4897 = vpack.c.b16 %v4712, %v4675
    %v4898 = vpack.c.b16 %v4713, %v4676
    %v4899 = vpack.c.b16 %v4751, %v4714
    %v4900 = vpack.c.b16 %v4752, %v4715
    %v4901 = vpack.c.b16 %v4753, %v4716
    %v4902 = vpack.c.b16 %v4754, %v4717
    %v4903 = vpack.c.b16 %v4755, %v4718
    %v4904 = vpack.c.b16 %v4756, %v4719
    %v4905 = vpack.c.b16 %v4757, %v4720
    %v4906 = vpack.c.b16 %v4758, %v4721
    %v4907 = vpack.c.b16 %v4759, %v4722
    %v4908 = vpack.c.b16 %v4760, %v4723
    %v4909 = vpack.c.b16 %v4761, %v4724
    %v4910 = vpack.c.b16 %v4762, %v4725
    %v4911 = vpack.c.b16 %v4763, %v4726
    %v4912 = vpack.c.b16 %v4764, %v4727
    %v4913 = vpack.c.b16 %v4765, %v4728
    %v4914 = vpack.c.b16 %v4766, %v4729
    %v4915 = vpack.c.b16 %v4767, %v4730
    %v4916 = vpack.c.b16 %v4768, %v4731
    %v4917 = vpack.c.b16 %v4769, %v4732
    %v4918 = vpack.c.b16 %v4770, %v4733
    %v4919 = vpack.c.b16 %v4771, %v4734
    %v4920 = vpack.c.b16 %v4772, %v4735
    %v4921 = vpack.c.b16 %v4773, %v4736
    %v4922 = vpack.c.b16 %v4774, %v4737
    %v4923 = vpack.c.b16 %v4775, %v4738
    %v4924 = vpack.c.b16 %v4776, %v4739
    %v4925 = vpack.c.b16 %v4777, %v4740
    %v4926 = vpack.c.b16 %v4778, %v4741
    %v4927 = vpack.c.b16 %v4779, %v4742
    %v4928 = vpack.c.b16 %v4780, %v4743
    %v4929 = vpack.c.b16 %v4781, %v4744
    %v4930 = vpack.c.b16 %v4782, %v4745
    %v4931 = vpack.c.b16 %v4783, %v4746
    %v4932 = vpack.c.b16 %v4784, %v4747
    %v4933 = vpack.c.b16 %v4785, %v4748
    %v4934 = vpack.c.b16 %v4786, %v4749
    %v4935 = vpack.c.b16 %v4787, %v4750
    %v5084 = vsel %vm2270, %v2507, 0
    %5086 = vmatprep.subr.bf16.mxu0 %v4789
    %5087 = vmatpush1.bf16.msra.mxu0 %v4788
    %5088 = vmatprep.subr.bf16.mxu0 %v4826
    %5089 = vmatpush1.bf16.msra.mxu0 %v4825
    %5090 = vmatprep.subr.bf16.mxu0 %v4863
    %5091 = vmatpush1.bf16.msra.mxu0 %v4862
    %5092 = vmatprep.subr.bf16.mxu0 %v4900
    %5093 = vmatpush1.bf16.msra.mxu0 %v4899
    %5094 = vmatprep.subr.bf16.mxu0 0
    %5095 = vmatpush1.bf16.msra.mxu0 0
    %5096 = vmatprep.subr.bf16.mxu0 0
    %5097 = vmatpush1.bf16.msra.mxu0 0
    %5098 = vmatprep.subr.bf16.mxu0 0
    %5099 = vmatpush1.bf16.msra.mxu0 0
    %5100 = vmatprep.subr.bf16.mxu0 0
    %5101 = vmatpush1.bf16.msra.mxu0 0
    %5102 = vmatprep.subr.bf16.mxu0 0
    %5103 = vmatpush1.bf16.msra.mxu0 0
    %5104 = vmatprep.subr.bf16.mxu0 0
    %5105 = vmatpush1.bf16.msra.mxu0 0
    %5106 = vmatprep.subr.bf16.mxu0 0
    %5107 = vmatpush1.bf16.msra.mxu0 0
    %5108 = vmatprep.subr.bf16.mxu0 0
    %5109 = vmatpush1.bf16.msra.mxu0 0
    %5110 = vmatprep.subr.bf16.mxu0 0
    %5111 = vmatpush1.bf16.msra.mxu0 0
    %5112 = vmatprep.subr.bf16.mxu0 0
    %5113 = vmatpush1.bf16.msra.mxu0 0
    %5114 = vmatprep.subr.bf16.mxu0 0
    %5115 = vmatpush1.bf16.msra.mxu0 0
    %5116 = vmatprep.subr.bf16.mxu0 0
    %5117 = vmatpush1.bf16.msra.mxu0 0
    %5118 = vmatprep.mubr.bf16.mxu0 0
    %5119 = vmatmul.mubr.bf16.gmra.mrb[0].mxu0 %v5084
    %v5120 = vpop.f32.mrb[0].mxu0
    %v5121 = vadd.f32 %v3597, %v5120
    %v5122 = vpop.f32.mrb[0].mxu0
    %v5123 = vadd.f32 %v3599, %v5122
    %v5124 = vpop.f32.mrb[0].mxu0
    %v5125 = vpop.f32.mrb[0].mxu0
    %5126 = vdwg.mxu0
    %5127 = vmatprep.subr.bf16.mxu0 %v4791
    %5128 = vmatpush1.bf16.msra.mxu0 %v4790
    %5129 = vmatprep.subr.bf16.mxu0 %v4828
    %5130 = vmatpush1.bf16.msra.mxu0 %v4827
    %5131 = vmatprep.subr.bf16.mxu0 %v4865
    %5132 = vmatpush1.bf16.msra.mxu0 %v4864
    %5133 = vmatprep.subr.bf16.mxu0 %v4902
    %5134 = vmatpush1.bf16.msra.mxu0 %v4901
    %5135 = vmatprep.subr.bf16.mxu0 0
    %5136 = vmatpush1.bf16.msra.mxu0 0
    %5137 = vmatprep.subr.bf16.mxu0 0
    %5138 = vmatpush1.bf16.msra.mxu0 0
    %5139 = vmatprep.subr.bf16.mxu0 0
    %5140 = vmatpush1.bf16.msra.mxu0 0
    %5141 = vmatprep.subr.bf16.mxu0 0
    %5142 = vmatpush1.bf16.msra.mxu0 0
    %5143 = vmatprep.subr.bf16.mxu0 0
    %5144 = vmatpush1.bf16.msra.mxu0 0
    %5145 = vmatprep.subr.bf16.mxu0 0
    %5146 = vmatpush1.bf16.msra.mxu0 0
    %5147 = vmatprep.subr.bf16.mxu0 0
    %5148 = vmatpush1.bf16.msra.mxu0 0
    %5149 = vmatprep.subr.bf16.mxu0 0
    %5150 = vmatpush1.bf16.msra.mxu0 0
    %5151 = vmatprep.subr.bf16.mxu0 0
    %5152 = vmatpush1.bf16.msra.mxu0 0
    %5153 = vmatprep.subr.bf16.mxu0 0
    %5154 = vmatpush1.bf16.msra.mxu0 0
    %5155 = vmatprep.subr.bf16.mxu0 0
    %5156 = vmatpush1.bf16.msra.mxu0 0
    %5157 = vmatprep.subr.bf16.mxu0 0
    %5158 = vmatpush1.bf16.msra.mxu0 0
    %5159 = vmatprep.mubr.bf16.mxu0 0
    %5160 = vmatmul.mubr.bf16.gmra.mrb[0].mxu0 %v5084
    %v5161 = vpop.f32.mrb[0].mxu0
    %v5162 = vadd.f32 %v3638, %v5161
    %v5163 = vpop.f32.mrb[0].mxu0
    %v5164 = vadd.f32 %v3640, %v5163
    %v5165 = vpop.f32.mrb[0].mxu0
    %v5166 = vpop.f32.mrb[0].mxu0
    %5167 = vdwg.mxu0
    %5168 = vmatprep.subr.bf16.mxu0 %v4793
    %5169 = vmatpush1.bf16.msra.mxu0 %v4792
    %5170 = vmatprep.subr.bf16.mxu0 %v4830
    %5171 = vmatpush1.bf16.msra.mxu0 %v4829
    %5172 = vmatprep.subr.bf16.mxu0 %v4867
    %5173 = vmatpush1.bf16.msra.mxu0 %v4866
    %5174 = vmatprep.subr.bf16.mxu0 %v4904
    %5175 = vmatpush1.bf16.msra.mxu0 %v4903
    %5176 = vmatprep.subr.bf16.mxu0 0
    %5177 = vmatpush1.bf16.msra.mxu0 0
    %5178 = vmatprep.subr.bf16.mxu0 0
    %5179 = vmatpush1.bf16.msra.mxu0 0
    %5180 = vmatprep.subr.bf16.mxu0 0
    %5181 = vmatpush1.bf16.msra.mxu0 0
    %5182 = vmatprep.subr.bf16.mxu0 0
    %5183 = vmatpush1.bf16.msra.mxu0 0
    %5184 = vmatprep.subr.bf16.mxu0 0
    %5185 = vmatpush1.bf16.msra.mxu0 0
    %5186 = vmatprep.subr.bf16.mxu0 0
    %5187 = vmatpush1.bf16.msra.mxu0 0
    %5188 = vmatprep.subr.bf16.mxu0 0
    %5189 = vmatpush1.bf16.msra.mxu0 0
    %5190 = vmatprep.subr.bf16.mxu0 0
    %5191 = vmatpush1.bf16.msra.mxu0 0
    %5192 = vmatprep.subr.bf16.mxu0 0
    %5193 = vmatpush1.bf16.msra.mxu0 0
    %5194 = vmatprep.subr.bf16.mxu0 0
    %5195 = vmatpush1.bf16.msra.mxu0 0
    %5196 = vmatprep.subr.bf16.mxu0 0
    %5197 = vmatpush1.bf16.msra.mxu0 0
    %5198 = vmatprep.subr.bf16.mxu0 0
    %5199 = vmatpush1.bf16.msra.mxu0 0
    %5200 = vmatprep.mubr.bf16.mxu0 0
    %5201 = vmatmul.mubr.bf16.gmra.mrb[0].mxu0 %v5084
    %v5202 = vpop.f32.mrb[0].mxu0
    %v5203 = vadd.f32 %v3679, %v5202
    %v5204 = vpop.f32.mrb[0].mxu0
    %v5205 = vadd.f32 %v3681, %v5204
    %v5206 = vpop.f32.mrb[0].mxu0
    %v5207 = vpop.f32.mrb[0].mxu0
    %5208 = vdwg.mxu0
    %5209 = vmatprep.subr.bf16.mxu0 %v4795
    %5210 = vmatpush1.bf16.msra.mxu0 %v4794
    %5211 = vmatprep.subr.bf16.mxu0 %v4832
    %5212 = vmatpush1.bf16.msra.mxu0 %v4831
    %5213 = vmatprep.subr.bf16.mxu0 %v4869
    %5214 = vmatpush1.bf16.msra.mxu0 %v4868
    %5215 = vmatprep.subr.bf16.mxu0 %v4906
    %5216 = vmatpush1.bf16.msra.mxu0 %v4905
    %5217 = vmatprep.subr.bf16.mxu0 0
    %5218 = vmatpush1.bf16.msra.mxu0 0
    %5219 = vmatprep.subr.bf16.mxu0 0
    %5220 = vmatpush1.bf16.msra.mxu0 0
    %5221 = vmatprep.subr.bf16.mxu0 0
    %5222 = vmatpush1.bf16.msra.mxu0 0
    %5223 = vmatprep.subr.bf16.mxu0 0
    %5224 = vmatpush1.bf16.msra.mxu0 0
    %5225 = vmatprep.subr.bf16.mxu0 0
    %5226 = vmatpush1.bf16.msra.mxu0 0
    %5227 = vmatprep.subr.bf16.mxu0 0
    %5228 = vmatpush1.bf16.msra.mxu0 0
    %5229 = vmatprep.subr.bf16.mxu0 0
    %5230 = vmatpush1.bf16.msra.mxu0 0
    %5231 = vmatprep.subr.bf16.mxu0 0
    %5232 = vmatpush1.bf16.msra.mxu0 0
    %5233 = vmatprep.subr.bf16.mxu0 0
    %5234 = vmatpush1.bf16.msra.mxu0 0
    %5235 = vmatprep.subr.bf16.mxu0 0
    %5236 = vmatpush1.bf16.msra.mxu0 0
    %5237 = vmatprep.subr.bf16.mxu0 0
    %5238 = vmatpush1.bf16.msra.mxu0 0
    %5239 = vmatprep.subr.bf16.mxu0 0
    %5240 = vmatpush1.bf16.msra.mxu0 0
    %5241 = vmatprep.mubr.bf16.mxu0 0
    %5242 = vmatmul.mubr.bf16.gmra.mrb[0].mxu0 %v5084
    %v5243 = vpop.f32.mrb[0].mxu0
    %v5244 = vadd.f32 %v3720, %v5243
    %v5245 = vpop.f32.mrb[0].mxu0
    %v5246 = vadd.f32 %v3722, %v5245
    %v5247 = vpop.f32.mrb[0].mxu0
    %v5248 = vpop.f32.mrb[0].mxu0
    %5249 = vdwg.mxu0
    %5250 = vmatprep.subr.bf16.mxu0 %v4797
    %5251 = vmatpush1.bf16.msra.mxu0 %v4796
    %5252 = vmatprep.subr.bf16.mxu0 %v4834
    %5253 = vmatpush1.bf16.msra.mxu0 %v4833
    %5254 = vmatprep.subr.bf16.mxu0 %v4871
    %5255 = vmatpush1.bf16.msra.mxu0 %v4870
    %5256 = vmatprep.subr.bf16.mxu0 %v4908
    %5257 = vmatpush1.bf16.msra.mxu0 %v4907
    %5258 = vmatprep.subr.bf16.mxu0 0
    %5259 = vmatpush1.bf16.msra.mxu0 0
    %5260 = vmatprep.subr.bf16.mxu0 0
    %5261 = vmatpush1.bf16.msra.mxu0 0
    %5262 = vmatprep.subr.bf16.mxu0 0
    %5263 = vmatpush1.bf16.msra.mxu0 0
    %5264 = vmatprep.subr.bf16.mxu0 0
    %5265 = vmatpush1.bf16.msra.mxu0 0
    %5266 = vmatprep.subr.bf16.mxu0 0
    %5267 = vmatpush1.bf16.msra.mxu0 0
    %5268 = vmatprep.subr.bf16.mxu0 0
    %5269 = vmatpush1.bf16.msra.mxu0 0
    %5270 = vmatprep.subr.bf16.mxu0 0
    %5271 = vmatpush1.bf16.msra.mxu0 0
    %5272 = vmatprep.subr.bf16.mxu0 0
    %5273 = vmatpush1.bf16.msra.mxu0 0
    %5274 = vmatprep.subr.bf16.mxu0 0
    %5275 = vmatpush1.bf16.msra.mxu0 0
    %5276 = vmatprep.subr.bf16.mxu0 0
    %5277 = vmatpush1.bf16.msra.mxu0 0
    %5278 = vmatprep.subr.bf16.mxu0 0
    %5279 = vmatpush1.bf16.msra.mxu0 0
    %5280 = vmatprep.subr.bf16.mxu0 0
    %5281 = vmatpush1.bf16.msra.mxu0 0
    %5282 = vmatprep.mubr.bf16.mxu0 0
    %5283 = vmatmul.mubr.bf16.gmra.mrb[0].mxu0 %v5084
    %v5284 = vpop.f32.mrb[0].mxu0
    %v5285 = vadd.f32 %v3761, %v5284
    %v5286 = vpop.f32.mrb[0].mxu0
    %v5287 = vadd.f32 %v3763, %v5286
    %v5288 = vpop.f32.mrb[0].mxu0
    %v5289 = vpop.f32.mrb[0].mxu0
    %5290 = vdwg.mxu0
    %5291 = vmatprep.subr.bf16.mxu0 %v4799
    %5292 = vmatpush1.bf16.msra.mxu0 %v4798
    %5293 = vmatprep.subr.bf16.mxu0 %v4836
    %5294 = vmatpush1.bf16.msra.mxu0 %v4835
    %5295 = vmatprep.subr.bf16.mxu0 %v4873
    %5296 = vmatpush1.bf16.msra.mxu0 %v4872
    %5297 = vmatprep.subr.bf16.mxu0 %v4910
    %5298 = vmatpush1.bf16.msra.mxu0 %v4909
    %5299 = vmatprep.subr.bf16.mxu0 0
    %5300 = vmatpush1.bf16.msra.mxu0 0
    %5301 = vmatprep.subr.bf16.mxu0 0
    %5302 = vmatpush1.bf16.msra.mxu0 0
    %5303 = vmatprep.subr.bf16.mxu0 0
    %5304 = vmatpush1.bf16.msra.mxu0 0
    %5305 = vmatprep.subr.bf16.mxu0 0
    %5306 = vmatpush1.bf16.msra.mxu0 0
    %5307 = vmatprep.subr.bf16.mxu0 0
    %5308 = vmatpush1.bf16.msra.mxu0 0
    %5309 = vmatprep.subr.bf16.mxu0 0
    %5310 = vmatpush1.bf16.msra.mxu0 0
    %5311 = vmatprep.subr.bf16.mxu0 0
    %5312 = vmatpush1.bf16.msra.mxu0 0
    %5313 = vmatprep.subr.bf16.mxu0 0
    %5314 = vmatpush1.bf16.msra.mxu0 0
    %5315 = vmatprep.subr.bf16.mxu0 0
    %5316 = vmatpush1.bf16.msra.mxu0 0
    %5317 = vmatprep.subr.bf16.mxu0 0
    %5318 = vmatpush1.bf16.msra.mxu0 0
    %5319 = vmatprep.subr.bf16.mxu0 0
    %5320 = vmatpush1.bf16.msra.mxu0 0
    %5321 = vmatprep.subr.bf16.mxu0 0
    %5322 = vmatpush1.bf16.msra.mxu0 0
    %5323 = vmatprep.mubr.bf16.mxu0 0
    %5324 = vmatmul.mubr.bf16.gmra.mrb[0].mxu0 %v5084
    %v5325 = vpop.f32.mrb[0].mxu0
    %v5326 = vadd.f32 %v3802, %v5325
    %v5327 = vpop.f32.mrb[0].mxu0
    %v5328 = vadd.f32 %v3804, %v5327
    %v5329 = vpop.f32.mrb[0].mxu0
    %v5330 = vpop.f32.mrb[0].mxu0
    %5331 = vdwg.mxu0
    %5332 = vmatprep.subr.bf16.mxu0 %v4801
    %5333 = vmatpush1.bf16.msra.mxu0 %v4800
    %5334 = vmatprep.subr.bf16.mxu0 %v4838
    %5335 = vmatpush1.bf16.msra.mxu0 %v4837
    %5336 = vmatprep.subr.bf16.mxu0 %v4875
    %5337 = vmatpush1.bf16.msra.mxu0 %v4874
    %5338 = vmatprep.subr.bf16.mxu0 %v4912
    %5339 = vmatpush1.bf16.msra.mxu0 %v4911
    %5340 = vmatprep.subr.bf16.mxu0 0
    %5341 = vmatpush1.bf16.msra.mxu0 0
    %5342 = vmatprep.subr.bf16.mxu0 0
    %5343 = vmatpush1.bf16.msra.mxu0 0
    %5344 = vmatprep.subr.bf16.mxu0 0
    %5345 = vmatpush1.bf16.msra.mxu0 0
    %5346 = vmatprep.subr.bf16.mxu0 0
    %5347 = vmatpush1.bf16.msra.mxu0 0
    %5348 = vmatprep.subr.bf16.mxu0 0
    %5349 = vmatpush1.bf16.msra.mxu0 0
    %5350 = vmatprep.subr.bf16.mxu0 0
    %5351 = vmatpush1.bf16.msra.mxu0 0
    %5352 = vmatprep.subr.bf16.mxu0 0
    %5353 = vmatpush1.bf16.msra.mxu0 0
    %5354 = vmatprep.subr.bf16.mxu0 0
    %5355 = vmatpush1.bf16.msra.mxu0 0
    %5356 = vmatprep.subr.bf16.mxu0 0
    %5357 = vmatpush1.bf16.msra.mxu0 0
    %5358 = vmatprep.subr.bf16.mxu0 0
    %5359 = vmatpush1.bf16.msra.mxu0 0
    %5360 = vmatprep.subr.bf16.mxu0 0
    %5361 = vmatpush1.bf16.msra.mxu0 0
    %5362 = vmatprep.subr.bf16.mxu0 0
    %5363 = vmatpush1.bf16.msra.mxu0 0
    %5364 = vmatprep.mubr.bf16.mxu0 0
    %5365 = vmatmul.mubr.bf16.gmra.mrb[0].mxu0 %v5084
    %v5366 = vpop.f32.mrb[0].mxu0
    %v5367 = vadd.f32 %v3843, %v5366
    %v5368 = vpop.f32.mrb[0].mxu0
    %v5369 = vadd.f32 %v3845, %v5368
    %v5370 = vpop.f32.mrb[0].mxu0
    %v5371 = vpop.f32.mrb[0].mxu0
    %5372 = vdwg.mxu0
    %5373 = vmatprep.subr.bf16.mxu0 %v4803
    %5374 = vmatpush1.bf16.msra.mxu0 %v4802
    %5375 = vmatprep.subr.bf16.mxu0 %v4840
    %5376 = vmatpush1.bf16.msra.mxu0 %v4839
    %5377 = vmatprep.subr.bf16.mxu0 %v4877
    %5378 = vmatpush1.bf16.msra.mxu0 %v4876
    %5379 = vmatprep.subr.bf16.mxu0 %v4914
    %5380 = vmatpush1.bf16.msra.mxu0 %v4913
    %5381 = vmatprep.subr.bf16.mxu0 0
    %5382 = vmatpush1.bf16.msra.mxu0 0
    %5383 = vmatprep.subr.bf16.mxu0 0
    %5384 = vmatpush1.bf16.msra.mxu0 0
    %5385 = vmatprep.subr.bf16.mxu0 0
    %5386 = vmatpush1.bf16.msra.mxu0 0
    %5387 = vmatprep.subr.bf16.mxu0 0
    %5388 = vmatpush1.bf16.msra.mxu0 0
    %5389 = vmatprep.subr.bf16.mxu0 0
    %5390 = vmatpush1.bf16.msra.mxu0 0
    %5391 = vmatprep.subr.bf16.mxu0 0
    %5392 = vmatpush1.bf16.msra.mxu0 0
    %5393 = vmatprep.subr.bf16.mxu0 0
    %5394 = vmatpush1.bf16.msra.mxu0 0
    %5395 = vmatprep.subr.bf16.mxu0 0
    %5396 = vmatpush1.bf16.msra.mxu0 0
    %5397 = vmatprep.subr.bf16.mxu0 0
    %5398 = vmatpush1.bf16.msra.mxu0 0
    %5399 = vmatprep.subr.bf16.mxu0 0
    %5400 = vmatpush1.bf16.msra.mxu0 0
    %5401 = vmatprep.subr.bf16.mxu0 0
    %5402 = vmatpush1.bf16.msra.mxu0 0
    %5403 = vmatprep.subr.bf16.mxu0 0
    %5404 = vmatpush1.bf16.msra.mxu0 0
    %5405 = vmatprep.mubr.bf16.mxu0 0
    %5406 = vmatmul.mubr.bf16.gmra.mrb[0].mxu0 %v5084
    %v5407 = vpop.f32.mrb[0].mxu0
    %v5408 = vadd.f32 %v3884, %v5407
    %v5409 = vpop.f32.mrb[0].mxu0
    %v5410 = vadd.f32 %v3886, %v5409
    %v5411 = vpop.f32.mrb[0].mxu0
    %v5412 = vpop.f32.mrb[0].mxu0
    %5413 = vdwg.mxu0
    %5414 = vmatprep.subr.bf16.mxu0 %v4805
    %5415 = vmatpush1.bf16.msra.mxu0 %v4804
    %5416 = vmatprep.subr.bf16.mxu0 %v4842
    %5417 = vmatpush1.bf16.msra.mxu0 %v4841
    %5418 = vmatprep.subr.bf16.mxu0 %v4879
    %5419 = vmatpush1.bf16.msra.mxu0 %v4878
    %5420 = vmatprep.subr.bf16.mxu0 %v4916
    %5421 = vmatpush1.bf16.msra.mxu0 %v4915
    %5422 = vmatprep.subr.bf16.mxu0 0
    %5423 = vmatpush1.bf16.msra.mxu0 0
    %5424 = vmatprep.subr.bf16.mxu0 0
    %5425 = vmatpush1.bf16.msra.mxu0 0
    %5426 = vmatprep.subr.bf16.mxu0 0
    %5427 = vmatpush1.bf16.msra.mxu0 0
    %5428 = vmatprep.subr.bf16.mxu0 0
    %5429 = vmatpush1.bf16.msra.mxu0 0
    %5430 = vmatprep.subr.bf16.mxu0 0
    %5431 = vmatpush1.bf16.msra.mxu0 0
    %5432 = vmatprep.subr.bf16.mxu0 0
    %5433 = vmatpush1.bf16.msra.mxu0 0
    %5434 = vmatprep.subr.bf16.mxu0 0
    %5435 = vmatpush1.bf16.msra.mxu0 0
    %5436 = vmatprep.subr.bf16.mxu0 0
    %5437 = vmatpush1.bf16.msra.mxu0 0
    %5438 = vmatprep.subr.bf16.mxu0 0
    %5439 = vmatpush1.bf16.msra.mxu0 0
    %5440 = vmatprep.subr.bf16.mxu0 0
    %5441 = vmatpush1.bf16.msra.mxu0 0
    %5442 = vmatprep.subr.bf16.mxu0 0
    %5443 = vmatpush1.bf16.msra.mxu0 0
    %5444 = vmatprep.subr.bf16.mxu0 0
    %5445 = vmatpush1.bf16.msra.mxu0 0
    %5446 = vmatprep.mubr.bf16.mxu0 0
    %5447 = vmatmul.mubr.bf16.gmra.mrb[0].mxu0 %v5084
    %v5448 = vpop.f32.mrb[0].mxu0
    %v5449 = vadd.f32 %v3925, %v5448
    %v5450 = vpop.f32.mrb[0].mxu0
    %v5451 = vadd.f32 %v3927, %v5450
    %v5452 = vpop.f32.mrb[0].mxu0
    %v5453 = vpop.f32.mrb[0].mxu0
    %5454 = vdwg.mxu0
    %5455 = vmatprep.subr.bf16.mxu0 %v4807
    %5456 = vmatpush1.bf16.msra.mxu0 %v4806
    %5457 = vmatprep.subr.bf16.mxu0 %v4844
    %5458 = vmatpush1.bf16.msra.mxu0 %v4843
    %5459 = vmatprep.subr.bf16.mxu0 %v4881
    %5460 = vmatpush1.bf16.msra.mxu0 %v4880
    %5461 = vmatprep.subr.bf16.mxu0 %v4918
    %5462 = vmatpush1.bf16.msra.mxu0 %v4917
    %5463 = vmatprep.subr.bf16.mxu0 0
    %5464 = vmatpush1.bf16.msra.mxu0 0
    %5465 = vmatprep.subr.bf16.mxu0 0
    %5466 = vmatpush1.bf16.msra.mxu0 0
    %5467 = vmatprep.subr.bf16.mxu0 0
    %5468 = vmatpush1.bf16.msra.mxu0 0
    %5469 = vmatprep.subr.bf16.mxu0 0
    %5470 = vmatpush1.bf16.msra.mxu0 0
    %5471 = vmatprep.subr.bf16.mxu0 0
    %5472 = vmatpush1.bf16.msra.mxu0 0
    %5473 = vmatprep.subr.bf16.mxu0 0
    %5474 = vmatpush1.bf16.msra.mxu0 0
    %5475 = vmatprep.subr.bf16.mxu0 0
    %5476 = vmatpush1.bf16.msra.mxu0 0
    %5477 = vmatprep.subr.bf16.mxu0 0
    %5478 = vmatpush1.bf16.msra.mxu0 0
    %5479 = vmatprep.subr.bf16.mxu0 0
    %5480 = vmatpush1.bf16.msra.mxu0 0
    %5481 = vmatprep.subr.bf16.mxu0 0
    %5482 = vmatpush1.bf16.msra.mxu0 0
    %5483 = vmatprep.subr.bf16.mxu0 0
    %5484 = vmatpush1.bf16.msra.mxu0 0
    %5485 = vmatprep.subr.bf16.mxu0 0
    %5486 = vmatpush1.bf16.msra.mxu0 0
    %5487 = vmatprep.mubr.bf16.mxu0 0
    %5488 = vmatmul.mubr.bf16.gmra.mrb[0].mxu0 %v5084
    %v5489 = vpop.f32.mrb[0].mxu0
    %v5490 = vadd.f32 %v3966, %v5489
    %v5491 = vpop.f32.mrb[0].mxu0
    %v5492 = vadd.f32 %v3968, %v5491
    %v5493 = vpop.f32.mrb[0].mxu0
    %v5494 = vpop.f32.mrb[0].mxu0
    %5495 = vdwg.mxu0
    %5496 = vmatprep.subr.bf16.mxu0 %v4809
    %5497 = vmatpush1.bf16.msra.mxu0 %v4808
    %5498 = vmatprep.subr.bf16.mxu0 %v4846
    %5499 = vmatpush1.bf16.msra.mxu0 %v4845
    %5500 = vmatprep.subr.bf16.mxu0 %v4883
    %5501 = vmatpush1.bf16.msra.mxu0 %v4882
    %5502 = vmatprep.subr.bf16.mxu0 %v4920
    %5503 = vmatpush1.bf16.msra.mxu0 %v4919
    %5504 = vmatprep.subr.bf16.mxu0 0
    %5505 = vmatpush1.bf16.msra.mxu0 0
    %5506 = vmatprep.subr.bf16.mxu0 0
    %5507 = vmatpush1.bf16.msra.mxu0 0
    %5508 = vmatprep.subr.bf16.mxu0 0
    %5509 = vmatpush1.bf16.msra.mxu0 0
    %5510 = vmatprep.subr.bf16.mxu0 0
    %5511 = vmatpush1.bf16.msra.mxu0 0
    %5512 = vmatprep.subr.bf16.mxu0 0
    %5513 = vmatpush1.bf16.msra.mxu0 0
    %5514 = vmatprep.subr.bf16.mxu0 0
    %5515 = vmatpush1.bf16.msra.mxu0 0
    %5516 = vmatprep.subr.bf16.mxu0 0
    %5517 = vmatpush1.bf16.msra.mxu0 0
    %5518 = vmatprep.subr.bf16.mxu0 0
    %5519 = vmatpush1.bf16.msra.mxu0 0
    %5520 = vmatprep.subr.bf16.mxu0 0
    %5521 = vmatpush1.bf16.msra.mxu0 0
    %5522 = vmatprep.subr.bf16.mxu0 0
    %5523 = vmatpush1.bf16.msra.mxu0 0
    %5524 = vmatprep.subr.bf16.mxu0 0
    %5525 = vmatpush1.bf16.msra.mxu0 0
    %5526 = vmatprep.subr.bf16.mxu0 0
    %5527 = vmatpush1.bf16.msra.mxu0 0
    %5528 = vmatprep.mubr.bf16.mxu0 0
    %5529 = vmatmul.mubr.bf16.gmra.mrb[0].mxu0 %v5084
    %v5530 = vpop.f32.mrb[0].mxu0
    %v5531 = vadd.f32 %v4007, %v5530
    %v5532 = vpop.f32.mrb[0].mxu0
    %v5533 = vadd.f32 %v4009, %v5532
    %v5534 = vpop.f32.mrb[0].mxu0
    %v5535 = vpop.f32.mrb[0].mxu0
    %5536 = vdwg.mxu0
    %5537 = vmatprep.subr.bf16.mxu0 %v4811
    %5538 = vmatpush1.bf16.msra.mxu0 %v4810
    %5539 = vmatprep.subr.bf16.mxu0 %v4848
    %5540 = vmatpush1.bf16.msra.mxu0 %v4847
    %5541 = vmatprep.subr.bf16.mxu0 %v4885
    %5542 = vmatpush1.bf16.msra.mxu0 %v4884
    %5543 = vmatprep.subr.bf16.mxu0 %v4922
    %5544 = vmatpush1.bf16.msra.mxu0 %v4921
    %5545 = vmatprep.subr.bf16.mxu0 0
    %5546 = vmatpush1.bf16.msra.mxu0 0
    %5547 = vmatprep.subr.bf16.mxu0 0
    %5548 = vmatpush1.bf16.msra.mxu0 0
    %5549 = vmatprep.subr.bf16.mxu0 0
    %5550 = vmatpush1.bf16.msra.mxu0 0
    %5551 = vmatprep.subr.bf16.mxu0 0
    %5552 = vmatpush1.bf16.msra.mxu0 0
    %5553 = vmatprep.subr.bf16.mxu0 0
    %5554 = vmatpush1.bf16.msra.mxu0 0
    %5555 = vmatprep.subr.bf16.mxu0 0
    %5556 = vmatpush1.bf16.msra.mxu0 0
    %5557 = vmatprep.subr.bf16.mxu0 0
    %5558 = vmatpush1.bf16.msra.mxu0 0
    %5559 = vmatprep.subr.bf16.mxu0 0
    %5560 = vmatpush1.bf16.msra.mxu0 0
    %5561 = vmatprep.subr.bf16.mxu0 0
    %5562 = vmatpush1.bf16.msra.mxu0 0
    %5563 = vmatprep.subr.bf16.mxu0 0
    %5564 = vmatpush1.bf16.msra.mxu0 0
    %5565 = vmatprep.subr.bf16.mxu0 0
    %5566 = vmatpush1.bf16.msra.mxu0 0
    %5567 = vmatprep.subr.bf16.mxu0 0
    %5568 = vmatpush1.bf16.msra.mxu0 0
    %5569 = vmatprep.mubr.bf16.mxu0 0
    %5570 = vmatmul.mubr.bf16.gmra.mrb[0].mxu0 %v5084
    %v5571 = vpop.f32.mrb[0].mxu0
    %v5572 = vadd.f32 %v4048, %v5571
    %v5573 = vpop.f32.mrb[0].mxu0
    %v5574 = vadd.f32 %v4050, %v5573
    %v5575 = vpop.f32.mrb[0].mxu0
    %v5576 = vpop.f32.mrb[0].mxu0
    %5577 = vdwg.mxu0
    %5578 = vmatprep.subr.bf16.mxu0 %v4813
    %5579 = vmatpush1.bf16.msra.mxu0 %v4812
    %5580 = vmatprep.subr.bf16.mxu0 %v4850
    %5581 = vmatpush1.bf16.msra.mxu0 %v4849
    %5582 = vmatprep.subr.bf16.mxu0 %v4887
    %5583 = vmatpush1.bf16.msra.mxu0 %v4886
    %5584 = vmatprep.subr.bf16.mxu0 %v4924
    %5585 = vmatpush1.bf16.msra.mxu0 %v4923
    %5586 = vmatprep.subr.bf16.mxu0 0
    %5587 = vmatpush1.bf16.msra.mxu0 0
    %5588 = vmatprep.subr.bf16.mxu0 0
    %5589 = vmatpush1.bf16.msra.mxu0 0
    %5590 = vmatprep.subr.bf16.mxu0 0
    %5591 = vmatpush1.bf16.msra.mxu0 0
    %5592 = vmatprep.subr.bf16.mxu0 0
    %5593 = vmatpush1.bf16.msra.mxu0 0
    %5594 = vmatprep.subr.bf16.mxu0 0
    %5595 = vmatpush1.bf16.msra.mxu0 0
    %5596 = vmatprep.subr.bf16.mxu0 0
    %5597 = vmatpush1.bf16.msra.mxu0 0
    %5598 = vmatprep.subr.bf16.mxu0 0
    %5599 = vmatpush1.bf16.msra.mxu0 0
    %5600 = vmatprep.subr.bf16.mxu0 0
    %5601 = vmatpush1.bf16.msra.mxu0 0
    %5602 = vmatprep.subr.bf16.mxu0 0
    %5603 = vmatpush1.bf16.msra.mxu0 0
    %5604 = vmatprep.subr.bf16.mxu0 0
    %5605 = vmatpush1.bf16.msra.mxu0 0
    %5606 = vmatprep.subr.bf16.mxu0 0
    %5607 = vmatpush1.bf16.msra.mxu0 0
    %5608 = vmatprep.subr.bf16.mxu0 0
    %5609 = vmatpush1.bf16.msra.mxu0 0
    %5610 = vmatprep.mubr.bf16.mxu0 0
    %5611 = vmatmul.mubr.bf16.gmra.mrb[0].mxu0 %v5084
    %v5612 = vpop.f32.mrb[0].mxu0
    %v5613 = vadd.f32 %v4089, %v5612
    %v5614 = vpop.f32.mrb[0].mxu0
    %v5615 = vadd.f32 %v4091, %v5614
    %v5616 = vpop.f32.mrb[0].mxu0
    %v5617 = vpop.f32.mrb[0].mxu0
    %5618 = vdwg.mxu0
    %5619 = vmatprep.subr.bf16.mxu0 %v4815
    %5620 = vmatpush1.bf16.msra.mxu0 %v4814
    %5621 = vmatprep.subr.bf16.mxu0 %v4852
    %5622 = vmatpush1.bf16.msra.mxu0 %v4851
    %5623 = vmatprep.subr.bf16.mxu0 %v4889
    %5624 = vmatpush1.bf16.msra.mxu0 %v4888
    %5625 = vmatprep.subr.bf16.mxu0 %v4926
    %5626 = vmatpush1.bf16.msra.mxu0 %v4925
    %5627 = vmatprep.subr.bf16.mxu0 0
    %5628 = vmatpush1.bf16.msra.mxu0 0
    %5629 = vmatprep.subr.bf16.mxu0 0
    %5630 = vmatpush1.bf16.msra.mxu0 0
    %5631 = vmatprep.subr.bf16.mxu0 0
    %5632 = vmatpush1.bf16.msra.mxu0 0
    %5633 = vmatprep.subr.bf16.mxu0 0
    %5634 = vmatpush1.bf16.msra.mxu0 0
    %5635 = vmatprep.subr.bf16.mxu0 0
    %5636 = vmatpush1.bf16.msra.mxu0 0
    %5637 = vmatprep.subr.bf16.mxu0 0
    %5638 = vmatpush1.bf16.msra.mxu0 0
    %5639 = vmatprep.subr.bf16.mxu0 0
    %5640 = vmatpush1.bf16.msra.mxu0 0
    %5641 = vmatprep.subr.bf16.mxu0 0
    %5642 = vmatpush1.bf16.msra.mxu0 0
    %5643 = vmatprep.subr.bf16.mxu0 0
    %5644 = vmatpush1.bf16.msra.mxu0 0
    %5645 = vmatprep.subr.bf16.mxu0 0
    %5646 = vmatpush1.bf16.msra.mxu0 0
    %5647 = vmatprep.subr.bf16.mxu0 0
    %5648 = vmatpush1.bf16.msra.mxu0 0
    %5649 = vmatprep.subr.bf16.mxu0 0
    %5650 = vmatpush1.bf16.msra.mxu0 0
    %5651 = vmatprep.mubr.bf16.mxu0 0
    %5652 = vmatmul.mubr.bf16.gmra.mrb[0].mxu0 %v5084
    %v5653 = vpop.f32.mrb[0].mxu0
    %v5654 = vadd.f32 %v4130, %v5653
    %v5655 = vpop.f32.mrb[0].mxu0
    %v5656 = vadd.f32 %v4132, %v5655
    %v5657 = vpop.f32.mrb[0].mxu0
    %v5658 = vpop.f32.mrb[0].mxu0
    %5659 = vdwg.mxu0
    %5660 = vmatprep.subr.bf16.mxu0 %v4817
    %5661 = vmatpush1.bf16.msra.mxu0 %v4816
    %5662 = vmatprep.subr.bf16.mxu0 %v4854
    %5663 = vmatpush1.bf16.msra.mxu0 %v4853
    %5664 = vmatprep.subr.bf16.mxu0 %v4891
    %5665 = vmatpush1.bf16.msra.mxu0 %v4890
    %5666 = vmatprep.subr.bf16.mxu0 %v4928
    %5667 = vmatpush1.bf16.msra.mxu0 %v4927
    %5668 = vmatprep.subr.bf16.mxu0 0
    %5669 = vmatpush1.bf16.msra.mxu0 0
    %5670 = vmatprep.subr.bf16.mxu0 0
    %5671 = vmatpush1.bf16.msra.mxu0 0
    %5672 = vmatprep.subr.bf16.mxu0 0
    %5673 = vmatpush1.bf16.msra.mxu0 0
    %5674 = vmatprep.subr.bf16.mxu0 0
    %5675 = vmatpush1.bf16.msra.mxu0 0
    %5676 = vmatprep.subr.bf16.mxu0 0
    %5677 = vmatpush1.bf16.msra.mxu0 0
    %5678 = vmatprep.subr.bf16.mxu0 0
    %5679 = vmatpush1.bf16.msra.mxu0 0
    %5680 = vmatprep.subr.bf16.mxu0 0
    %5681 = vmatpush1.bf16.msra.mxu0 0
    %5682 = vmatprep.subr.bf16.mxu0 0
    %5683 = vmatpush1.bf16.msra.mxu0 0
    %5684 = vmatprep.subr.bf16.mxu0 0
    %5685 = vmatpush1.bf16.msra.mxu0 0
    %5686 = vmatprep.subr.bf16.mxu0 0
    %5687 = vmatpush1.bf16.msra.mxu0 0
    %5688 = vmatprep.subr.bf16.mxu0 0
    %5689 = vmatpush1.bf16.msra.mxu0 0
    %5690 = vmatprep.subr.bf16.mxu0 0
    %5691 = vmatpush1.bf16.msra.mxu0 0
    %5692 = vmatprep.mubr.bf16.mxu0 0
    %5693 = vmatmul.mubr.bf16.gmra.mrb[0].mxu0 %v5084
    %v5694 = vpop.f32.mrb[0].mxu0
    %v5695 = vadd.f32 %v4171, %v5694
    %v5696 = vpop.f32.mrb[0].mxu0
    %v5697 = vadd.f32 %v4173, %v5696
    %v5698 = vpop.f32.mrb[0].mxu0
    %v5699 = vpop.f32.mrb[0].mxu0
    %5700 = vdwg.mxu0
    %5701 = vmatprep.subr.bf16.mxu0 %v4819
    %5702 = vmatpush1.bf16.msra.mxu0 %v4818
    %5703 = vmatprep.subr.bf16.mxu0 %v4856
    %5704 = vmatpush1.bf16.msra.mxu0 %v4855
    %5705 = vmatprep.subr.bf16.mxu0 %v4893
    %5706 = vmatpush1.bf16.msra.mxu0 %v4892
    %5707 = vmatprep.subr.bf16.mxu0 %v4930
    %5708 = vmatpush1.bf16.msra.mxu0 %v4929
    %5709 = vmatprep.subr.bf16.mxu0 0
    %5710 = vmatpush1.bf16.msra.mxu0 0
    %5711 = vmatprep.subr.bf16.mxu0 0
    %5712 = vmatpush1.bf16.msra.mxu0 0
    %5713 = vmatprep.subr.bf16.mxu0 0
    %5714 = vmatpush1.bf16.msra.mxu0 0
    %5715 = vmatprep.subr.bf16.mxu0 0
    %5716 = vmatpush1.bf16.msra.mxu0 0
    %5717 = vmatprep.subr.bf16.mxu0 0
    %5718 = vmatpush1.bf16.msra.mxu0 0
    %5719 = vmatprep.subr.bf16.mxu0 0
    %5720 = vmatpush1.bf16.msra.mxu0 0
    %5721 = vmatprep.subr.bf16.mxu0 0
    %5722 = vmatpush1.bf16.msra.mxu0 0
    %5723 = vmatprep.subr.bf16.mxu0 0
    %5724 = vmatpush1.bf16.msra.mxu0 0
    %5725 = vmatprep.subr.bf16.mxu0 0
    %5726 = vmatpush1.bf16.msra.mxu0 0
    %5727 = vmatprep.subr.bf16.mxu0 0
    %5728 = vmatpush1.bf16.msra.mxu0 0
    %5729 = vmatprep.subr.bf16.mxu0 0
    %5730 = vmatpush1.bf16.msra.mxu0 0
    %5731 = vmatprep.subr.bf16.mxu0 0
    %5732 = vmatpush1.bf16.msra.mxu0 0
    %5733 = vmatprep.mubr.bf16.mxu0 0
    %5734 = vmatmul.mubr.bf16.gmra.mrb[0].mxu0 %v5084
    %v5735 = vpop.f32.mrb[0].mxu0
    %v5736 = vadd.f32 %v4212, %v5735
    %v5737 = vpop.f32.mrb[0].mxu0
    %v5738 = vadd.f32 %v4214, %v5737
    %v5739 = vpop.f32.mrb[0].mxu0
    %v5740 = vpop.f32.mrb[0].mxu0
    %5741 = vdwg.mxu0
    %5742 = vmatprep.subr.bf16.mxu0 %v4821
    %5743 = vmatpush1.bf16.msra.mxu0 %v4820
    %5744 = vmatprep.subr.bf16.mxu0 %v4858
    %5745 = vmatpush1.bf16.msra.mxu0 %v4857
    %5746 = vmatprep.subr.bf16.mxu0 %v4895
    %5747 = vmatpush1.bf16.msra.mxu0 %v4894
    %5748 = vmatprep.subr.bf16.mxu0 %v4932
    %5749 = vmatpush1.bf16.msra.mxu0 %v4931
    %5750 = vmatprep.subr.bf16.mxu0 0
    %5751 = vmatpush1.bf16.msra.mxu0 0
    %5752 = vmatprep.subr.bf16.mxu0 0
    %5753 = vmatpush1.bf16.msra.mxu0 0
    %5754 = vmatprep.subr.bf16.mxu0 0
    %5755 = vmatpush1.bf16.msra.mxu0 0
    %5756 = vmatprep.subr.bf16.mxu0 0
    %5757 = vmatpush1.bf16.msra.mxu0 0
    %5758 = vmatprep.subr.bf16.mxu0 0
    %5759 = vmatpush1.bf16.msra.mxu0 0
    %5760 = vmatprep.subr.bf16.mxu0 0
    %5761 = vmatpush1.bf16.msra.mxu0 0
    %5762 = vmatprep.subr.bf16.mxu0 0
    %5763 = vmatpush1.bf16.msra.mxu0 0
    %5764 = vmatprep.subr.bf16.mxu0 0
    %5765 = vmatpush1.bf16.msra.mxu0 0
    %5766 = vmatprep.subr.bf16.mxu0 0
    %5767 = vmatpush1.bf16.msra.mxu0 0
    %5768 = vmatprep.subr.bf16.mxu0 0
    %5769 = vmatpush1.bf16.msra.mxu0 0
    %5770 = vmatprep.subr.bf16.mxu0 0
    %5771 = vmatpush1.bf16.msra.mxu0 0
    %5772 = vmatprep.subr.bf16.mxu0 0
    %5773 = vmatpush1.bf16.msra.mxu0 0
    %5774 = vmatprep.mubr.bf16.mxu0 0
    %5775 = vmatmul.mubr.bf16.gmra.mrb[0].mxu0 %v5084
    %v5776 = vpop.f32.mrb[0].mxu0
    %v5777 = vadd.f32 %v4253, %v5776
    %v5778 = vpop.f32.mrb[0].mxu0
    %v5779 = vadd.f32 %v4255, %v5778
    %v5780 = vpop.f32.mrb[0].mxu0
    %v5781 = vpop.f32.mrb[0].mxu0
    %5782 = vdwg.mxu0
    %5783 = vmatprep.subr.bf16.mxu0 %v4823
    %5784 = vmatpush1.bf16.msra.mxu0 %v4822
    %5785 = vmatprep.subr.bf16.mxu0 %v4860
    %5786 = vmatpush1.bf16.msra.mxu0 %v4859
    %5787 = vmatprep.subr.bf16.mxu0 %v4897
    %5788 = vmatpush1.bf16.msra.mxu0 %v4896
    %5789 = vmatprep.subr.bf16.mxu0 %v4934
    %5790 = vmatpush1.bf16.msra.mxu0 %v4933
    %5791 = vmatprep.subr.bf16.mxu0 0
    %5792 = vmatpush1.bf16.msra.mxu0 0
    %5793 = vmatprep.subr.bf16.mxu0 0
    %5794 = vmatpush1.bf16.msra.mxu0 0
    %5795 = vmatprep.subr.bf16.mxu0 0
    %5796 = vmatpush1.bf16.msra.mxu0 0
    %5797 = vmatprep.subr.bf16.mxu0 0
    %5798 = vmatpush1.bf16.msra.mxu0 0
    %5799 = vmatprep.subr.bf16.mxu0 0
    %5800 = vmatpush1.bf16.msra.mxu0 0
    %5801 = vmatprep.subr.bf16.mxu0 0
    %5802 = vmatpush1.bf16.msra.mxu0 0
    %5803 = vmatprep.subr.bf16.mxu0 0
    %5804 = vmatpush1.bf16.msra.mxu0 0
    %5805 = vmatprep.subr.bf16.mxu0 0
    %5806 = vmatpush1.bf16.msra.mxu0 0
    %5807 = vmatprep.subr.bf16.mxu0 0
    %5808 = vmatpush1.bf16.msra.mxu0 0
    %5809 = vmatprep.subr.bf16.mxu0 0
    %5810 = vmatpush1.bf16.msra.mxu0 0
    %5811 = vmatprep.subr.bf16.mxu0 0
    %5812 = vmatpush1.bf16.msra.mxu0 0
    %5813 = vmatprep.subr.bf16.mxu0 0
    %5814 = vmatpush1.bf16.msra.mxu0 0
    %5815 = vmatprep.mubr.bf16.mxu0 0
    %5816 = vmatmul.mubr.bf16.gmra.mrb[0].mxu0 %v5084
    %v5817 = vpop.f32.mrb[0].mxu0
    %v5818 = vadd.f32 %v4294, %v5817
    %v5819 = vpop.f32.mrb[0].mxu0
    %v5820 = vadd.f32 %v4296, %v5819
    %v5821 = vpop.f32.mrb[0].mxu0
    %v5822 = vpop.f32.mrb[0].mxu0
    %5823 = vdwg.mxu0
    %5824 = vmatprep.subr.bf16.mxu0 0
    %5825 = vmatpush1.bf16.msra.mxu0 %v4824
    %5826 = vmatprep.subr.bf16.mxu0 0
    %5827 = vmatpush1.bf16.msra.mxu0 %v4861
    %5828 = vmatprep.subr.bf16.mxu0 0
    %5829 = vmatpush1.bf16.msra.mxu0 %v4898
    %5830 = vmatprep.subr.bf16.mxu0 0
    %5831 = vmatpush1.bf16.msra.mxu0 %v4935
    %5832 = vmatprep.subr.bf16.mxu0 0
    %5833 = vmatpush1.bf16.msra.mxu0 0
    %5834 = vmatprep.subr.bf16.mxu0 0
    %5835 = vmatpush1.bf16.msra.mxu0 0
    %5836 = vmatprep.subr.bf16.mxu0 0
    %5837 = vmatpush1.bf16.msra.mxu0 0
    %5838 = vmatprep.subr.bf16.mxu0 0
    %5839 = vmatpush1.bf16.msra.mxu0 0
    %5840 = vmatprep.subr.bf16.mxu0 0
    %5841 = vmatpush1.bf16.msra.mxu0 0
    %5842 = vmatprep.subr.bf16.mxu0 0
    %5843 = vmatpush1.bf16.msra.mxu0 0
    %5844 = vmatprep.subr.bf16.mxu0 0
    %5845 = vmatpush1.bf16.msra.mxu0 0
    %5846 = vmatprep.subr.bf16.mxu0 0
    %5847 = vmatpush1.bf16.msra.mxu0 0
    %5848 = vmatprep.subr.bf16.mxu0 0
    %5849 = vmatpush1.bf16.msra.mxu0 0
    %5850 = vmatprep.subr.bf16.mxu0 0
    %5851 = vmatpush1.bf16.msra.mxu0 0
    %5852 = vmatprep.subr.bf16.mxu0 0
    %5853 = vmatpush1.bf16.msra.mxu0 0
    %5854 = vmatprep.subr.bf16.mxu0 0
    %5855 = vmatpush1.bf16.msra.mxu0 0
    %5856 = vmatprep.mubr.bf16.mxu0 0
    %5857 = vmatmul.mubr.bf16.gmra.mrb[0].mxu0 %v5084
    %v5858 = vpop.f32.mrb[0].mxu0
    %v5859 = vadd.f32 %v4335, %v5858
    %v5860 = vpop.f32.mrb[0].mxu0
    %v5861 = vpop.f32.mrb[0].mxu0
    %v5862 = vpop.f32.mrb[0].mxu0
    %5863 = vdwg.mxu0
    %v5864 = vld [vmem:[%s11] sm:$0xff]
    %v5865 = vld [vmem:[%s11 + $0x8] sm:$0xff]
    %v5866 = vld [vmem:[%s11 + $0x10] sm:$0xff]
    %v5867 = vld [vmem:[%s11 + $0x18] sm:$0xff]
    %v5868 = vld [vmem:[%s11 + $0x20] sm:$0x1f]
    %v5874 = vlaneseq
    %v5875 = vshrl.u32 %v5874, 7
    %v5876 = vsub.s32 0, %v5875
    %v5877 = vrot.slane %v5864, %v5876
    %v5878 = vlaneseq
    %v5879 = vshrl.u32 %v5878, 7
    %v5880 = vsub.s32 1, %v5879
    %v5881 = vrot.slane %v5864, %v5880
    %v5882 = vlaneseq
    %v5883 = vshrl.u32 %v5882, 7
    %v5884 = vsub.s32 2, %v5883
    %v5885 = vrot.slane %v5864, %v5884
    %v5886 = vlaneseq
    %v5887 = vshrl.u32 %v5886, 7
    %v5888 = vsub.s32 3, %v5887
    %v5889 = vrot.slane %v5864, %v5888
    %v5890 = vlaneseq
    %v5891 = vshrl.u32 %v5890, 7
    %v5892 = vsub.s32 4, %v5891
    %v5893 = vrot.slane %v5864, %v5892
    %v5894 = vlaneseq
    %v5895 = vshrl.u32 %v5894, 7
    %v5896 = vsub.s32 5, %v5895
    %v5897 = vrot.slane %v5864, %v5896
    %v5898 = vlaneseq
    %v5899 = vshrl.u32 %v5898, 7
    %v5900 = vsub.s32 6, %v5899
    %v5901 = vrot.slane %v5864, %v5900
    %v5902 = vlaneseq
    %v5903 = vshrl.u32 %v5902, 7
    %v5904 = vsub.s32 7, %v5903
    %v5905 = vrot.slane %v5864, %v5904
    %v5906 = vlaneseq
    %v5907 = vshrl.u32 %v5906, 7
    %v5908 = vsub.s32 0, %v5907
    %v5909 = vrot.slane %v5865, %v5908
    %v5910 = vlaneseq
    %v5911 = vshrl.u32 %v5910, 7
    %v5912 = vsub.s32 1, %v5911
    %v5913 = vrot.slane %v5865, %v5912
    %v5914 = vlaneseq
    %v5915 = vshrl.u32 %v5914, 7
    %v5916 = vsub.s32 2, %v5915
    %v5917 = vrot.slane %v5865, %v5916
    %v5918 = vlaneseq
    %v5919 = vshrl.u32 %v5918, 7
    %v5920 = vsub.s32 3, %v5919
    %v5921 = vrot.slane %v5865, %v5920
    %v5922 = vlaneseq
    %v5923 = vshrl.u32 %v5922, 7
    %v5924 = vsub.s32 4, %v5923
    %v5925 = vrot.slane %v5865, %v5924
    %v5926 = vlaneseq
    %v5927 = vshrl.u32 %v5926, 7
    %v5928 = vsub.s32 5, %v5927
    %v5929 = vrot.slane %v5865, %v5928
    %v5930 = vlaneseq
    %v5931 = vshrl.u32 %v5930, 7
    %v5932 = vsub.s32 6, %v5931
    %v5933 = vrot.slane %v5865, %v5932
    %v5934 = vlaneseq
    %v5935 = vshrl.u32 %v5934, 7
    %v5936 = vsub.s32 7, %v5935
    %v5937 = vrot.slane %v5865, %v5936
    %v5938 = vlaneseq
    %v5939 = vshrl.u32 %v5938, 7
    %v5940 = vsub.s32 0, %v5939
    %v5941 = vrot.slane %v5866, %v5940
    %v5942 = vlaneseq
    %v5943 = vshrl.u32 %v5942, 7
    %v5944 = vsub.s32 1, %v5943
    %v5945 = vrot.slane %v5866, %v5944
    %v5946 = vlaneseq
    %v5947 = vshrl.u32 %v5946, 7
    %v5948 = vsub.s32 2, %v5947
    %v5949 = vrot.slane %v5866, %v5948
    %v5950 = vlaneseq
    %v5951 = vshrl.u32 %v5950, 7
    %v5952 = vsub.s32 3, %v5951
    %v5953 = vrot.slane %v5866, %v5952
    %v5954 = vlaneseq
    %v5955 = vshrl.u32 %v5954, 7
    %v5956 = vsub.s32 4, %v5955
    %v5957 = vrot.slane %v5866, %v5956
    %v5958 = vlaneseq
    %v5959 = vshrl.u32 %v5958, 7
    %v5960 = vsub.s32 5, %v5959
    %v5961 = vrot.slane %v5866, %v5960
    %v5962 = vlaneseq
    %v5963 = vshrl.u32 %v5962, 7
    %v5964 = vsub.s32 6, %v5963
    %v5965 = vrot.slane %v5866, %v5964
    %v5966 = vlaneseq
    %v5967 = vshrl.u32 %v5966, 7
    %v5968 = vsub.s32 7, %v5967
    %v5969 = vrot.slane %v5866, %v5968
    %v5970 = vlaneseq
    %v5971 = vshrl.u32 %v5970, 7
    %v5972 = vsub.s32 0, %v5971
    %v5973 = vrot.slane %v5867, %v5972
    %v5974 = vlaneseq
    %v5975 = vshrl.u32 %v5974, 7
    %v5976 = vsub.s32 1, %v5975
    %v5977 = vrot.slane %v5867, %v5976
    %v5978 = vlaneseq
    %v5979 = vshrl.u32 %v5978, 7
    %v5980 = vsub.s32 2, %v5979
    %v5981 = vrot.slane %v5867, %v5980
    %v5982 = vlaneseq
    %v5983 = vshrl.u32 %v5982, 7
    %v5984 = vsub.s32 3, %v5983
    %v5985 = vrot.slane %v5867, %v5984
    %v5986 = vlaneseq
    %v5987 = vshrl.u32 %v5986, 7
    %v5988 = vsub.s32 4, %v5987
    %v5989 = vrot.slane %v5867, %v5988
    %v5990 = vlaneseq
    %v5991 = vshrl.u32 %v5990, 7
    %v5992 = vsub.s32 5, %v5991
    %v5993 = vrot.slane %v5867, %v5992
    %v5994 = vlaneseq
    %v5995 = vshrl.u32 %v5994, 7
    %v5996 = vsub.s32 6, %v5995
    %v5997 = vrot.slane %v5867, %v5996
    %v5998 = vlaneseq
    %v5999 = vshrl.u32 %v5998, 7
    %v6000 = vsub.s32 7, %v5999
    %v6001 = vrot.slane %v5867, %v6000
    %v6002 = vlaneseq
    %v6003 = vshrl.u32 %v6002, 7
    %v6004 = vsub.s32 0, %v6003
    %v6005 = vrot.slane %v5868, %v6004
    %v6006 = vlaneseq
    %v6007 = vshrl.u32 %v6006, 7
    %v6008 = vsub.s32 1, %v6007
    %v6009 = vrot.slane %v5868, %v6008
    %v6010 = vlaneseq
    %v6011 = vshrl.u32 %v6010, 7
    %v6012 = vsub.s32 2, %v6011
    %v6013 = vrot.slane %v5868, %v6012
    %v6014 = vlaneseq
    %v6015 = vshrl.u32 %v6014, 7
    %v6016 = vsub.s32 3, %v6015
    %v6017 = vrot.slane %v5868, %v6016
    %v6018 = vlaneseq
    %v6019 = vshrl.u32 %v6018, 7
    %v6020 = vsub.s32 4, %v6019
    %v6021 = vrot.slane %v5868, %v6020
    %v6059 = vadd.f32 %v5121, %v5877
    %v6060 = vadd.f32 %v5123, %v5881
    %v6061 = vadd.f32 %v5162, %v5885
    %v6062 = vadd.f32 %v5164, %v5889
    %v6063 = vadd.f32 %v5203, %v5893
    %v6064 = vadd.f32 %v5205, %v5897
    %v6065 = vadd.f32 %v5244, %v5901
    %v6066 = vadd.f32 %v5246, %v5905
    %v6067 = vadd.f32 %v5285, %v5909
    %v6068 = vadd.f32 %v5287, %v5913
    %v6069 = vadd.f32 %v5326, %v5917
    %v6070 = vadd.f32 %v5328, %v5921
    %v6071 = vadd.f32 %v5367, %v5925
    %v6072 = vadd.f32 %v5369, %v5929
    %v6073 = vadd.f32 %v5408, %v5933
    %v6074 = vadd.f32 %v5410, %v5937
    %v6075 = vadd.f32 %v5449, %v5941
    %v6076 = vadd.f32 %v5451, %v5945
    %v6077 = vadd.f32 %v5490, %v5949
    %v6078 = vadd.f32 %v5492, %v5953
    %v6079 = vadd.f32 %v5531, %v5957
    %v6080 = vadd.f32 %v5533, %v5961
    %v6081 = vadd.f32 %v5572, %v5965
    %v6082 = vadd.f32 %v5574, %v5969
    %v6083 = vadd.f32 %v5613, %v5973
    %v6084 = vadd.f32 %v5615, %v5977
    %v6085 = vadd.f32 %v5654, %v5981
    %v6086 = vadd.f32 %v5656, %v5985
    %v6087 = vadd.f32 %v5695, %v5989
    %v6088 = vadd.f32 %v5697, %v5993
    %v6089 = vadd.f32 %v5736, %v5997
    %v6090 = vadd.f32 %v5738, %v6001
    %v6091 = vadd.f32 %v5777, %v6005
    %v6092 = vadd.f32 %v5779, %v6009
    %v6093 = vadd.f32 %v5818, %v6013
    %v6094 = vadd.f32 %v5820, %v6017
    %v6095 = vadd.f32 %v5859, %v6021
    %v6133 = vcombine.low %v6059, %v6060
    %v6134 = vcombine.low %v6061, %v6062
    %v6135 = vcombine.low %v6063, %v6064
    %v6136 = vcombine.low %v6065, %v6066
    %v6138 = vunpack.c.l.s4 1966171168
    %v6139 = vunpack.c.0.s8 %v6138
    %v6140 = vlaneseq
    %v6141 = vshrl.u32 %v6140, 7
    %v6142 = vsub.s32 %v6139, %v6141
    %v6143 = vrot.slane %v6133, %v6142
    %v6145 = vunpack.c.l.s4 1966171168
    %v6146 = vunpack.c.0.s8 %v6145
    %v6147 = vlaneseq
    %v6148 = vshrl.u32 %v6147, 7
    %v6149 = vsub.s32 %v6146, %v6148
    %v6150 = vrot.slane %v6134, %v6149
    %v6152 = vunpack.c.l.s4 1966171168
    %v6153 = vunpack.c.0.s8 %v6152
    %v6154 = vlaneseq
    %v6155 = vshrl.u32 %v6154, 7
    %v6156 = vsub.s32 %v6153, %v6155
    %v6157 = vrot.slane %v6135, %v6156
    %v6159 = vunpack.c.l.s4 1966171168
    %v6160 = vunpack.c.0.s8 %v6159
    %v6161 = vlaneseq
    %v6162 = vshrl.u32 %v6161, 7
    %v6163 = vsub.s32 %v6160, %v6162
    %v6164 = vrot.slane %v6136, %v6163
    %v6165 = vcombine.low %v6143, %v6150
    %v6166 = vcombine.low %v6157, %v6164
    %v6168 = vunpack.c.l.s4 1966171168
    %v6169 = vunpack.c.0.s8 %v6168
    %v6170 = vlaneseq
    %v6171 = vshrl.u32 %v6170, 7
    %v6172 = vsub.s32 %v6169, %v6171
    %v6173 = vrot.slane %v6165, %v6172
    %v6175 = vunpack.c.l.s4 1966171168
    %v6176 = vunpack.c.0.s8 %v6175
    %v6177 = vlaneseq
    %v6178 = vshrl.u32 %v6177, 7
    %v6179 = vsub.s32 %v6176, %v6178
    %v6180 = vrot.slane %v6166, %v6179
    %v6181 = vcombine.low %v6173, %v6180
    %v6182 = vcombine.low %v6067, %v6068
    %v6183 = vcombine.low %v6069, %v6070
    %v6184 = vcombine.low %v6071, %v6072
    %v6185 = vcombine.low %v6073, %v6074
    %v6187 = vunpack.c.l.s4 1966171168
    %v6188 = vunpack.c.0.s8 %v6187
    %v6189 = vlaneseq
    %v6190 = vshrl.u32 %v6189, 7
    %v6191 = vsub.s32 %v6188, %v6190
    %v6192 = vrot.slane %v6182, %v6191
    %v6194 = vunpack.c.l.s4 1966171168
    %v6195 = vunpack.c.0.s8 %v6194
    %v6196 = vlaneseq
    %v6197 = vshrl.u32 %v6196, 7
    %v6198 = vsub.s32 %v6195, %v6197
    %v6199 = vrot.slane %v6183, %v6198
    %v6201 = vunpack.c.l.s4 1966171168
    %v6202 = vunpack.c.0.s8 %v6201
    %v6203 = vlaneseq
    %v6204 = vshrl.u32 %v6203, 7
    %v6205 = vsub.s32 %v6202, %v6204
    %v6206 = vrot.slane %v6184, %v6205
    %v6208 = vunpack.c.l.s4 1966171168
    %v6209 = vunpack.c.0.s8 %v6208
    %v6210 = vlaneseq
    %v6211 = vshrl.u32 %v6210, 7
    %v6212 = vsub.s32 %v6209, %v6211
    %v6213 = vrot.slane %v6185, %v6212
    %v6214 = vcombine.low %v6192, %v6199
    %v6215 = vcombine.low %v6206, %v6213
    %v6217 = vunpack.c.l.s4 1966171168
    %v6218 = vunpack.c.0.s8 %v6217
    %v6219 = vlaneseq
    %v6220 = vshrl.u32 %v6219, 7
    %v6221 = vsub.s32 %v6218, %v6220
    %v6222 = vrot.slane %v6214, %v6221
    %v6224 = vunpack.c.l.s4 1966171168
    %v6225 = vunpack.c.0.s8 %v6224
    %v6226 = vlaneseq
    %v6227 = vshrl.u32 %v6226, 7
    %v6228 = vsub.s32 %v6225, %v6227
    %v6229 = vrot.slane %v6215, %v6228
    %v6230 = vcombine.low %v6222, %v6229
    %v6231 = vcombine.low %v6075, %v6076
    %v6232 = vcombine.low %v6077, %v6078
    %v6233 = vcombine.low %v6079, %v6080
    %v6234 = vcombine.low %v6081, %v6082
    %v6236 = vunpack.c.l.s4 1966171168
    %v6237 = vunpack.c.0.s8 %v6236
    %v6238 = vlaneseq
    %v6239 = vshrl.u32 %v6238, 7
    %v6240 = vsub.s32 %v6237, %v6239
    %v6241 = vrot.slane %v6231, %v6240
    %v6243 = vunpack.c.l.s4 1966171168
    %v6244 = vunpack.c.0.s8 %v6243
    %v6245 = vlaneseq
    %v6246 = vshrl.u32 %v6245, 7
    %v6247 = vsub.s32 %v6244, %v6246
    %v6248 = vrot.slane %v6232, %v6247
    %v6250 = vunpack.c.l.s4 1966171168
    %v6251 = vunpack.c.0.s8 %v6250
    %v6252 = vlaneseq
    %v6253 = vshrl.u32 %v6252, 7
    %v6254 = vsub.s32 %v6251, %v6253
    %v6255 = vrot.slane %v6233, %v6254
    %v6257 = vunpack.c.l.s4 1966171168
    %v6258 = vunpack.c.0.s8 %v6257
    %v6259 = vlaneseq
    %v6260 = vshrl.u32 %v6259, 7
    %v6261 = vsub.s32 %v6258, %v6260
    %v6262 = vrot.slane %v6234, %v6261
    %v6263 = vcombine.low %v6241, %v6248
    %v6264 = vcombine.low %v6255, %v6262
    %v6266 = vunpack.c.l.s4 1966171168
    %v6267 = vunpack.c.0.s8 %v6266
    %v6268 = vlaneseq
    %v6269 = vshrl.u32 %v6268, 7
    %v6270 = vsub.s32 %v6267, %v6269
    %v6271 = vrot.slane %v6263, %v6270
    %v6273 = vunpack.c.l.s4 1966171168
    %v6274 = vunpack.c.0.s8 %v6273
    %v6275 = vlaneseq
    %v6276 = vshrl.u32 %v6275, 7
    %v6277 = vsub.s32 %v6274, %v6276
    %v6278 = vrot.slane %v6264, %v6277
    %v6279 = vcombine.low %v6271, %v6278
    %v6280 = vcombine.low %v6083, %v6084
    %v6281 = vcombine.low %v6085, %v6086
    %v6282 = vcombine.low %v6087, %v6088
    %v6283 = vcombine.low %v6089, %v6090
    %v6285 = vunpack.c.l.s4 1966171168
    %v6286 = vunpack.c.0.s8 %v6285
    %v6287 = vlaneseq
    %v6288 = vshrl.u32 %v6287, 7
    %v6289 = vsub.s32 %v6286, %v6288
    %v6290 = vrot.slane %v6280, %v6289
    %v6292 = vunpack.c.l.s4 1966171168
    %v6293 = vunpack.c.0.s8 %v6292
    %v6294 = vlaneseq
    %v6295 = vshrl.u32 %v6294, 7
    %v6296 = vsub.s32 %v6293, %v6295
    %v6297 = vrot.slane %v6281, %v6296
    %v6299 = vunpack.c.l.s4 1966171168
    %v6300 = vunpack.c.0.s8 %v6299
    %v6301 = vlaneseq
    %v6302 = vshrl.u32 %v6301, 7
    %v6303 = vsub.s32 %v6300, %v6302
    %v6304 = vrot.slane %v6282, %v6303
    %v6306 = vunpack.c.l.s4 1966171168
    %v6307 = vunpack.c.0.s8 %v6306
    %v6308 = vlaneseq
    %v6309 = vshrl.u32 %v6308, 7
    %v6310 = vsub.s32 %v6307, %v6309
    %v6311 = vrot.slane %v6283, %v6310
    %v6312 = vcombine.low %v6290, %v6297
    %v6313 = vcombine.low %v6304, %v6311
    %v6315 = vunpack.c.l.s4 1966171168
    %v6316 = vunpack.c.0.s8 %v6315
    %v6317 = vlaneseq
    %v6318 = vshrl.u32 %v6317, 7
    %v6319 = vsub.s32 %v6316, %v6318
    %v6320 = vrot.slane %v6312, %v6319
    %v6322 = vunpack.c.l.s4 1966171168
    %v6323 = vunpack.c.0.s8 %v6322
    %v6324 = vlaneseq
    %v6325 = vshrl.u32 %v6324, 7
    %v6326 = vsub.s32 %v6323, %v6325
    %v6327 = vrot.slane %v6313, %v6326
    %v6328 = vcombine.low %v6320, %v6327
    %v6329 = vcombine.low %v6091, %v6092
    %v6330 = vcombine.low %v6093, %v6094
    %v6332 = vunpack.c.l.s4 1966171168
    %v6333 = vunpack.c.0.s8 %v6332
    %v6334 = vlaneseq
    %v6335 = vshrl.u32 %v6334, 7
    %v6336 = vsub.s32 %v6333, %v6335
    %v6337 = vrot.slane %v6329, %v6336
    %v6339 = vunpack.c.l.s4 1966171168
    %v6340 = vunpack.c.0.s8 %v6339
    %v6341 = vlaneseq
    %v6342 = vshrl.u32 %v6341, 7
    %v6343 = vsub.s32 %v6340, %v6342
    %v6344 = vrot.slane %v6330, %v6343
    %v6346 = vunpack.c.l.s4 1966171168
    %v6347 = vunpack.c.0.s8 %v6346
    %v6348 = vlaneseq
    %v6349 = vshrl.u32 %v6348, 7
    %v6350 = vsub.s32 %v6347, %v6349
    %v6351 = vrot.slane %v6095, %v6350
    %v6352 = vcombine.low %v6337, %v6344
    %v6354 = vunpack.c.l.s4 1966171168
    %v6355 = vunpack.c.0.s8 %v6354
    %v6356 = vlaneseq
    %v6357 = vshrl.u32 %v6356, 7
    %v6358 = vsub.s32 %v6355, %v6357
    %v6359 = vrot.slane %v6352, %v6358
    %v6361 = vunpack.c.l.s4 1966171168
    %v6362 = vunpack.c.0.s8 %v6361
    %v6363 = vlaneseq
    %v6364 = vshrl.u32 %v6363, 7
    %v6365 = vsub.s32 %v6362, %v6364
    %v6366 = vrot.slane %v6351, %v6365
    %v6367 = vcombine.low %v6359, %v6366
    %6373 = vst [vmem:[%s18] sm:$0xff] %v6181
    %6374 = vst [vmem:[%s18 + $0x8] sm:$0xff] %v6230
    %6375 = vst [vmem:[%s18 + $0x10] sm:$0xff] %v6279
    %6376 = vst [vmem:[%s18 + $0x18] sm:$0xff] %v6328
    %v6377 = vlaneseq
    %vm6378 = vcmp.ge.s32.totalorder %v6377, 0
    %vm6379 = vcmp.lt.s32.totalorder %v6377, 576
    %vm6380 = vmand %vm6378, %vm6379
    %6381 = vst.msk [vmem:[%s18 + $0x20] sm:$0x1f] %vm6380, %v6367
    // Predicated region
    $region81: #{play_network_pallas.1} parent=1 // pred_check
      _
    $region82: #{play_network_pallas.1} parent=1 // pred_check_branch
      %6383 = sbr.rel (0) target = $region84
    $region83: #{play_network_pallas.1} parent=1 // pred_region
      _
    $region84: #{play_network_pallas.1} parent=1 // pred_fallthru
      _
    // Predicated region
    $region85: #{play_network_pallas.1} parent=1 // pred_check
      _
    $region86: #{play_network_pallas.1} parent=1 // pred_check_branch
      %6385 = sbr.rel (0) target = $region88
    $region87: #{play_network_pallas.1} parent=1 // pred_region
      %s6387 = ssub.s32 16, 16
      %6388 = vsyncadd [#allocation5], %s6387
      %s6390 = sshll.u32 [#allocation4], 4
      %s6391 = int_to_ptr.vmem [resolvable:$true] %s6390
      %6393 = dma.vmem_to_hbm [thread:$0]  %s6391, 16, %s19, [#allocation5]
    $region88: #{play_network_pallas.1} parent=1 // pred_fallthru
      _
    // Predicated region
    $region89: #{play_network_pallas.1} parent=1 // pred_check
      _
    $region90: #{play_network_pallas.1} parent=1 // pred_check_branch
      %6395 = sbr.rel (0) target = $region92
    $region91: #{play_network_pallas.1} parent=1 // pred_region
      _
    $region92: #{play_network_pallas.1} parent=1 // pred_fallthru
      _
    // Predicated region
    $region93: #{play_network_pallas.1} parent=1 // pred_check
      _
    $region94: #{play_network_pallas.1} parent=1 // pred_check_branch
      %6397 = sbr.rel (0) target = $region96
    $region95: #{play_network_pallas.1} parent=1 // pred_region
      %6398 = dma.done [#allocation5], 16
    $region96: #{play_network_pallas.1} parent=1 // pred_fallthru
      _
    %6399 = vsyncpa [#allocation5], 1

</llo_original>
